<compile_context>
chip_gen: v6e
topology: v6e:2x2x1
jax: 0.10.0
libtpu: 0.0.40
codegen_flags: <defaults>
</compile_context>

<pallas_src>
import functools

import jax
import jax.numpy as jnp
from jax.experimental import pallas as pl
from jax.experimental.pallas import tpu as pltpu

SIDE_OUT_CH = 8  # matches the hard-coded 8 channels in the blind branch


# ----------------------------------------------------------------------------
# Kernel
# ----------------------------------------------------------------------------
def _fused_kernel(wb_ref, bb_ref, ws_ref, bs_ref, a_ref,      # SMEM params
                  x_ref, w1_ref, b1_ref, w2_ref, b2_ref,      # VMEM tensors
                  o_ref, *, n_frames, hw):
    """Fused sidetune (two 1x1 convs + ReLU + blend) + MLP head, one batch tile.

    Each (frame, out_channel) blended chunk (TB, HW) is immediately dotted
    against its W1 row-slab and accumulated into h1; the (TB, 8F*HW) feature
    slab is never built.
    """
    a = a_ref[0, 0]  # sigmoid(alpha), precomputed in the wrapper

    # Hoist every SMEM scalar read out of the frame loop (read once).
    wb = [[wb_ref[r, c] for r in range(3)] for c in range(SIDE_OUT_CH)]
    ws = [[ws_ref[r, c] for r in range(3)] for c in range(SIDE_OUT_CH)]
    bb = [bb_ref[0, c] for c in range(SIDE_OUT_CH)]
    bs = [bs_ref[0, c] for c in range(SIDE_OUT_CH)]

    h1_acc = None
    for f in range(n_frames):
        # Static Ref slices per input channel: per-chunk vlds, low vreg pressure.
        ch0 = x_ref[:, (3 * f + 0) * hw:(3 * f + 1) * hw]
        ch1 = x_ref[:, (3 * f + 1) * hw:(3 * f + 2) * hw]
        ch2 = x_ref[:, (3 * f + 2) * hw:(3 * f + 3) * hw]
        for c in range(SIDE_OUT_CH):
            base = jnp.maximum(
                wb[c][0] * ch0 + wb[c][1] * ch1 + wb[c][2] * ch2 + bb[c], 0.0)
            side = jnp.maximum(
                ws[c][0] * ch0 + ws[c][1] * ch1 + ws[c][2] * ch2 + bs[c], 0.0)
            blend = side + a * (base - side)            # == a*base + (1-a)*side
            row0 = (f * SIDE_OUT_CH + c) * hw
            partial = jnp.dot(blend.astype(jnp.bfloat16),
                              w1_ref[row0:row0 + hw, :],
                              preferred_element_type=jnp.float32)
            h1_acc = partial if h1_acc is None else h1_acc + partial

    h1 = jnp.maximum(h1_acc + b1_ref[...], 0.0)
    o_ref[...] = (jnp.dot(h1, w2_ref[...], preferred_element_type=jnp.float32)
                  + b2_ref[...])


# ----------------------------------------------------------------------------
# RLSidetuneWrapper.forward
# ----------------------------------------------------------------------------
def _pick_batch_tile(batch, cap=256):
    """Largest multiple-of-8 divisor of batch <= cap; ensure >= 2 grid steps
    when batch >= 16 so the parallel axis shards across both TCs on v7x."""
    if batch % 8 != 0 or batch < 16:
        return batch
    limit = min(cap, batch // 2)
    best = 8
    for tb in range(8, limit + 1, 8):
        if batch % tb == 0:
            best = tb
    return best


def rl_sidetune_forward(x, params, n_frames, blind=False, cache=None):
    """x: dict with 'rgb_filled' of shape (B, 3*n_frames, H, W), NCHW."""
    rgb = x["rgb_filled"]
    batch, chans, height, width = rgb.shape
    assert chans == 3 * n_frames
    hw = height * width
    hidden = params["w1"].shape[1]
    num_outputs = params["w2"].shape[1]

    # The PyTorch wrapper temporarily sets x['taskonomy'] = x_sidetune so
    # main_perception can read it, then restores / deletes the key.  With the
    # fused kernel the sidetune activation only exists in VMEM, so the dict is
    # left untouched and the restore protocol is a no-op.
    # TODO(synk): the eval'd `main_perception_network` class selection and the
    # `cache` / attrs_to_remember plumbing are Python control flow, not kernel
    # work; cache is ignored here.

    if blind:
        # blind: x_sidetune == 0, so the head output is input-independent
        # (~512 FLOPs) -> plain JAX, no kernel launch.
        # TODO(synk): the original hard-codes a (B, 8F, 16, 16) zero tensor;
        # here the zero feature is folded into the MLP (W1 rows = 8F*16*16).
        h1 = jnp.maximum(params["b1"], 0.0)
        out = h1 @ params["w2"] + params["b2"]
        return jnp.broadcast_to(out, (batch, num_outputs)).astype(jnp.float32)

    # Pure reshape (no transpose): per-batch NCHW flatten, channel-major.
    x2d = rgb.reshape(batch, chans * hw)
    a_sig = jax.nn.sigmoid(params["alpha"]).astype(jnp.float32)   # (1, 1)
    w1_bf16 = params["w1"].astype(jnp.bfloat16)   # MXU-native; halves VMEM/DMA

    tb = _pick_batch_tile(batch)
    num_steps = batch // tb
    grid = (num_steps,)
    flat = SIDE_OUT_CH * n_frames * hw

    # Computed VMEM budget: up-to-triple-buffered x tile + bf16 W1 + small params.
    x_tile_bytes = tb * chans * hw * 4
    w1_bytes = flat * hidden * 2
    small = (hidden + hidden * num_outputs + num_outputs + tb * num_outputs) * 4
    vmem_budget = 3 * x_tile_bytes + 2 * (w1_bytes + small) + (2 << 20)
    vmem_limit = int(min(max(vmem_budget, 8 << 20), 48 << 20))

    x_spec_kwargs = {}
    if num_steps >= 3:
        # Deeper input pipeline only when there are enough steps to overlap.
        x_spec_kwargs["pipeline_mode"] = pl.Buffered(3)
    x_spec = pl.BlockSpec((tb, chans * hw), lambda b: (b, 0), **x_spec_kwargs)

    kernel = functools.partial(_fused_kernel, n_frames=n_frames, hw=hw)
    smem = pl.BlockSpec(memory_space=pltpu.MemorySpace.SMEM)

    return pl.pallas_call(
        kernel,
        out_shape=jax.ShapeDtypeStruct((batch, num_outputs), jnp.float32),
        grid=grid,
        in_specs=[
            smem,                                                   # base_w (3, 8)
            smem,                                                   # base_b (1, 8)
            smem,                                                   # side_w (3, 8)
            smem,                                                   # side_b (1, 8)
            smem,                                                   # sigmoid(alpha) (1, 1)
            x_spec,                                                 # x (NCHW flat)
            pl.BlockSpec((flat, hidden), lambda b: (0, 0)),         # W1 bf16 (resident)
            pl.BlockSpec((1, hidden), lambda b: (0, 0)),            # b1
            pl.BlockSpec((hidden, num_outputs), lambda b: (0, 0)),  # W2
            pl.BlockSpec((1, num_outputs), lambda b: (0, 0)),       # b2
        ],
        out_specs=pl.BlockSpec((tb, num_outputs), lambda b: (b, 0)),
        compiler_params=pltpu.CompilerParams(
            dimension_semantics=("parallel",),   # batch tiles shard across TCs (v7x)
            vmem_limit_bytes=vmem_limit,
        ),
    )(params["base_w"], params["base_b"], params["side_w"], params["side_b"],
      a_sig, x2d, w1_bf16, params["b1"], params["w2"], params["b2"])


# ----------------------------------------------------------------------------
# Deterministic parameter init, pure-JAX reference, demo
# ----------------------------------------------------------------------------
def init_params(key, n_frames, height, width, hidden=32, num_outputs=8):
    ks = jax.random.split(key, 8)
    cin, cout = 3, SIDE_OUT_CH
    flat = SIDE_OUT_CH * n_frames * height * width
    scale = lambda fan_in: 1.0 / jnp.sqrt(jnp.float32(fan_in))
    return {
        "base_w": jax.random.normal(ks[0], (cin, cout), jnp.float32) * scale(cin),
        "base_b": jax.random.normal(ks[1], (1, cout), jnp.float32) * 0.1,
        "side_w": jax.random.normal(ks[2], (cin, cout), jnp.float32) * scale(cin),
        "side_b": jax.random.normal(ks[3], (1, cout), jnp.float32) * 0.1,
        "alpha": jnp.zeros((1, 1), jnp.float32),  # sigmoid(0) = 0.5 blend
        "w1": jax.random.normal(ks[4], (flat, hidden), jnp.float32) * scale(flat),
        "b1": jax.random.normal(ks[5], (1, hidden), jnp.float32) * 0.1,
        "w2": jax.random.normal(ks[6], (hidden, num_outputs), jnp.float32) * scale(hidden),
        "b2": jax.random.normal(ks[7], (1, num_outputs), jnp.float32) * 0.1,
    }


def reference_forward(rgb, params, n_frames, blind=False):
    """Plain-JAX reference with the exact PyTorch forward semantics."""
    batch, chans, height, width = rgb.shape
    if blind:
        xs = jnp.zeros((batch, SIDE_OUT_CH * n_frames, 16, 16), jnp.float32)
    else:
        xf = rgb.reshape(batch, n_frames, 3, height, width)
        xm = jnp.moveaxis(xf, 2, -1)                               # (B,F,H,W,3)
        base = jax.nn.relu(xm @ params["base_w"] + params["base_b"][0])
        side = jax.nn.relu(xm @ params["side_w"] + params["side_b"][0])
        a = jax.nn.sigmoid(params["alpha"])[0, 0]
        blend = a * base + (1.0 - a) * side                        # (B,F,H,W,8)
        xs = jnp.moveaxis(blend, -1, 2).reshape(
            batch, n_frames * SIDE_OUT_CH, height, width)
    feat = xs.reshape(batch, -1)
    h1 = jax.nn.relu(feat @ params["w1"] + params["b1"])
    return h1 @ params["w2"] + params["b2"]


if __name__ == "__main__":
    key = jax.random.PRNGKey(0)
    k_param, k_rgb = jax.random.split(key)

    B, N_FRAMES, H, W = 2, 2, 16, 16
    params = init_params(k_param, N_FRAMES, H, W)

    rgb = jax.random.normal(k_rgb, (B, 3 * N_FRAMES, H, W), jnp.float32)
    x = {"rgb_filled": rgb}

    out = rl_sidetune_forward(x, params, n_frames=N_FRAMES, blind=False)
    out = jax.block_until_ready(out)
    ref = reference_forward(rgb, params, N_FRAMES, blind=False)
    assert out.shape == (B, SIDE_OUT_CH)
    assert jnp.allclose(out, ref, rtol=2e-2, atol=2e-2), (out, ref)
    assert "taskonomy" not in x            # dict untouched, matching restore semantics

    out_blind = rl_sidetune_forward(x, params, n_frames=N_FRAMES, blind=True)
    out_blind = jax.block_until_ready(out_blind)
    ref_blind = reference_forward(rgb, params, N_FRAMES, blind=True)
    assert jnp.allclose(out_blind, ref_blind, rtol=2e-2, atol=2e-2)

    print("KERNEL_OK")
</pallas_src>

<mosaic_0001>
module attributes {stable_mosaic.version = 11 : i64} {
  func.func @_fused_kernel(%arg0: i32, %arg1: memref<3x8xf32, #tpu.memory_space<smem>>, %arg2: memref<1x8xf32, #tpu.memory_space<smem>>, %arg3: memref<3x8xf32, #tpu.memory_space<smem>>, %arg4: memref<1x8xf32, #tpu.memory_space<smem>>, %arg5: memref<1x1xf32, #tpu.memory_space<smem>>, %arg6: memref<2x1536xf32, #tpu.memory_space<vmem>>, %arg7: memref<4096x32xbf16, #tpu.memory_space<vmem>>, %arg8: memref<1x32xf32, #tpu.memory_space<vmem>>, %arg9: memref<32x8xf32, #tpu.memory_space<vmem>>, %arg10: memref<1x8xf32, #tpu.memory_space<vmem>>, %arg11: memref<2x8xf32, #tpu.memory_space<vmem>>) attributes {dimension_semantics = [#tpu.dimension_semantics<parallel>], iteration_bounds = array<i64: 1>, scalar_prefetch = 0 : i64, scratch_operands = 0 : i64, tpu.core_type = #tpu.core_type<tc>, window_params = [{transform_indices = @transform_0, window_bounds = array<i64: 3, 8>}, {transform_indices = @transform_1, window_bounds = array<i64: 1, 8>}, {transform_indices = @transform_2, window_bounds = array<i64: 3, 8>}, {transform_indices = @transform_3, window_bounds = array<i64: 1, 8>}, {transform_indices = @transform_4, window_bounds = array<i64: 1, 1>}, {transform_indices = @transform_5, window_bounds = array<i64: 2, 1536>}, {pipeline_mode = #tpu.pipeline_mode<synchronous>, transform_indices = @transform_6, window_bounds = array<i64: 4096, 32>}, {pipeline_mode = #tpu.pipeline_mode<synchronous>, transform_indices = @transform_7, window_bounds = array<i64: 1, 32>}, {pipeline_mode = #tpu.pipeline_mode<synchronous>, transform_indices = @transform_8, window_bounds = array<i64: 32, 8>}, {pipeline_mode = #tpu.pipeline_mode<synchronous>, transform_indices = @transform_9, window_bounds = array<i64: 1, 8>}, {transform_indices = @transform_10, window_bounds = array<i64: 2, 8>}]} {
    %c0 = arith.constant 0 : index
    %c0_0 = arith.constant 0 : index
    %0 = memref.load %arg5[%c0, %c0_0] : memref<1x1xf32, #tpu.memory_space<smem>>
    %c0_1 = arith.constant 0 : index
    %c0_2 = arith.constant 0 : index
    %1 = memref.load %arg1[%c0_1, %c0_2] : memref<3x8xf32, #tpu.memory_space<smem>>
    %c1 = arith.constant 1 : index
    %c0_3 = arith.constant 0 : index
    %2 = memref.load %arg1[%c1, %c0_3] : memref<3x8xf32, #tpu.memory_space<smem>>
    %c2 = arith.constant 2 : index
    %c0_4 = arith.constant 0 : index
    %3 = memref.load %arg1[%c2, %c0_4] : memref<3x8xf32, #tpu.memory_space<smem>>
    %c0_5 = arith.constant 0 : index
    %c1_6 = arith.constant 1 : index
    %4 = memref.load %arg1[%c0_5, %c1_6] : memref<3x8xf32, #tpu.memory_space<smem>>
    %c1_7 = arith.constant 1 : index
    %c1_8 = arith.constant 1 : index
    %5 = memref.load %arg1[%c1_7, %c1_8] : memref<3x8xf32, #tpu.memory_space<smem>>
    %c2_9 = arith.constant 2 : index
    %c1_10 = arith.constant 1 : index
    %6 = memref.load %arg1[%c2_9, %c1_10] : memref<3x8xf32, #tpu.memory_space<smem>>
    %c0_11 = arith.constant 0 : index
    %c2_12 = arith.constant 2 : index
    %7 = memref.load %arg1[%c0_11, %c2_12] : memref<3x8xf32, #tpu.memory_space<smem>>
    %c1_13 = arith.constant 1 : index
    %c2_14 = arith.constant 2 : index
    %8 = memref.load %arg1[%c1_13, %c2_14] : memref<3x8xf32, #tpu.memory_space<smem>>
    %c2_15 = arith.constant 2 : index
    %c2_16 = arith.constant 2 : index
    %9 = memref.load %arg1[%c2_15, %c2_16] : memref<3x8xf32, #tpu.memory_space<smem>>
    %c0_17 = arith.constant 0 : index
    %c3 = arith.constant 3 : index
    %10 = memref.load %arg1[%c0_17, %c3] : memref<3x8xf32, #tpu.memory_space<smem>>
    %c1_18 = arith.constant 1 : index
    %c3_19 = arith.constant 3 : index
    %11 = memref.load %arg1[%c1_18, %c3_19] : memref<3x8xf32, #tpu.memory_space<smem>>
    %c2_20 = arith.constant 2 : index
    %c3_21 = arith.constant 3 : index
    %12 = memref.load %arg1[%c2_20, %c3_21] : memref<3x8xf32, #tpu.memory_space<smem>>
    %c0_22 = arith.constant 0 : index
    %c4 = arith.constant 4 : index
    %13 = memref.load %arg1[%c0_22, %c4] : memref<3x8xf32, #tpu.memory_space<smem>>
    %c1_23 = arith.constant 1 : index
    %c4_24 = arith.constant 4 : index
    %14 = memref.load %arg1[%c1_23, %c4_24] : memref<3x8xf32, #tpu.memory_space<smem>>
    %c2_25 = arith.constant 2 : index
    %c4_26 = arith.constant 4 : index
    %15 = memref.load %arg1[%c2_25, %c4_26] : memref<3x8xf32, #tpu.memory_space<smem>>
    %c0_27 = arith.constant 0 : index
    %c5 = arith.constant 5 : index
    %16 = memref.load %arg1[%c0_27, %c5] : memref<3x8xf32, #tpu.memory_space<smem>>
    %c1_28 = arith.constant 1 : index
    %c5_29 = arith.constant 5 : index
    %17 = memref.load %arg1[%c1_28, %c5_29] : memref<3x8xf32, #tpu.memory_space<smem>>
    %c2_30 = arith.constant 2 : index
    %c5_31 = arith.constant 5 : index
    %18 = memref.load %arg1[%c2_30, %c5_31] : memref<3x8xf32, #tpu.memory_space<smem>>
    %c0_32 = arith.constant 0 : index
    %c6 = arith.constant 6 : index
    %19 = memref.load %arg1[%c0_32, %c6] : memref<3x8xf32, #tpu.memory_space<smem>>
    %c1_33 = arith.constant 1 : index
    %c6_34 = arith.constant 6 : index
    %20 = memref.load %arg1[%c1_33, %c6_34] : memref<3x8xf32, #tpu.memory_space<smem>>
    %c2_35 = arith.constant 2 : index
    %c6_36 = arith.constant 6 : index
    %21 = memref.load %arg1[%c2_35, %c6_36] : memref<3x8xf32, #tpu.memory_space<smem>>
    %c0_37 = arith.constant 0 : index
    %c7 = arith.constant 7 : index
    %22 = memref.load %arg1[%c0_37, %c7] : memref<3x8xf32, #tpu.memory_space<smem>>
    %c1_38 = arith.constant 1 : index
    %c7_39 = arith.constant 7 : index
    %23 = memref.load %arg1[%c1_38, %c7_39] : memref<3x8xf32, #tpu.memory_space<smem>>
    %c2_40 = arith.constant 2 : index
    %c7_41 = arith.constant 7 : index
    %24 = memref.load %arg1[%c2_40, %c7_41] : memref<3x8xf32, #tpu.memory_space<smem>>
    %c0_42 = arith.constant 0 : index
    %c0_43 = arith.constant 0 : index
    %25 = memref.load %arg3[%c0_42, %c0_43] : memref<3x8xf32, #tpu.memory_space<smem>>
    %c1_44 = arith.constant 1 : index
    %c0_45 = arith.constant 0 : index
    %26 = memref.load %arg3[%c1_44, %c0_45] : memref<3x8xf32, #tpu.memory_space<smem>>
    %c2_46 = arith.constant 2 : index
    %c0_47 = arith.constant 0 : index
    %27 = memref.load %arg3[%c2_46, %c0_47] : memref<3x8xf32, #tpu.memory_space<smem>>
    %c0_48 = arith.constant 0 : index
    %c1_49 = arith.constant 1 : index
    %28 = memref.load %arg3[%c0_48, %c1_49] : memref<3x8xf32, #tpu.memory_space<smem>>
    %c1_50 = arith.constant 1 : index
    %c1_51 = arith.constant 1 : index
    %29 = memref.load %arg3[%c1_50, %c1_51] : memref<3x8xf32, #tpu.memory_space<smem>>
    %c2_52 = arith.constant 2 : index
    %c1_53 = arith.constant 1 : index
    %30 = memref.load %arg3[%c2_52, %c1_53] : memref<3x8xf32, #tpu.memory_space<smem>>
    %c0_54 = arith.constant 0 : index
    %c2_55 = arith.constant 2 : index
    %31 = memref.load %arg3[%c0_54, %c2_55] : memref<3x8xf32, #tpu.memory_space<smem>>
    %c1_56 = arith.constant 1 : index
    %c2_57 = arith.constant 2 : index
    %32 = memref.load %arg3[%c1_56, %c2_57] : memref<3x8xf32, #tpu.memory_space<smem>>
    %c2_58 = arith.constant 2 : index
    %c2_59 = arith.constant 2 : index
    %33 = memref.load %arg3[%c2_58, %c2_59] : memref<3x8xf32, #tpu.memory_space<smem>>
    %c0_60 = arith.constant 0 : index
    %c3_61 = arith.constant 3 : index
    %34 = memref.load %arg3[%c0_60, %c3_61] : memref<3x8xf32, #tpu.memory_space<smem>>
    %c1_62 = arith.constant 1 : index
    %c3_63 = arith.constant 3 : index
    %35 = memref.load %arg3[%c1_62, %c3_63] : memref<3x8xf32, #tpu.memory_space<smem>>
    %c2_64 = arith.constant 2 : index
    %c3_65 = arith.constant 3 : index
    %36 = memref.load %arg3[%c2_64, %c3_65] : memref<3x8xf32, #tpu.memory_space<smem>>
    %c0_66 = arith.constant 0 : index
    %c4_67 = arith.constant 4 : index
    %37 = memref.load %arg3[%c0_66, %c4_67] : memref<3x8xf32, #tpu.memory_space<smem>>
    %c1_68 = arith.constant 1 : index
    %c4_69 = arith.constant 4 : index
    %38 = memref.load %arg3[%c1_68, %c4_69] : memref<3x8xf32, #tpu.memory_space<smem>>
    %c2_70 = arith.constant 2 : index
    %c4_71 = arith.constant 4 : index
    %39 = memref.load %arg3[%c2_70, %c4_71] : memref<3x8xf32, #tpu.memory_space<smem>>
    %c0_72 = arith.constant 0 : index
    %c5_73 = arith.constant 5 : index
    %40 = memref.load %arg3[%c0_72, %c5_73] : memref<3x8xf32, #tpu.memory_space<smem>>
    %c1_74 = arith.constant 1 : index
    %c5_75 = arith.constant 5 : index
    %41 = memref.load %arg3[%c1_74, %c5_75] : memref<3x8xf32, #tpu.memory_space<smem>>
    %c2_76 = arith.constant 2 : index
    %c5_77 = arith.constant 5 : index
    %42 = memref.load %arg3[%c2_76, %c5_77] : memref<3x8xf32, #tpu.memory_space<smem>>
    %c0_78 = arith.constant 0 : index
    %c6_79 = arith.constant 6 : index
    %43 = memref.load %arg3[%c0_78, %c6_79] : memref<3x8xf32, #tpu.memory_space<smem>>
    %c1_80 = arith.constant 1 : index
    %c6_81 = arith.constant 6 : index
    %44 = memref.load %arg3[%c1_80, %c6_81] : memref<3x8xf32, #tpu.memory_space<smem>>
    %c2_82 = arith.constant 2 : index
    %c6_83 = arith.constant 6 : index
    %45 = memref.load %arg3[%c2_82, %c6_83] : memref<3x8xf32, #tpu.memory_space<smem>>
    %c0_84 = arith.constant 0 : index
    %c7_85 = arith.constant 7 : index
    %46 = memref.load %arg3[%c0_84, %c7_85] : memref<3x8xf32, #tpu.memory_space<smem>>
    %c1_86 = arith.constant 1 : index
    %c7_87 = arith.constant 7 : index
    %47 = memref.load %arg3[%c1_86, %c7_87] : memref<3x8xf32, #tpu.memory_space<smem>>
    %c2_88 = arith.constant 2 : index
    %c7_89 = arith.constant 7 : index
    %48 = memref.load %arg3[%c2_88, %c7_89] : memref<3x8xf32, #tpu.memory_space<smem>>
    %c0_90 = arith.constant 0 : index
    %c0_91 = arith.constant 0 : index
    %49 = memref.load %arg2[%c0_90, %c0_91] : memref<1x8xf32, #tpu.memory_space<smem>>
    %c0_92 = arith.constant 0 : index
    %c1_93 = arith.constant 1 : index
    %50 = memref.load %arg2[%c0_92, %c1_93] : memref<1x8xf32, #tpu.memory_space<smem>>
    %c0_94 = arith.constant 0 : index
    %c2_95 = arith.constant 2 : index
    %51 = memref.load %arg2[%c0_94, %c2_95] : memref<1x8xf32, #tpu.memory_space<smem>>
    %c0_96 = arith.constant 0 : index
    %c3_97 = arith.constant 3 : index
    %52 = memref.load %arg2[%c0_96, %c3_97] : memref<1x8xf32, #tpu.memory_space<smem>>
    %c0_98 = arith.constant 0 : index
    %c4_99 = arith.constant 4 : index
    %53 = memref.load %arg2[%c0_98, %c4_99] : memref<1x8xf32, #tpu.memory_space<smem>>
    %c0_100 = arith.constant 0 : index
    %c5_101 = arith.constant 5 : index
    %54 = memref.load %arg2[%c0_100, %c5_101] : memref<1x8xf32, #tpu.memory_space<smem>>
    %c0_102 = arith.constant 0 : index
    %c6_103 = arith.constant 6 : index
    %55 = memref.load %arg2[%c0_102, %c6_103] : memref<1x8xf32, #tpu.memory_space<smem>>
    %c0_104 = arith.constant 0 : index
    %c7_105 = arith.constant 7 : index
    %56 = memref.load %arg2[%c0_104, %c7_105] : memref<1x8xf32, #tpu.memory_space<smem>>
    %c0_106 = arith.constant 0 : index
    %c0_107 = arith.constant 0 : index
    %57 = memref.load %arg4[%c0_106, %c0_107] : memref<1x8xf32, #tpu.memory_space<smem>>
    %c0_108 = arith.constant 0 : index
    %c1_109 = arith.constant 1 : index
    %58 = memref.load %arg4[%c0_108, %c1_109] : memref<1x8xf32, #tpu.memory_space<smem>>
    %c0_110 = arith.constant 0 : index
    %c2_111 = arith.constant 2 : index
    %59 = memref.load %arg4[%c0_110, %c2_111] : memref<1x8xf32, #tpu.memory_space<smem>>
    %c0_112 = arith.constant 0 : index
    %c3_113 = arith.constant 3 : index
    %60 = memref.load %arg4[%c0_112, %c3_113] : memref<1x8xf32, #tpu.memory_space<smem>>
    %c0_114 = arith.constant 0 : index
    %c4_115 = arith.constant 4 : index
    %61 = memref.load %arg4[%c0_114, %c4_115] : memref<1x8xf32, #tpu.memory_space<smem>>
    %c0_116 = arith.constant 0 : index
    %c5_117 = arith.constant 5 : index
    %62 = memref.load %arg4[%c0_116, %c5_117] : memref<1x8xf32, #tpu.memory_space<smem>>
    %c0_118 = arith.constant 0 : index
    %c6_119 = arith.constant 6 : index
    %63 = memref.load %arg4[%c0_118, %c6_119] : memref<1x8xf32, #tpu.memory_space<smem>>
    %c0_120 = arith.constant 0 : index
    %c7_121 = arith.constant 7 : index
    %64 = memref.load %arg4[%c0_120, %c7_121] : memref<1x8xf32, #tpu.memory_space<smem>>
    %c0_122 = arith.constant 0 : index
    %c0_123 = arith.constant 0 : index
    %65 = vector.load %arg6[%c0_122, %c0_123] : memref<2x1536xf32, #tpu.memory_space<vmem>>, vector<2x256xf32>
    %c0_124 = arith.constant 0 : index
    %c256 = arith.constant 256 : index
    %66 = vector.load %arg6[%c0_124, %c256] : memref<2x1536xf32, #tpu.memory_space<vmem>>, vector<2x256xf32>
    %c0_125 = arith.constant 0 : index
    %c512 = arith.constant 512 : index
    %67 = vector.load %arg6[%c0_125, %c512] : memref<2x1536xf32, #tpu.memory_space<vmem>>, vector<2x256xf32>
    %68 = vector.broadcast %1 : f32 to vector<2x256xf32>
    %69 = arith.mulf %68, %65 : vector<2x256xf32>
    %70 = vector.broadcast %2 : f32 to vector<2x256xf32>
    %71 = arith.mulf %70, %66 : vector<2x256xf32>
    %72 = arith.addf %69, %71 : vector<2x256xf32>
    %73 = vector.broadcast %3 : f32 to vector<2x256xf32>
    %74 = arith.mulf %73, %67 : vector<2x256xf32>
    %75 = arith.addf %72, %74 : vector<2x256xf32>
    %76 = vector.broadcast %49 : f32 to vector<2x256xf32>
    %77 = arith.addf %75, %76 : vector<2x256xf32>
    %cst = arith.constant 0.000000e+00 : f32
    %78 = vector.broadcast %cst : f32 to vector<2x256xf32>
    %79 = arith.maximumf %77, %78 : vector<2x256xf32>
    %80 = vector.broadcast %25 : f32 to vector<2x256xf32>
    %81 = arith.mulf %80, %65 : vector<2x256xf32>
    %82 = vector.broadcast %26 : f32 to vector<2x256xf32>
    %83 = arith.mulf %82, %66 : vector<2x256xf32>
    %84 = arith.addf %81, %83 : vector<2x256xf32>
    %85 = vector.broadcast %27 : f32 to vector<2x256xf32>
    %86 = arith.mulf %85, %67 : vector<2x256xf32>
    %87 = arith.addf %84, %86 : vector<2x256xf32>
    %88 = vector.broadcast %57 : f32 to vector<2x256xf32>
    %89 = arith.addf %87, %88 : vector<2x256xf32>
    %cst_126 = arith.constant 0.000000e+00 : f32
    %90 = vector.broadcast %cst_126 : f32 to vector<2x256xf32>
    %91 = arith.maximumf %89, %90 : vector<2x256xf32>
    %92 = arith.subf %79, %91 : vector<2x256xf32>
    %93 = vector.broadcast %0 : f32 to vector<2x256xf32>
    %94 = arith.mulf %93, %92 : vector<2x256xf32>
    %95 = arith.addf %91, %94 : vector<2x256xf32>
    %96 = arith.truncf %95 : vector<2x256xf32> to vector<2x256xbf16>
    %c0_127 = arith.constant 0 : index
    %c0_128 = arith.constant 0 : index
    %97 = vector.load %arg7[%c0_127, %c0_128] : memref<4096x32xbf16, #tpu.memory_space<vmem>>, vector<256x32xbf16>
    %cst_129 = arith.constant dense<0.000000e+00> : vector<2x32xf32>
    %98 = tpu.matmul %96, %97, %cst_129 {dimension_numbers = #tpu.dot_dimension_numbers<[1], [0], [0], [1], [0, 0, 1, 1], [], []>} : vector<2x256xbf16>, vector<256x32xbf16>, vector<2x32xf32> -> vector<2x32xf32>
    %99 = vector.broadcast %4 : f32 to vector<2x256xf32>
    %100 = arith.mulf %99, %65 : vector<2x256xf32>
    %101 = vector.broadcast %5 : f32 to vector<2x256xf32>
    %102 = arith.mulf %101, %66 : vector<2x256xf32>
    %103 = arith.addf %100, %102 : vector<2x256xf32>
    %104 = vector.broadcast %6 : f32 to vector<2x256xf32>
    %105 = arith.mulf %104, %67 : vector<2x256xf32>
    %106 = arith.addf %103, %105 : vector<2x256xf32>
    %107 = vector.broadcast %50 : f32 to vector<2x256xf32>
    %108 = arith.addf %106, %107 : vector<2x256xf32>
    %cst_130 = arith.constant 0.000000e+00 : f32
    %109 = vector.broadcast %cst_130 : f32 to vector<2x256xf32>
    %110 = arith.maximumf %108, %109 : vector<2x256xf32>
    %111 = vector.broadcast %28 : f32 to vector<2x256xf32>
    %112 = arith.mulf %111, %65 : vector<2x256xf32>
    %113 = vector.broadcast %29 : f32 to vector<2x256xf32>
    %114 = arith.mulf %113, %66 : vector<2x256xf32>
    %115 = arith.addf %112, %114 : vector<2x256xf32>
    %116 = vector.broadcast %30 : f32 to vector<2x256xf32>
    %117 = arith.mulf %116, %67 : vector<2x256xf32>
    %118 = arith.addf %115, %117 : vector<2x256xf32>
    %119 = vector.broadcast %58 : f32 to vector<2x256xf32>
    %120 = arith.addf %118, %119 : vector<2x256xf32>
    %cst_131 = arith.constant 0.000000e+00 : f32
    %121 = vector.broadcast %cst_131 : f32 to vector<2x256xf32>
    %122 = arith.maximumf %120, %121 : vector<2x256xf32>
    %123 = arith.subf %110, %122 : vector<2x256xf32>
    %124 = vector.broadcast %0 : f32 to vector<2x256xf32>
    %125 = arith.mulf %124, %123 : vector<2x256xf32>
    %126 = arith.addf %122, %125 : vector<2x256xf32>
    %127 = arith.truncf %126 : vector<2x256xf32> to vector<2x256xbf16>
    %c256_132 = arith.constant 256 : index
    %c0_133 = arith.constant 0 : index
    %128 = vector.load %arg7[%c256_132, %c0_133] : memref<4096x32xbf16, #tpu.memory_space<vmem>>, vector<256x32xbf16>
    %cst_134 = arith.constant dense<0.000000e+00> : vector<2x32xf32>
    %129 = tpu.matmul %127, %128, %cst_134 {dimension_numbers = #tpu.dot_dimension_numbers<[1], [0], [0], [1], [0, 0, 1, 1], [], []>} : vector<2x256xbf16>, vector<256x32xbf16>, vector<2x32xf32> -> vector<2x32xf32>
    %130 = arith.addf %98, %129 : vector<2x32xf32>
    %131 = vector.broadcast %7 : f32 to vector<2x256xf32>
    %132 = arith.mulf %131, %65 : vector<2x256xf32>
    %133 = vector.broadcast %8 : f32 to vector<2x256xf32>
    %134 = arith.mulf %133, %66 : vector<2x256xf32>
    %135 = arith.addf %132, %134 : vector<2x256xf32>
    %136 = vector.broadcast %9 : f32 to vector<2x256xf32>
    %137 = arith.mulf %136, %67 : vector<2x256xf32>
    %138 = arith.addf %135, %137 : vector<2x256xf32>
    %139 = vector.broadcast %51 : f32 to vector<2x256xf32>
    %140 = arith.addf %138, %139 : vector<2x256xf32>
    %cst_135 = arith.constant 0.000000e+00 : f32
    %141 = vector.broadcast %cst_135 : f32 to vector<2x256xf32>
    %142 = arith.maximumf %140, %141 : vector<2x256xf32>
    %143 = vector.broadcast %31 : f32 to vector<2x256xf32>
    %144 = arith.mulf %143, %65 : vector<2x256xf32>
    %145 = vector.broadcast %32 : f32 to vector<2x256xf32>
    %146 = arith.mulf %145, %66 : vector<2x256xf32>
    %147 = arith.addf %144, %146 : vector<2x256xf32>
    %148 = vector.broadcast %33 : f32 to vector<2x256xf32>
    %149 = arith.mulf %148, %67 : vector<2x256xf32>
    %150 = arith.addf %147, %149 : vector<2x256xf32>
    %151 = vector.broadcast %59 : f32 to vector<2x256xf32>
    %152 = arith.addf %150, %151 : vector<2x256xf32>
    %cst_136 = arith.constant 0.000000e+00 : f32
    %153 = vector.broadcast %cst_136 : f32 to vector<2x256xf32>
    %154 = arith.maximumf %152, %153 : vector<2x256xf32>
    %155 = arith.subf %142, %154 : vector<2x256xf32>
    %156 = vector.broadcast %0 : f32 to vector<2x256xf32>
    %157 = arith.mulf %156, %155 : vector<2x256xf32>
    %158 = arith.addf %154, %157 : vector<2x256xf32>
    %159 = arith.truncf %158 : vector<2x256xf32> to vector<2x256xbf16>
    %c512_137 = arith.constant 512 : index
    %c0_138 = arith.constant 0 : index
    %160 = vector.load %arg7[%c512_137, %c0_138] : memref<4096x32xbf16, #tpu.memory_space<vmem>>, vector<256x32xbf16>
    %cst_139 = arith.constant dense<0.000000e+00> : vector<2x32xf32>
    %161 = tpu.matmul %159, %160, %cst_139 {dimension_numbers = #tpu.dot_dimension_numbers<[1], [0], [0], [1], [0, 0, 1, 1], [], []>} : vector<2x256xbf16>, vector<256x32xbf16>, vector<2x32xf32> -> vector<2x32xf32>
    %162 = arith.addf %130, %161 : vector<2x32xf32>
    %163 = vector.broadcast %10 : f32 to vector<2x256xf32>
    %164 = arith.mulf %163, %65 : vector<2x256xf32>
    %165 = vector.broadcast %11 : f32 to vector<2x256xf32>
    %166 = arith.mulf %165, %66 : vector<2x256xf32>
    %167 = arith.addf %164, %166 : vector<2x256xf32>
    %168 = vector.broadcast %12 : f32 to vector<2x256xf32>
    %169 = arith.mulf %168, %67 : vector<2x256xf32>
    %170 = arith.addf %167, %169 : vector<2x256xf32>
    %171 = vector.broadcast %52 : f32 to vector<2x256xf32>
    %172 = arith.addf %170, %171 : vector<2x256xf32>
    %cst_140 = arith.constant 0.000000e+00 : f32
    %173 = vector.broadcast %cst_140 : f32 to vector<2x256xf32>
    %174 = arith.maximumf %172, %173 : vector<2x256xf32>
    %175 = vector.broadcast %34 : f32 to vector<2x256xf32>
    %176 = arith.mulf %175, %65 : vector<2x256xf32>
    %177 = vector.broadcast %35 : f32 to vector<2x256xf32>
    %178 = arith.mulf %177, %66 : vector<2x256xf32>
    %179 = arith.addf %176, %178 : vector<2x256xf32>
    %180 = vector.broadcast %36 : f32 to vector<2x256xf32>
    %181 = arith.mulf %180, %67 : vector<2x256xf32>
    %182 = arith.addf %179, %181 : vector<2x256xf32>
    %183 = vector.broadcast %60 : f32 to vector<2x256xf32>
    %184 = arith.addf %182, %183 : vector<2x256xf32>
    %cst_141 = arith.constant 0.000000e+00 : f32
    %185 = vector.broadcast %cst_141 : f32 to vector<2x256xf32>
    %186 = arith.maximumf %184, %185 : vector<2x256xf32>
    %187 = arith.subf %174, %186 : vector<2x256xf32>
    %188 = vector.broadcast %0 : f32 to vector<2x256xf32>
    %189 = arith.mulf %188, %187 : vector<2x256xf32>
    %190 = arith.addf %186, %189 : vector<2x256xf32>
    %191 = arith.truncf %190 : vector<2x256xf32> to vector<2x256xbf16>
    %c768 = arith.constant 768 : index
    %c0_142 = arith.constant 0 : index
    %192 = vector.load %arg7[%c768, %c0_142] : memref<4096x32xbf16, #tpu.memory_space<vmem>>, vector<256x32xbf16>
    %cst_143 = arith.constant dense<0.000000e+00> : vector<2x32xf32>
    %193 = tpu.matmul %191, %192, %cst_143 {dimension_numbers = #tpu.dot_dimension_numbers<[1], [0], [0], [1], [0, 0, 1, 1], [], []>} : vector<2x256xbf16>, vector<256x32xbf16>, vector<2x32xf32> -> vector<2x32xf32>
    %194 = arith.addf %162, %193 : vector<2x32xf32>
    %195 = vector.broadcast %13 : f32 to vector<2x256xf32>
    %196 = arith.mulf %195, %65 : vector<2x256xf32>
    %197 = vector.broadcast %14 : f32 to vector<2x256xf32>
    %198 = arith.mulf %197, %66 : vector<2x256xf32>
    %199 = arith.addf %196, %198 : vector<2x256xf32>
    %200 = vector.broadcast %15 : f32 to vector<2x256xf32>
    %201 = arith.mulf %200, %67 : vector<2x256xf32>
    %202 = arith.addf %199, %201 : vector<2x256xf32>
    %203 = vector.broadcast %53 : f32 to vector<2x256xf32>
    %204 = arith.addf %202, %203 : vector<2x256xf32>
    %cst_144 = arith.constant 0.000000e+00 : f32
    %205 = vector.broadcast %cst_144 : f32 to vector<2x256xf32>
    %206 = arith.maximumf %204, %205 : vector<2x256xf32>
    %207 = vector.broadcast %37 : f32 to vector<2x256xf32>
    %208 = arith.mulf %207, %65 : vector<2x256xf32>
    %209 = vector.broadcast %38 : f32 to vector<2x256xf32>
    %210 = arith.mulf %209, %66 : vector<2x256xf32>
    %211 = arith.addf %208, %210 : vector<2x256xf32>
    %212 = vector.broadcast %39 : f32 to vector<2x256xf32>
    %213 = arith.mulf %212, %67 : vector<2x256xf32>
    %214 = arith.addf %211, %213 : vector<2x256xf32>
    %215 = vector.broadcast %61 : f32 to vector<2x256xf32>
    %216 = arith.addf %214, %215 : vector<2x256xf32>
    %cst_145 = arith.constant 0.000000e+00 : f32
    %217 = vector.broadcast %cst_145 : f32 to vector<2x256xf32>
    %218 = arith.maximumf %216, %217 : vector<2x256xf32>
    %219 = arith.subf %206, %218 : vector<2x256xf32>
    %220 = vector.broadcast %0 : f32 to vector<2x256xf32>
    %221 = arith.mulf %220, %219 : vector<2x256xf32>
    %222 = arith.addf %218, %221 : vector<2x256xf32>
    %223 = arith.truncf %222 : vector<2x256xf32> to vector<2x256xbf16>
    %c1024 = arith.constant 1024 : index
    %c0_146 = arith.constant 0 : index
    %224 = vector.load %arg7[%c1024, %c0_146] : memref<4096x32xbf16, #tpu.memory_space<vmem>>, vector<256x32xbf16>
    %cst_147 = arith.constant dense<0.000000e+00> : vector<2x32xf32>
    %225 = tpu.matmul %223, %224, %cst_147 {dimension_numbers = #tpu.dot_dimension_numbers<[1], [0], [0], [1], [0, 0, 1, 1], [], []>} : vector<2x256xbf16>, vector<256x32xbf16>, vector<2x32xf32> -> vector<2x32xf32>
    %226 = arith.addf %194, %225 : vector<2x32xf32>
    %227 = vector.broadcast %16 : f32 to vector<2x256xf32>
    %228 = arith.mulf %227, %65 : vector<2x256xf32>
    %229 = vector.broadcast %17 : f32 to vector<2x256xf32>
    %230 = arith.mulf %229, %66 : vector<2x256xf32>
    %231 = arith.addf %228, %230 : vector<2x256xf32>
    %232 = vector.broadcast %18 : f32 to vector<2x256xf32>
    %233 = arith.mulf %232, %67 : vector<2x256xf32>
    %234 = arith.addf %231, %233 : vector<2x256xf32>
    %235 = vector.broadcast %54 : f32 to vector<2x256xf32>
    %236 = arith.addf %234, %235 : vector<2x256xf32>
    %cst_148 = arith.constant 0.000000e+00 : f32
    %237 = vector.broadcast %cst_148 : f32 to vector<2x256xf32>
    %238 = arith.maximumf %236, %237 : vector<2x256xf32>
    %239 = vector.broadcast %40 : f32 to vector<2x256xf32>
    %240 = arith.mulf %239, %65 : vector<2x256xf32>
    %241 = vector.broadcast %41 : f32 to vector<2x256xf32>
    %242 = arith.mulf %241, %66 : vector<2x256xf32>
    %243 = arith.addf %240, %242 : vector<2x256xf32>
    %244 = vector.broadcast %42 : f32 to vector<2x256xf32>
    %245 = arith.mulf %244, %67 : vector<2x256xf32>
    %246 = arith.addf %243, %245 : vector<2x256xf32>
    %247 = vector.broadcast %62 : f32 to vector<2x256xf32>
    %248 = arith.addf %246, %247 : vector<2x256xf32>
    %cst_149 = arith.constant 0.000000e+00 : f32
    %249 = vector.broadcast %cst_149 : f32 to vector<2x256xf32>
    %250 = arith.maximumf %248, %249 : vector<2x256xf32>
    %251 = arith.subf %238, %250 : vector<2x256xf32>
    %252 = vector.broadcast %0 : f32 to vector<2x256xf32>
    %253 = arith.mulf %252, %251 : vector<2x256xf32>
    %254 = arith.addf %250, %253 : vector<2x256xf32>
    %255 = arith.truncf %254 : vector<2x256xf32> to vector<2x256xbf16>
    %c1280 = arith.constant 1280 : index
    %c0_150 = arith.constant 0 : index
    %256 = vector.load %arg7[%c1280, %c0_150] : memref<4096x32xbf16, #tpu.memory_space<vmem>>, vector<256x32xbf16>
    %cst_151 = arith.constant dense<0.000000e+00> : vector<2x32xf32>
    %257 = tpu.matmul %255, %256, %cst_151 {dimension_numbers = #tpu.dot_dimension_numbers<[1], [0], [0], [1], [0, 0, 1, 1], [], []>} : vector<2x256xbf16>, vector<256x32xbf16>, vector<2x32xf32> -> vector<2x32xf32>
    %258 = arith.addf %226, %257 : vector<2x32xf32>
    %259 = vector.broadcast %19 : f32 to vector<2x256xf32>
    %260 = arith.mulf %259, %65 : vector<2x256xf32>
    %261 = vector.broadcast %20 : f32 to vector<2x256xf32>
    %262 = arith.mulf %261, %66 : vector<2x256xf32>
    %263 = arith.addf %260, %262 : vector<2x256xf32>
    %264 = vector.broadcast %21 : f32 to vector<2x256xf32>
    %265 = arith.mulf %264, %67 : vector<2x256xf32>
    %266 = arith.addf %263, %265 : vector<2x256xf32>
    %267 = vector.broadcast %55 : f32 to vector<2x256xf32>
    %268 = arith.addf %266, %267 : vector<2x256xf32>
    %cst_152 = arith.constant 0.000000e+00 : f32
    %269 = vector.broadcast %cst_152 : f32 to vector<2x256xf32>
    %270 = arith.maximumf %268, %269 : vector<2x256xf32>
    %271 = vector.broadcast %43 : f32 to vector<2x256xf32>
    %272 = arith.mulf %271, %65 : vector<2x256xf32>
    %273 = vector.broadcast %44 : f32 to vector<2x256xf32>
    %274 = arith.mulf %273, %66 : vector<2x256xf32>
    %275 = arith.addf %272, %274 : vector<2x256xf32>
    %276 = vector.broadcast %45 : f32 to vector<2x256xf32>
    %277 = arith.mulf %276, %67 : vector<2x256xf32>
    %278 = arith.addf %275, %277 : vector<2x256xf32>
    %279 = vector.broadcast %63 : f32 to vector<2x256xf32>
    %280 = arith.addf %278, %279 : vector<2x256xf32>
    %cst_153 = arith.constant 0.000000e+00 : f32
    %281 = vector.broadcast %cst_153 : f32 to vector<2x256xf32>
    %282 = arith.maximumf %280, %281 : vector<2x256xf32>
    %283 = arith.subf %270, %282 : vector<2x256xf32>
    %284 = vector.broadcast %0 : f32 to vector<2x256xf32>
    %285 = arith.mulf %284, %283 : vector<2x256xf32>
    %286 = arith.addf %282, %285 : vector<2x256xf32>
    %287 = arith.truncf %286 : vector<2x256xf32> to vector<2x256xbf16>
    %c1536 = arith.constant 1536 : index
    %c0_154 = arith.constant 0 : index
    %288 = vector.load %arg7[%c1536, %c0_154] : memref<4096x32xbf16, #tpu.memory_space<vmem>>, vector<256x32xbf16>
    %cst_155 = arith.constant dense<0.000000e+00> : vector<2x32xf32>
    %289 = tpu.matmul %287, %288, %cst_155 {dimension_numbers = #tpu.dot_dimension_numbers<[1], [0], [0], [1], [0, 0, 1, 1], [], []>} : vector<2x256xbf16>, vector<256x32xbf16>, vector<2x32xf32> -> vector<2x32xf32>
    %290 = arith.addf %258, %289 : vector<2x32xf32>
    %291 = vector.broadcast %22 : f32 to vector<2x256xf32>
    %292 = arith.mulf %291, %65 : vector<2x256xf32>
    %293 = vector.broadcast %23 : f32 to vector<2x256xf32>
    %294 = arith.mulf %293, %66 : vector<2x256xf32>
    %295 = arith.addf %292, %294 : vector<2x256xf32>
    %296 = vector.broadcast %24 : f32 to vector<2x256xf32>
    %297 = arith.mulf %296, %67 : vector<2x256xf32>
    %298 = arith.addf %295, %297 : vector<2x256xf32>
    %299 = vector.broadcast %56 : f32 to vector<2x256xf32>
    %300 = arith.addf %298, %299 : vector<2x256xf32>
    %cst_156 = arith.constant 0.000000e+00 : f32
    %301 = vector.broadcast %cst_156 : f32 to vector<2x256xf32>
    %302 = arith.maximumf %300, %301 : vector<2x256xf32>
    %303 = vector.broadcast %46 : f32 to vector<2x256xf32>
    %304 = arith.mulf %303, %65 : vector<2x256xf32>
    %305 = vector.broadcast %47 : f32 to vector<2x256xf32>
    %306 = arith.mulf %305, %66 : vector<2x256xf32>
    %307 = arith.addf %304, %306 : vector<2x256xf32>
    %308 = vector.broadcast %48 : f32 to vector<2x256xf32>
    %309 = arith.mulf %308, %67 : vector<2x256xf32>
    %310 = arith.addf %307, %309 : vector<2x256xf32>
    %311 = vector.broadcast %64 : f32 to vector<2x256xf32>
    %312 = arith.addf %310, %311 : vector<2x256xf32>
    %cst_157 = arith.constant 0.000000e+00 : f32
    %313 = vector.broadcast %cst_157 : f32 to vector<2x256xf32>
    %314 = arith.maximumf %312, %313 : vector<2x256xf32>
    %315 = arith.subf %302, %314 : vector<2x256xf32>
    %316 = vector.broadcast %0 : f32 to vector<2x256xf32>
    %317 = arith.mulf %316, %315 : vector<2x256xf32>
    %318 = arith.addf %314, %317 : vector<2x256xf32>
    %319 = arith.truncf %318 : vector<2x256xf32> to vector<2x256xbf16>
    %c1792 = arith.constant 1792 : index
    %c0_158 = arith.constant 0 : index
    %320 = vector.load %arg7[%c1792, %c0_158] : memref<4096x32xbf16, #tpu.memory_space<vmem>>, vector<256x32xbf16>
    %cst_159 = arith.constant dense<0.000000e+00> : vector<2x32xf32>
    %321 = tpu.matmul %319, %320, %cst_159 {dimension_numbers = #tpu.dot_dimension_numbers<[1], [0], [0], [1], [0, 0, 1, 1], [], []>} : vector<2x256xbf16>, vector<256x32xbf16>, vector<2x32xf32> -> vector<2x32xf32>
    %322 = arith.addf %290, %321 : vector<2x32xf32>
    %c0_160 = arith.constant 0 : index
    %c768_161 = arith.constant 768 : index
    %323 = vector.load %arg6[%c0_160, %c768_161] : memref<2x1536xf32, #tpu.memory_space<vmem>>, vector<2x256xf32>
    %c0_162 = arith.constant 0 : index
    %c1024_163 = arith.constant 1024 : index
    %324 = vector.load %arg6[%c0_162, %c1024_163] : memref<2x1536xf32, #tpu.memory_space<vmem>>, vector<2x256xf32>
    %c0_164 = arith.constant 0 : index
    %c1280_165 = arith.constant 1280 : index
    %325 = vector.load %arg6[%c0_164, %c1280_165] : memref<2x1536xf32, #tpu.memory_space<vmem>>, vector<2x256xf32>
    %326 = vector.broadcast %1 : f32 to vector<2x256xf32>
    %327 = arith.mulf %326, %323 : vector<2x256xf32>
    %328 = vector.broadcast %2 : f32 to vector<2x256xf32>
    %329 = arith.mulf %328, %324 : vector<2x256xf32>
    %330 = arith.addf %327, %329 : vector<2x256xf32>
    %331 = vector.broadcast %3 : f32 to vector<2x256xf32>
    %332 = arith.mulf %331, %325 : vector<2x256xf32>
    %333 = arith.addf %330, %332 : vector<2x256xf32>
    %334 = vector.broadcast %49 : f32 to vector<2x256xf32>
    %335 = arith.addf %333, %334 : vector<2x256xf32>
    %cst_166 = arith.constant 0.000000e+00 : f32
    %336 = vector.broadcast %cst_166 : f32 to vector<2x256xf32>
    %337 = arith.maximumf %335, %336 : vector<2x256xf32>
    %338 = vector.broadcast %25 : f32 to vector<2x256xf32>
    %339 = arith.mulf %338, %323 : vector<2x256xf32>
    %340 = vector.broadcast %26 : f32 to vector<2x256xf32>
    %341 = arith.mulf %340, %324 : vector<2x256xf32>
    %342 = arith.addf %339, %341 : vector<2x256xf32>
    %343 = vector.broadcast %27 : f32 to vector<2x256xf32>
    %344 = arith.mulf %343, %325 : vector<2x256xf32>
    %345 = arith.addf %342, %344 : vector<2x256xf32>
    %346 = vector.broadcast %57 : f32 to vector<2x256xf32>
    %347 = arith.addf %345, %346 : vector<2x256xf32>
    %cst_167 = arith.constant 0.000000e+00 : f32
    %348 = vector.broadcast %cst_167 : f32 to vector<2x256xf32>
    %349 = arith.maximumf %347, %348 : vector<2x256xf32>
    %350 = arith.subf %337, %349 : vector<2x256xf32>
    %351 = vector.broadcast %0 : f32 to vector<2x256xf32>
    %352 = arith.mulf %351, %350 : vector<2x256xf32>
    %353 = arith.addf %349, %352 : vector<2x256xf32>
    %354 = arith.truncf %353 : vector<2x256xf32> to vector<2x256xbf16>
    %c2048 = arith.constant 2048 : index
    %c0_168 = arith.constant 0 : index
    %355 = vector.load %arg7[%c2048, %c0_168] : memref<4096x32xbf16, #tpu.memory_space<vmem>>, vector<256x32xbf16>
    %cst_169 = arith.constant dense<0.000000e+00> : vector<2x32xf32>
    %356 = tpu.matmul %354, %355, %cst_169 {dimension_numbers = #tpu.dot_dimension_numbers<[1], [0], [0], [1], [0, 0, 1, 1], [], []>} : vector<2x256xbf16>, vector<256x32xbf16>, vector<2x32xf32> -> vector<2x32xf32>
    %357 = arith.addf %322, %356 : vector<2x32xf32>
    %358 = vector.broadcast %4 : f32 to vector<2x256xf32>
    %359 = arith.mulf %358, %323 : vector<2x256xf32>
    %360 = vector.broadcast %5 : f32 to vector<2x256xf32>
    %361 = arith.mulf %360, %324 : vector<2x256xf32>
    %362 = arith.addf %359, %361 : vector<2x256xf32>
    %363 = vector.broadcast %6 : f32 to vector<2x256xf32>
    %364 = arith.mulf %363, %325 : vector<2x256xf32>
    %365 = arith.addf %362, %364 : vector<2x256xf32>
    %366 = vector.broadcast %50 : f32 to vector<2x256xf32>
    %367 = arith.addf %365, %366 : vector<2x256xf32>
    %cst_170 = arith.constant 0.000000e+00 : f32
    %368 = vector.broadcast %cst_170 : f32 to vector<2x256xf32>
    %369 = arith.maximumf %367, %368 : vector<2x256xf32>
    %370 = vector.broadcast %28 : f32 to vector<2x256xf32>
    %371 = arith.mulf %370, %323 : vector<2x256xf32>
    %372 = vector.broadcast %29 : f32 to vector<2x256xf32>
    %373 = arith.mulf %372, %324 : vector<2x256xf32>
    %374 = arith.addf %371, %373 : vector<2x256xf32>
    %375 = vector.broadcast %30 : f32 to vector<2x256xf32>
    %376 = arith.mulf %375, %325 : vector<2x256xf32>
    %377 = arith.addf %374, %376 : vector<2x256xf32>
    %378 = vector.broadcast %58 : f32 to vector<2x256xf32>
    %379 = arith.addf %377, %378 : vector<2x256xf32>
    %cst_171 = arith.constant 0.000000e+00 : f32
    %380 = vector.broadcast %cst_171 : f32 to vector<2x256xf32>
    %381 = arith.maximumf %379, %380 : vector<2x256xf32>
    %382 = arith.subf %369, %381 : vector<2x256xf32>
    %383 = vector.broadcast %0 : f32 to vector<2x256xf32>
    %384 = arith.mulf %383, %382 : vector<2x256xf32>
    %385 = arith.addf %381, %384 : vector<2x256xf32>
    %386 = arith.truncf %385 : vector<2x256xf32> to vector<2x256xbf16>
    %c2304 = arith.constant 2304 : index
    %c0_172 = arith.constant 0 : index
    %387 = vector.load %arg7[%c2304, %c0_172] : memref<4096x32xbf16, #tpu.memory_space<vmem>>, vector<256x32xbf16>
    %cst_173 = arith.constant dense<0.000000e+00> : vector<2x32xf32>
    %388 = tpu.matmul %386, %387, %cst_173 {dimension_numbers = #tpu.dot_dimension_numbers<[1], [0], [0], [1], [0, 0, 1, 1], [], []>} : vector<2x256xbf16>, vector<256x32xbf16>, vector<2x32xf32> -> vector<2x32xf32>
    %389 = arith.addf %357, %388 : vector<2x32xf32>
    %390 = vector.broadcast %7 : f32 to vector<2x256xf32>
    %391 = arith.mulf %390, %323 : vector<2x256xf32>
    %392 = vector.broadcast %8 : f32 to vector<2x256xf32>
    %393 = arith.mulf %392, %324 : vector<2x256xf32>
    %394 = arith.addf %391, %393 : vector<2x256xf32>
    %395 = vector.broadcast %9 : f32 to vector<2x256xf32>
    %396 = arith.mulf %395, %325 : vector<2x256xf32>
    %397 = arith.addf %394, %396 : vector<2x256xf32>
    %398 = vector.broadcast %51 : f32 to vector<2x256xf32>
    %399 = arith.addf %397, %398 : vector<2x256xf32>
    %cst_174 = arith.constant 0.000000e+00 : f32
    %400 = vector.broadcast %cst_174 : f32 to vector<2x256xf32>
    %401 = arith.maximumf %399, %400 : vector<2x256xf32>
    %402 = vector.broadcast %31 : f32 to vector<2x256xf32>
    %403 = arith.mulf %402, %323 : vector<2x256xf32>
    %404 = vector.broadcast %32 : f32 to vector<2x256xf32>
    %405 = arith.mulf %404, %324 : vector<2x256xf32>
    %406 = arith.addf %403, %405 : vector<2x256xf32>
    %407 = vector.broadcast %33 : f32 to vector<2x256xf32>
    %408 = arith.mulf %407, %325 : vector<2x256xf32>
    %409 = arith.addf %406, %408 : vector<2x256xf32>
    %410 = vector.broadcast %59 : f32 to vector<2x256xf32>
    %411 = arith.addf %409, %410 : vector<2x256xf32>
    %cst_175 = arith.constant 0.000000e+00 : f32
    %412 = vector.broadcast %cst_175 : f32 to vector<2x256xf32>
    %413 = arith.maximumf %411, %412 : vector<2x256xf32>
    %414 = arith.subf %401, %413 : vector<2x256xf32>
    %415 = vector.broadcast %0 : f32 to vector<2x256xf32>
    %416 = arith.mulf %415, %414 : vector<2x256xf32>
    %417 = arith.addf %413, %416 : vector<2x256xf32>
    %418 = arith.truncf %417 : vector<2x256xf32> to vector<2x256xbf16>
    %c2560 = arith.constant 2560 : index
    %c0_176 = arith.constant 0 : index
    %419 = vector.load %arg7[%c2560, %c0_176] : memref<4096x32xbf16, #tpu.memory_space<vmem>>, vector<256x32xbf16>
    %cst_177 = arith.constant dense<0.000000e+00> : vector<2x32xf32>
    %420 = tpu.matmul %418, %419, %cst_177 {dimension_numbers = #tpu.dot_dimension_numbers<[1], [0], [0], [1], [0, 0, 1, 1], [], []>} : vector<2x256xbf16>, vector<256x32xbf16>, vector<2x32xf32> -> vector<2x32xf32>
    %421 = arith.addf %389, %420 : vector<2x32xf32>
    %422 = vector.broadcast %10 : f32 to vector<2x256xf32>
    %423 = arith.mulf %422, %323 : vector<2x256xf32>
    %424 = vector.broadcast %11 : f32 to vector<2x256xf32>
    %425 = arith.mulf %424, %324 : vector<2x256xf32>
    %426 = arith.addf %423, %425 : vector<2x256xf32>
    %427 = vector.broadcast %12 : f32 to vector<2x256xf32>
    %428 = arith.mulf %427, %325 : vector<2x256xf32>
    %429 = arith.addf %426, %428 : vector<2x256xf32>
    %430 = vector.broadcast %52 : f32 to vector<2x256xf32>
    %431 = arith.addf %429, %430 : vector<2x256xf32>
    %cst_178 = arith.constant 0.000000e+00 : f32
    %432 = vector.broadcast %cst_178 : f32 to vector<2x256xf32>
    %433 = arith.maximumf %431, %432 : vector<2x256xf32>
    %434 = vector.broadcast %34 : f32 to vector<2x256xf32>
    %435 = arith.mulf %434, %323 : vector<2x256xf32>
    %436 = vector.broadcast %35 : f32 to vector<2x256xf32>
    %437 = arith.mulf %436, %324 : vector<2x256xf32>
    %438 = arith.addf %435, %437 : vector<2x256xf32>
    %439 = vector.broadcast %36 : f32 to vector<2x256xf32>
    %440 = arith.mulf %439, %325 : vector<2x256xf32>
    %441 = arith.addf %438, %440 : vector<2x256xf32>
    %442 = vector.broadcast %60 : f32 to vector<2x256xf32>
    %443 = arith.addf %441, %442 : vector<2x256xf32>
    %cst_179 = arith.constant 0.000000e+00 : f32
    %444 = vector.broadcast %cst_179 : f32 to vector<2x256xf32>
    %445 = arith.maximumf %443, %444 : vector<2x256xf32>
    %446 = arith.subf %433, %445 : vector<2x256xf32>
    %447 = vector.broadcast %0 : f32 to vector<2x256xf32>
    %448 = arith.mulf %447, %446 : vector<2x256xf32>
    %449 = arith.addf %445, %448 : vector<2x256xf32>
    %450 = arith.truncf %449 : vector<2x256xf32> to vector<2x256xbf16>
    %c2816 = arith.constant 2816 : index
    %c0_180 = arith.constant 0 : index
    %451 = vector.load %arg7[%c2816, %c0_180] : memref<4096x32xbf16, #tpu.memory_space<vmem>>, vector<256x32xbf16>
    %cst_181 = arith.constant dense<0.000000e+00> : vector<2x32xf32>
    %452 = tpu.matmul %450, %451, %cst_181 {dimension_numbers = #tpu.dot_dimension_numbers<[1], [0], [0], [1], [0, 0, 1, 1], [], []>} : vector<2x256xbf16>, vector<256x32xbf16>, vector<2x32xf32> -> vector<2x32xf32>
    %453 = arith.addf %421, %452 : vector<2x32xf32>
    %454 = vector.broadcast %13 : f32 to vector<2x256xf32>
    %455 = arith.mulf %454, %323 : vector<2x256xf32>
    %456 = vector.broadcast %14 : f32 to vector<2x256xf32>
    %457 = arith.mulf %456, %324 : vector<2x256xf32>
    %458 = arith.addf %455, %457 : vector<2x256xf32>
    %459 = vector.broadcast %15 : f32 to vector<2x256xf32>
    %460 = arith.mulf %459, %325 : vector<2x256xf32>
    %461 = arith.addf %458, %460 : vector<2x256xf32>
    %462 = vector.broadcast %53 : f32 to vector<2x256xf32>
    %463 = arith.addf %461, %462 : vector<2x256xf32>
    %cst_182 = arith.constant 0.000000e+00 : f32
    %464 = vector.broadcast %cst_182 : f32 to vector<2x256xf32>
    %465 = arith.maximumf %463, %464 : vector<2x256xf32>
    %466 = vector.broadcast %37 : f32 to vector<2x256xf32>
    %467 = arith.mulf %466, %323 : vector<2x256xf32>
    %468 = vector.broadcast %38 : f32 to vector<2x256xf32>
    %469 = arith.mulf %468, %324 : vector<2x256xf32>
    %470 = arith.addf %467, %469 : vector<2x256xf32>
    %471 = vector.broadcast %39 : f32 to vector<2x256xf32>
    %472 = arith.mulf %471, %325 : vector<2x256xf32>
    %473 = arith.addf %470, %472 : vector<2x256xf32>
    %474 = vector.broadcast %61 : f32 to vector<2x256xf32>
    %475 = arith.addf %473, %474 : vector<2x256xf32>
    %cst_183 = arith.constant 0.000000e+00 : f32
    %476 = vector.broadcast %cst_183 : f32 to vector<2x256xf32>
    %477 = arith.maximumf %475, %476 : vector<2x256xf32>
    %478 = arith.subf %465, %477 : vector<2x256xf32>
    %479 = vector.broadcast %0 : f32 to vector<2x256xf32>
    %480 = arith.mulf %479, %478 : vector<2x256xf32>
    %481 = arith.addf %477, %480 : vector<2x256xf32>
    %482 = arith.truncf %481 : vector<2x256xf32> to vector<2x256xbf16>
    %c3072 = arith.constant 3072 : index
    %c0_184 = arith.constant 0 : index
    %483 = vector.load %arg7[%c3072, %c0_184] : memref<4096x32xbf16, #tpu.memory_space<vmem>>, vector<256x32xbf16>
    %cst_185 = arith.constant dense<0.000000e+00> : vector<2x32xf32>
    %484 = tpu.matmul %482, %483, %cst_185 {dimension_numbers = #tpu.dot_dimension_numbers<[1], [0], [0], [1], [0, 0, 1, 1], [], []>} : vector<2x256xbf16>, vector<256x32xbf16>, vector<2x32xf32> -> vector<2x32xf32>
    %485 = arith.addf %453, %484 : vector<2x32xf32>
    %486 = vector.broadcast %16 : f32 to vector<2x256xf32>
    %487 = arith.mulf %486, %323 : vector<2x256xf32>
    %488 = vector.broadcast %17 : f32 to vector<2x256xf32>
    %489 = arith.mulf %488, %324 : vector<2x256xf32>
    %490 = arith.addf %487, %489 : vector<2x256xf32>
    %491 = vector.broadcast %18 : f32 to vector<2x256xf32>
    %492 = arith.mulf %491, %325 : vector<2x256xf32>
    %493 = arith.addf %490, %492 : vector<2x256xf32>
    %494 = vector.broadcast %54 : f32 to vector<2x256xf32>
    %495 = arith.addf %493, %494 : vector<2x256xf32>
    %cst_186 = arith.constant 0.000000e+00 : f32
    %496 = vector.broadcast %cst_186 : f32 to vector<2x256xf32>
    %497 = arith.maximumf %495, %496 : vector<2x256xf32>
    %498 = vector.broadcast %40 : f32 to vector<2x256xf32>
    %499 = arith.mulf %498, %323 : vector<2x256xf32>
    %500 = vector.broadcast %41 : f32 to vector<2x256xf32>
    %501 = arith.mulf %500, %324 : vector<2x256xf32>
    %502 = arith.addf %499, %501 : vector<2x256xf32>
    %503 = vector.broadcast %42 : f32 to vector<2x256xf32>
    %504 = arith.mulf %503, %325 : vector<2x256xf32>
    %505 = arith.addf %502, %504 : vector<2x256xf32>
    %506 = vector.broadcast %62 : f32 to vector<2x256xf32>
    %507 = arith.addf %505, %506 : vector<2x256xf32>
    %cst_187 = arith.constant 0.000000e+00 : f32
    %508 = vector.broadcast %cst_187 : f32 to vector<2x256xf32>
    %509 = arith.maximumf %507, %508 : vector<2x256xf32>
    %510 = arith.subf %497, %509 : vector<2x256xf32>
    %511 = vector.broadcast %0 : f32 to vector<2x256xf32>
    %512 = arith.mulf %511, %510 : vector<2x256xf32>
    %513 = arith.addf %509, %512 : vector<2x256xf32>
    %514 = arith.truncf %513 : vector<2x256xf32> to vector<2x256xbf16>
    %c3328 = arith.constant 3328 : index
    %c0_188 = arith.constant 0 : index
    %515 = vector.load %arg7[%c3328, %c0_188] : memref<4096x32xbf16, #tpu.memory_space<vmem>>, vector<256x32xbf16>
    %cst_189 = arith.constant dense<0.000000e+00> : vector<2x32xf32>
    %516 = tpu.matmul %514, %515, %cst_189 {dimension_numbers = #tpu.dot_dimension_numbers<[1], [0], [0], [1], [0, 0, 1, 1], [], []>} : vector<2x256xbf16>, vector<256x32xbf16>, vector<2x32xf32> -> vector<2x32xf32>
    %517 = arith.addf %485, %516 : vector<2x32xf32>
    %518 = vector.broadcast %19 : f32 to vector<2x256xf32>
    %519 = arith.mulf %518, %323 : vector<2x256xf32>
    %520 = vector.broadcast %20 : f32 to vector<2x256xf32>
    %521 = arith.mulf %520, %324 : vector<2x256xf32>
    %522 = arith.addf %519, %521 : vector<2x256xf32>
    %523 = vector.broadcast %21 : f32 to vector<2x256xf32>
    %524 = arith.mulf %523, %325 : vector<2x256xf32>
    %525 = arith.addf %522, %524 : vector<2x256xf32>
    %526 = vector.broadcast %55 : f32 to vector<2x256xf32>
    %527 = arith.addf %525, %526 : vector<2x256xf32>
    %cst_190 = arith.constant 0.000000e+00 : f32
    %528 = vector.broadcast %cst_190 : f32 to vector<2x256xf32>
    %529 = arith.maximumf %527, %528 : vector<2x256xf32>
    %530 = vector.broadcast %43 : f32 to vector<2x256xf32>
    %531 = arith.mulf %530, %323 : vector<2x256xf32>
    %532 = vector.broadcast %44 : f32 to vector<2x256xf32>
    %533 = arith.mulf %532, %324 : vector<2x256xf32>
    %534 = arith.addf %531, %533 : vector<2x256xf32>
    %535 = vector.broadcast %45 : f32 to vector<2x256xf32>
    %536 = arith.mulf %535, %325 : vector<2x256xf32>
    %537 = arith.addf %534, %536 : vector<2x256xf32>
    %538 = vector.broadcast %63 : f32 to vector<2x256xf32>
    %539 = arith.addf %537, %538 : vector<2x256xf32>
    %cst_191 = arith.constant 0.000000e+00 : f32
    %540 = vector.broadcast %cst_191 : f32 to vector<2x256xf32>
    %541 = arith.maximumf %539, %540 : vector<2x256xf32>
    %542 = arith.subf %529, %541 : vector<2x256xf32>
    %543 = vector.broadcast %0 : f32 to vector<2x256xf32>
    %544 = arith.mulf %543, %542 : vector<2x256xf32>
    %545 = arith.addf %541, %544 : vector<2x256xf32>
    %546 = arith.truncf %545 : vector<2x256xf32> to vector<2x256xbf16>
    %c3584 = arith.constant 3584 : index
    %c0_192 = arith.constant 0 : index
    %547 = vector.load %arg7[%c3584, %c0_192] : memref<4096x32xbf16, #tpu.memory_space<vmem>>, vector<256x32xbf16>
    %cst_193 = arith.constant dense<0.000000e+00> : vector<2x32xf32>
    %548 = tpu.matmul %546, %547, %cst_193 {dimension_numbers = #tpu.dot_dimension_numbers<[1], [0], [0], [1], [0, 0, 1, 1], [], []>} : vector<2x256xbf16>, vector<256x32xbf16>, vector<2x32xf32> -> vector<2x32xf32>
    %549 = arith.addf %517, %548 : vector<2x32xf32>
    %550 = vector.broadcast %22 : f32 to vector<2x256xf32>
    %551 = arith.mulf %550, %323 : vector<2x256xf32>
    %552 = vector.broadcast %23 : f32 to vector<2x256xf32>
    %553 = arith.mulf %552, %324 : vector<2x256xf32>
    %554 = arith.addf %551, %553 : vector<2x256xf32>
    %555 = vector.broadcast %24 : f32 to vector<2x256xf32>
    %556 = arith.mulf %555, %325 : vector<2x256xf32>
    %557 = arith.addf %554, %556 : vector<2x256xf32>
    %558 = vector.broadcast %56 : f32 to vector<2x256xf32>
    %559 = arith.addf %557, %558 : vector<2x256xf32>
    %cst_194 = arith.constant 0.000000e+00 : f32
    %560 = vector.broadcast %cst_194 : f32 to vector<2x256xf32>
    %561 = arith.maximumf %559, %560 : vector<2x256xf32>
    %562 = vector.broadcast %46 : f32 to vector<2x256xf32>
    %563 = arith.mulf %562, %323 : vector<2x256xf32>
    %564 = vector.broadcast %47 : f32 to vector<2x256xf32>
    %565 = arith.mulf %564, %324 : vector<2x256xf32>
    %566 = arith.addf %563, %565 : vector<2x256xf32>
    %567 = vector.broadcast %48 : f32 to vector<2x256xf32>
    %568 = arith.mulf %567, %325 : vector<2x256xf32>
    %569 = arith.addf %566, %568 : vector<2x256xf32>
    %570 = vector.broadcast %64 : f32 to vector<2x256xf32>
    %571 = arith.addf %569, %570 : vector<2x256xf32>
    %cst_195 = arith.constant 0.000000e+00 : f32
    %572 = vector.broadcast %cst_195 : f32 to vector<2x256xf32>
    %573 = arith.maximumf %571, %572 : vector<2x256xf32>
    %574 = arith.subf %561, %573 : vector<2x256xf32>
    %575 = vector.broadcast %0 : f32 to vector<2x256xf32>
    %576 = arith.mulf %575, %574 : vector<2x256xf32>
    %577 = arith.addf %573, %576 : vector<2x256xf32>
    %578 = arith.truncf %577 : vector<2x256xf32> to vector<2x256xbf16>
    %c3840 = arith.constant 3840 : index
    %c0_196 = arith.constant 0 : index
    %579 = vector.load %arg7[%c3840, %c0_196] : memref<4096x32xbf16, #tpu.memory_space<vmem>>, vector<256x32xbf16>
    %cst_197 = arith.constant dense<0.000000e+00> : vector<2x32xf32>
    %580 = tpu.matmul %578, %579, %cst_197 {dimension_numbers = #tpu.dot_dimension_numbers<[1], [0], [0], [1], [0, 0, 1, 1], [], []>} : vector<2x256xbf16>, vector<256x32xbf16>, vector<2x32xf32> -> vector<2x32xf32>
    %581 = arith.addf %549, %580 : vector<2x32xf32>
    %c0_198 = arith.constant 0 : index
    %c0_199 = arith.constant 0 : index
    %582 = vector.load %arg8[%c0_198, %c0_199] : memref<1x32xf32, #tpu.memory_space<vmem>>, vector<1x32xf32>
    %583 = vector.broadcast %582 : vector<1x32xf32> to vector<2x32xf32>
    %584 = arith.addf %581, %583 : vector<2x32xf32>
    %cst_200 = arith.constant 0.000000e+00 : f32
    %585 = vector.broadcast %cst_200 : f32 to vector<2x32xf32>
    %586 = arith.maximumf %584, %585 : vector<2x32xf32>
    %c0_201 = arith.constant 0 : index
    %c0_202 = arith.constant 0 : index
    %587 = vector.load %arg9[%c0_201, %c0_202] : memref<32x8xf32, #tpu.memory_space<vmem>>, vector<32x8xf32>
    %cst_203 = arith.constant dense<0.000000e+00> : vector<2x8xf32>
    %588 = tpu.matmul %586, %587, %cst_203 {dimension_numbers = #tpu.dot_dimension_numbers<[1], [0], [0], [1], [0, 0, 1, 1], [], []>} : vector<2x32xf32>, vector<32x8xf32>, vector<2x8xf32> -> vector<2x8xf32>
    %c0_204 = arith.constant 0 : index
    %c0_205 = arith.constant 0 : index
    %589 = vector.load %arg10[%c0_204, %c0_205] : memref<1x8xf32, #tpu.memory_space<vmem>>, vector<1x8xf32>
    %590 = vector.broadcast %589 : vector<1x8xf32> to vector<2x8xf32>
    %591 = arith.addf %588, %590 : vector<2x8xf32>
    %c0_206 = arith.constant 0 : index
    %c0_207 = arith.constant 0 : index
    %592 = vector.load %arg11[%c0_206, %c0_207] : memref<2x8xf32, #tpu.memory_space<vmem>>, vector<2x8xf32>
    tpu.vector_store %arg11[%c0_206, %c0_207], %591 {strides = array<i32>} : memref<2x8xf32, #tpu.memory_space<vmem>>, vector<2x8xf32>,
    return
  }
  func.func @transform_0(%arg0: i32) -> (i32, i32) {
    %c0_i32 = arith.constant 0 : i32
    %c0_i32_0 = arith.constant 0 : i32
    %c0_i32_1 = arith.constant 0 : i32
    return %c0_i32, %c0_i32_0 : i32, i32
  }
  func.func @transform_1(%arg0: i32) -> (i32, i32) {
    %c0_i32 = arith.constant 0 : i32
    %c0_i32_0 = arith.constant 0 : i32
    %c0_i32_1 = arith.constant 0 : i32
    return %c0_i32, %c0_i32_0 : i32, i32
  }
  func.func @transform_2(%arg0: i32) -> (i32, i32) {
    %c0_i32 = arith.constant 0 : i32
    %c0_i32_0 = arith.constant 0 : i32
    %c0_i32_1 = arith.constant 0 : i32
    return %c0_i32, %c0_i32_0 : i32, i32
  }
  func.func @transform_3(%arg0: i32) -> (i32, i32) {
    %c0_i32 = arith.constant 0 : i32
    %c0_i32_0 = arith.constant 0 : i32
    %c0_i32_1 = arith.constant 0 : i32
    return %c0_i32, %c0_i32_0 : i32, i32
  }
  func.func @transform_4(%arg0: i32) -> (i32, i32) {
    %c0_i32 = arith.constant 0 : i32
    %c0_i32_0 = arith.constant 0 : i32
    %c0_i32_1 = arith.constant 0 : i32
    return %c0_i32, %c0_i32_0 : i32, i32
  }
  func.func @transform_5(%arg0: i32) -> (i32, i32) {
    %c0_i32 = arith.constant 0 : i32
    %c0_i32_0 = arith.constant 0 : i32
    return %arg0, %c0_i32 : i32, i32
  }
  func.func @transform_6(%arg0: i32) -> (i32, i32) {
    %c0_i32 = arith.constant 0 : i32
    %c0_i32_0 = arith.constant 0 : i32
    %c0_i32_1 = arith.constant 0 : i32
    return %c0_i32, %c0_i32_0 : i32, i32
  }
  func.func @transform_7(%arg0: i32) -> (i32, i32) {
    %c0_i32 = arith.constant 0 : i32
    %c0_i32_0 = arith.constant 0 : i32
    %c0_i32_1 = arith.constant 0 : i32
    return %c0_i32, %c0_i32_0 : i32, i32
  }
  func.func @transform_8(%arg0: i32) -> (i32, i32) {
    %c0_i32 = arith.constant 0 : i32
    %c0_i32_0 = arith.constant 0 : i32
    %c0_i32_1 = arith.constant 0 : i32
    return %c0_i32, %c0_i32_0 : i32, i32
  }
  func.func @transform_9(%arg0: i32) -> (i32, i32) {
    %c0_i32 = arith.constant 0 : i32
    %c0_i32_0 = arith.constant 0 : i32
    %c0_i32_1 = arith.constant 0 : i32
    return %c0_i32, %c0_i32_0 : i32, i32
  }
  func.func @transform_10(%arg0: i32) -> (i32, i32) {
    %c0_i32 = arith.constant 0 : i32
    %c0_i32_0 = arith.constant 0 : i32
    return %arg0, %c0_i32 : i32, i32
  }
}

</mosaic_0001>

<llo_original>
// kernel: tpu_custom_call.1
$region0: #{tpu_custom_call.1}
  #allocation0 [shape = 'u32[]', space=smem, size = 0x4, offset = 0x4, fixed_abs, tag = 'smem constant byte address 0x4 - core index']
  #allocation1 [shape = 'u32[144,128]{1,0:T(1,128)}', space=vmem, size = 0x12000, scoped, tag = 'internal scratch']
  #allocation2 [shape = 'f32[1,1]{1,0:T(1,128)S(6)}', space=smem, size = 0x200, scoped, tag = 'scoped memory for tpu_custom_call.1']
  %s0 = inlined_call_operand.vmem [shape: f32[3,8], index: 0, kind: input, shape index: {}]
  %s1 = inlined_call_operand.vmem [shape: f32[1,8], index: 1, kind: input, shape index: {}]
  %s2 = inlined_call_operand.vmem [shape: f32[3,8], index: 2, kind: input, shape index: {}]
  %s3 = inlined_call_operand.vmem [shape: f32[1,8], index: 3, kind: input, shape index: {}]
  %s4 = inlined_call_operand.<no memory space> [shape: f32[1,1], index: 4, kind: input, shape index: {}]
  %s5 = inlined_call_operand.vmem [shape: f32[2,1536], index: 5, kind: input, shape index: {}]
  %s6 = inlined_call_operand.vmem [shape: bf16[4096,32], index: 6, kind: input, shape index: {}]
  %s7 = inlined_call_operand.vmem [shape: f32[1,32], index: 7, kind: input, shape index: {}]
  %s8 = inlined_call_operand.vmem [shape: f32[32,8], index: 8, kind: input, shape index: {}]
  %s9 = inlined_call_operand.vmem [shape: f32[1,8], index: 9, kind: input, shape index: {}]
  %s10 = inlined_call_operand.hbm [shape: f32[2,8], index: 10, kind: output, shape index: {}]
  %s11 = sld [smem:[#allocation0]]
  $region66: #{tpu_custom_call.1} parent=0
    _
  %s13 = ssub.s32 1, %s11
  %s14 = scalar_select 0, %s13, %s11
  %15 = sst [smem:[#allocation2]] %s4
  $region1: #{tpu_custom_call.1} parent=0
    #allocation3 [shape = 'u8[2048]{0}', space=smem, size = 0x800, scoped, tag = 'input window, operand 0, single buffered']
    #allocation4 [shape = 's32[1]{0}', space=sflag, size = 0x4, scoped, tag = 'scoped memory for tpu_custom_call.1']
    #allocation5 [shape = 's32[1]{0}', space=sflag, size = 0x4, scoped, tag = 'scoped memory for tpu_custom_call.1']
    #allocation6 [shape = 'u8[512]{0}', space=smem, size = 0x200, scoped, tag = 'input window, operand 1, single buffered']
    #allocation7 [shape = 's32[1]{0}', space=sflag, size = 0x4, scoped, tag = 'scoped memory for tpu_custom_call.1']
    #allocation8 [shape = 'u8[2048]{0}', space=smem, size = 0x800, scoped, tag = 'input window, operand 2, single buffered']
    #allocation9 [shape = 'u8[512]{0}', space=smem, size = 0x200, scoped, tag = 'input window, operand 3, single buffered']
    #allocation10 [shape = 's32[1]{0}', space=sflag, size = 0x4, scoped, tag = 'scoped memory for tpu_custom_call.1']
    #allocation11 [shape = 'u8[1024]{0}', space=vmem, size = 0x400, scoped, tag = 'output window, operand 0, single buffered']
    %16 = vsyncpa [#allocation5], 0
    %17 = vsyncpa [#allocation7], 0
    %18 = vsyncpa [#allocation10], 0
    %19 = vsyncpa [#allocation4], 0
    // Predicated region
    $region2: #{tpu_custom_call.1} parent=1 // pred_check
      _
    $region3: #{tpu_custom_call.1} parent=1 // pred_check_branch
      %21 = sbr.rel (0) target = $region5
    $region4: #{tpu_custom_call.1} parent=1 // pred_region
      %s23 = ssub.s32 64, 64
      %24 = vsyncadd [#allocation5], %s23
      %s26 = sshll.u32 %s0, 4
      %s27 = int_to_ptr.vmem [resolvable:$true] %s26
      %29 = dma.vmem_to_smem %s27, 64, [#allocation3], [#allocation5]
    $region5: #{tpu_custom_call.1} parent=1 // pred_fallthru
      _
    // Predicated region
    $region6: #{tpu_custom_call.1} parent=1 // pred_check
      _
    $region7: #{tpu_custom_call.1} parent=1 // pred_check_branch
      %31 = sbr.rel (0) target = $region9
    $region8: #{tpu_custom_call.1} parent=1 // pred_region
      %s33 = ssub.s32 16, 16
      %34 = vsyncadd [#allocation7], %s33
      %s36 = sshll.u32 %s1, 4
      %s37 = int_to_ptr.vmem [resolvable:$true] %s36
      %39 = dma.vmem_to_smem %s37, 16, [#allocation6], [#allocation7]
    $region9: #{tpu_custom_call.1} parent=1 // pred_fallthru
      _
    // Predicated region
    $region10: #{tpu_custom_call.1} parent=1 // pred_check
      _
    $region11: #{tpu_custom_call.1} parent=1 // pred_check_branch
      %41 = sbr.rel (0) target = $region13
    $region12: #{tpu_custom_call.1} parent=1 // pred_region
      %s43 = ssub.s32 64, 64
      %44 = vsyncadd [#allocation7], %s43
      %s46 = sshll.u32 %s2, 4
      %s47 = int_to_ptr.vmem [resolvable:$true] %s46
      %49 = dma.vmem_to_smem %s47, 64, [#allocation8], [#allocation7]
    $region13: #{tpu_custom_call.1} parent=1 // pred_fallthru
      _
    // Predicated region
    $region14: #{tpu_custom_call.1} parent=1 // pred_check
      _
    $region15: #{tpu_custom_call.1} parent=1 // pred_check_branch
      %51 = sbr.rel (0) target = $region17
    $region16: #{tpu_custom_call.1} parent=1 // pred_region
      %s53 = ssub.s32 16, 16
      %54 = vsyncadd [#allocation10], %s53
      %s56 = sshll.u32 %s3, 4
      %s57 = int_to_ptr.vmem [resolvable:$true] %s56
      %59 = dma.vmem_to_smem %s57, 16, [#allocation9], [#allocation10]
    $region17: #{tpu_custom_call.1} parent=1 // pred_fallthru
      _
    // Predicated region
    $region18: #{tpu_custom_call.1} parent=1 // pred_check
      _
    $region19: #{tpu_custom_call.1} parent=1 // pred_check_branch
      %61 = sbr.rel (0) target = $region21
    $region20: #{tpu_custom_call.1} parent=1 // pred_region
      _
    $region21: #{tpu_custom_call.1} parent=1 // pred_fallthru
      _
    // Predicated region
    $region22: #{tpu_custom_call.1} parent=1 // pred_check
      _
    $region23: #{tpu_custom_call.1} parent=1 // pred_check_branch
      %63 = sbr.rel (0) target = $region25
    $region24: #{tpu_custom_call.1} parent=1 // pred_region
      _
    $region25: #{tpu_custom_call.1} parent=1 // pred_fallthru
      _
    // Predicated region
    $region26: #{tpu_custom_call.1} parent=1 // pred_check
      _
    $region27: #{tpu_custom_call.1} parent=1 // pred_check_branch
      %65 = sbr.rel (0) target = $region29
    $region28: #{tpu_custom_call.1} parent=1 // pred_region
      _
    $region29: #{tpu_custom_call.1} parent=1 // pred_fallthru
      _
    // Predicated region
    $region30: #{tpu_custom_call.1} parent=1 // pred_check
      _
    $region31: #{tpu_custom_call.1} parent=1 // pred_check_branch
      %67 = sbr.rel (0) target = $region33
    $region32: #{tpu_custom_call.1} parent=1 // pred_region
      _
    $region33: #{tpu_custom_call.1} parent=1 // pred_fallthru
      _
    // Predicated region
    $region34: #{tpu_custom_call.1} parent=1 // pred_check
      _
    $region35: #{tpu_custom_call.1} parent=1 // pred_check_branch
      %69 = sbr.rel (0) target = $region37
    $region36: #{tpu_custom_call.1} parent=1 // pred_region
      _
    $region37: #{tpu_custom_call.1} parent=1 // pred_fallthru
      _
    // Predicated region
    $region38: #{tpu_custom_call.1} parent=1 // pred_check
      _
    $region39: #{tpu_custom_call.1} parent=1 // pred_check_branch
      %71 = sbr.rel (0) target = $region41
    $region40: #{tpu_custom_call.1} parent=1 // pred_region
      _
    $region41: #{tpu_custom_call.1} parent=1 // pred_fallthru
      _
    // Predicated region
    $region42: #{tpu_custom_call.1} parent=1 // pred_check
      _
    $region43: #{tpu_custom_call.1} parent=1 // pred_check_branch
      %73 = sbr.rel (0) target = $region45
    $region44: #{tpu_custom_call.1} parent=1 // pred_region
      %74 = dma.done [#allocation5], 64
    $region45: #{tpu_custom_call.1} parent=1 // pred_fallthru
      _
    // Predicated region
    $region46: #{tpu_custom_call.1} parent=1 // pred_check
      _
    $region47: #{tpu_custom_call.1} parent=1 // pred_check_branch
      %76 = sbr.rel (0) target = $region49
    $region48: #{tpu_custom_call.1} parent=1 // pred_region
      %77 = dma.done [#allocation7], 16
    $region49: #{tpu_custom_call.1} parent=1 // pred_fallthru
      _
    // Predicated region
    $region50: #{tpu_custom_call.1} parent=1 // pred_check
      _
    $region51: #{tpu_custom_call.1} parent=1 // pred_check_branch
      %79 = sbr.rel (0) target = $region53
    $region52: #{tpu_custom_call.1} parent=1 // pred_region
      %80 = dma.done [#allocation7], 64
    $region53: #{tpu_custom_call.1} parent=1 // pred_fallthru
      _
    // Predicated region
    $region54: #{tpu_custom_call.1} parent=1 // pred_check
      _
    $region55: #{tpu_custom_call.1} parent=1 // pred_check_branch
      %82 = sbr.rel (0) target = $region57
    $region56: #{tpu_custom_call.1} parent=1 // pred_region
      %83 = dma.done [#allocation10], 16
    $region57: #{tpu_custom_call.1} parent=1 // pred_fallthru
      _
    %84 = sfence
    %s86 = sld [smem:[#allocation2]]
    %s87 = sld [smem:[#allocation3]]
    %s88 = sld [smem:[#allocation3 + $0x80]]
    %s89 = sld [smem:[#allocation3 + $0x100]]
    %s90 = sld [smem:[#allocation3 + $0x1]]
    %s91 = sld [smem:[#allocation3 + $0x81]]
    %s92 = sld [smem:[#allocation3 + $0x101]]
    %s93 = sld [smem:[#allocation3 + $0x2]]
    %s94 = sld [smem:[#allocation3 + $0x82]]
    %s95 = sld [smem:[#allocation3 + $0x102]]
    %s96 = sld [smem:[#allocation3 + $0x3]]
    %s97 = sld [smem:[#allocation3 + $0x83]]
    %s98 = sld [smem:[#allocation3 + $0x103]]
    %s99 = sld [smem:[#allocation3 + $0x4]]
    %s100 = sld [smem:[#allocation3 + $0x84]]
    %s101 = sld [smem:[#allocation3 + $0x104]]
    %s102 = sld [smem:[#allocation3 + $0x5]]
    %s103 = sld [smem:[#allocation3 + $0x85]]
    %s104 = sld [smem:[#allocation3 + $0x105]]
    %s105 = sld [smem:[#allocation3 + $0x6]]
    %s106 = sld [smem:[#allocation3 + $0x86]]
    %s107 = sld [smem:[#allocation3 + $0x106]]
    %s108 = sld [smem:[#allocation3 + $0x7]]
    %s109 = sld [smem:[#allocation3 + $0x87]]
    %s110 = sld [smem:[#allocation3 + $0x107]]
    %s111 = sld [smem:[#allocation8]]
    %s112 = sld [smem:[#allocation8 + $0x80]]
    %s113 = sld [smem:[#allocation8 + $0x100]]
    %s114 = sld [smem:[#allocation8 + $0x1]]
    %s115 = sld [smem:[#allocation8 + $0x81]]
    %s116 = sld [smem:[#allocation8 + $0x101]]
    %s117 = sld [smem:[#allocation8 + $0x2]]
    %s118 = sld [smem:[#allocation8 + $0x82]]
    %s119 = sld [smem:[#allocation8 + $0x102]]
    %s120 = sld [smem:[#allocation8 + $0x3]]
    %s121 = sld [smem:[#allocation8 + $0x83]]
    %s122 = sld [smem:[#allocation8 + $0x103]]
    %s123 = sld [smem:[#allocation8 + $0x4]]
    %s124 = sld [smem:[#allocation8 + $0x84]]
    %s125 = sld [smem:[#allocation8 + $0x104]]
    %s126 = sld [smem:[#allocation8 + $0x5]]
    %s127 = sld [smem:[#allocation8 + $0x85]]
    %s128 = sld [smem:[#allocation8 + $0x105]]
    %s129 = sld [smem:[#allocation8 + $0x6]]
    %s130 = sld [smem:[#allocation8 + $0x86]]
    %s131 = sld [smem:[#allocation8 + $0x106]]
    %s132 = sld [smem:[#allocation8 + $0x7]]
    %s133 = sld [smem:[#allocation8 + $0x87]]
    %s134 = sld [smem:[#allocation8 + $0x107]]
    %s135 = sld [smem:[#allocation6]]
    %s136 = sld [smem:[#allocation6 + $0x1]]
    %s137 = sld [smem:[#allocation6 + $0x2]]
    %s138 = sld [smem:[#allocation6 + $0x3]]
    %s139 = sld [smem:[#allocation6 + $0x4]]
    %s140 = sld [smem:[#allocation6 + $0x5]]
    %s141 = sld [smem:[#allocation6 + $0x6]]
    %s142 = sld [smem:[#allocation6 + $0x7]]
    %s143 = sld [smem:[#allocation9]]
    %s144 = sld [smem:[#allocation9 + $0x1]]
    %s145 = sld [smem:[#allocation9 + $0x2]]
    %s146 = sld [smem:[#allocation9 + $0x3]]
    %s147 = sld [smem:[#allocation9 + $0x4]]
    %s148 = sld [smem:[#allocation9 + $0x5]]
    %s149 = sld [smem:[#allocation9 + $0x6]]
    %s150 = sld [smem:[#allocation9 + $0x7]]
    %v151 = vld [vmem:[%s5] sm:$0xf]
    %v152 = vld [vmem:[%s5 + $0x4] sm:$0xf]
    %v153 = vld [vmem:[%s5 + $0x8] sm:$0xf]
    %v154 = vstv %s87
    %v155 = vmul.f32 %v154, %v151
    %v156 = vstv %s88
    %v157 = vmul.f32 %v156, %v152
    %v158 = vadd.f32 %v155, %v157
    %v159 = vstv %s89
    %v160 = vmul.f32 %v159, %v153
    %v161 = vadd.f32 %v158, %v160
    %v162 = vstv %s135
    %v163 = vadd.f32 %v161, %v162
    %v164 = vmax.f32 %v163, 0.0
    %v165 = vstv %s111
    %v166 = vmul.f32 %v165, %v151
    %v167 = vstv %s112
    %v168 = vmul.f32 %v167, %v152
    %v169 = vadd.f32 %v166, %v168
    %v170 = vstv %s113
    %v171 = vmul.f32 %v170, %v153
    %v172 = vadd.f32 %v169, %v171
    %v173 = vstv %s143
    %v174 = vadd.f32 %v172, %v173
    %v175 = vmax.f32 %v174, 0.0
    %v176 = vsub.f32 %v164, %v175
    %v177 = vstv %s86
    %v178 = vmul.f32 %v177, %v176
    %v179 = vadd.f32 %v175, %v178
    %v182 = vunpack.c.l.s4 1983009808
    %v183 = vunpack.c.0.s8 %v182
    %v184 = vlaneseq
    %v185 = vshrl.u32 %v184, 7
    %v186 = vsub.s32 %v183, %v185
    %v187 = vrot.slane %v179, %v186
    %v188 = vcombine.high %v187, %v187
    %v191 = vpack.c.bf16 %v187, %v187
    %v192 = vpack.c.bf16 %v188, %v188
    %v193 = vld [vmem:[%s6] sm:$0xf]
    %v194 = vld [vmem:[%s6 + $0x4] sm:$0xf]
    %v195 = vld [vmem:[%s6 + $0x8] sm:$0xf]
    %v196 = vld [vmem:[%s6 + $0xc] sm:$0xf]
    %v197 = vld [vmem:[%s6 + $0x10] sm:$0xf]
    %v198 = vld [vmem:[%s6 + $0x14] sm:$0xf]
    %v199 = vld [vmem:[%s6 + $0x18] sm:$0xf]
    %v200 = vld [vmem:[%s6 + $0x1c] sm:$0xf]
    %v201 = vld [vmem:[%s6 + $0x20] sm:$0xf]
    %v202 = vld [vmem:[%s6 + $0x24] sm:$0xf]
    %v203 = vld [vmem:[%s6 + $0x28] sm:$0xf]
    %v204 = vld [vmem:[%s6 + $0x2c] sm:$0xf]
    %v205 = vld [vmem:[%s6 + $0x30] sm:$0xf]
    %v206 = vld [vmem:[%s6 + $0x34] sm:$0xf]
    %v207 = vld [vmem:[%s6 + $0x38] sm:$0xf]
    %v208 = vld [vmem:[%s6 + $0x3c] sm:$0xf]
    %v209 = vld [vmem:[%s6 + $0x40] sm:$0xf]
    %v210 = vld [vmem:[%s6 + $0x44] sm:$0xf]
    %v211 = vld [vmem:[%s6 + $0x48] sm:$0xf]
    %v212 = vld [vmem:[%s6 + $0x4c] sm:$0xf]
    %v213 = vld [vmem:[%s6 + $0x50] sm:$0xf]
    %v214 = vld [vmem:[%s6 + $0x54] sm:$0xf]
    %v215 = vld [vmem:[%s6 + $0x58] sm:$0xf]
    %v216 = vld [vmem:[%s6 + $0x5c] sm:$0xf]
    %v217 = vld [vmem:[%s6 + $0x60] sm:$0xf]
    %v218 = vld [vmem:[%s6 + $0x64] sm:$0xf]
    %v219 = vld [vmem:[%s6 + $0x68] sm:$0xf]
    %v220 = vld [vmem:[%s6 + $0x6c] sm:$0xf]
    %v221 = vld [vmem:[%s6 + $0x70] sm:$0xf]
    %v222 = vld [vmem:[%s6 + $0x74] sm:$0xf]
    %v223 = vld [vmem:[%s6 + $0x78] sm:$0xf]
    %v224 = vld [vmem:[%s6 + $0x7c] sm:$0xf]
    %v225 = vstv %s90
    %v226 = vmul.f32 %v225, %v151
    %v227 = vstv %s91
    %v228 = vmul.f32 %v227, %v152
    %v229 = vadd.f32 %v226, %v228
    %v230 = vstv %s92
    %v231 = vmul.f32 %v230, %v153
    %v232 = vadd.f32 %v229, %v231
    %v233 = vstv %s136
    %v234 = vadd.f32 %v232, %v233
    %v235 = vmax.f32 %v234, 0.0
    %v236 = vstv %s114
    %v237 = vmul.f32 %v236, %v151
    %v238 = vstv %s115
    %v239 = vmul.f32 %v238, %v152
    %v240 = vadd.f32 %v237, %v239
    %v241 = vstv %s116
    %v242 = vmul.f32 %v241, %v153
    %v243 = vadd.f32 %v240, %v242
    %v244 = vstv %s144
    %v245 = vadd.f32 %v243, %v244
    %v246 = vmax.f32 %v245, 0.0
    %v247 = vsub.f32 %v235, %v246
    %v248 = vmul.f32 %v177, %v247
    %v249 = vadd.f32 %v246, %v248
    %v252 = vunpack.c.l.s4 1983009808
    %v253 = vunpack.c.0.s8 %v252
    %v254 = vlaneseq
    %v255 = vshrl.u32 %v254, 7
    %v256 = vsub.s32 %v253, %v255
    %v257 = vrot.slane %v249, %v256
    %v258 = vcombine.high %v257, %v257
    %v261 = vpack.c.bf16 %v257, %v257
    %v262 = vpack.c.bf16 %v258, %v258
    %v263 = vld [vmem:[%s6 + $0x80] sm:$0xf]
    %v264 = vld [vmem:[%s6 + $0x84] sm:$0xf]
    %v265 = vld [vmem:[%s6 + $0x88] sm:$0xf]
    %v266 = vld [vmem:[%s6 + $0x8c] sm:$0xf]
    %v267 = vld [vmem:[%s6 + $0x90] sm:$0xf]
    %v268 = vld [vmem:[%s6 + $0x94] sm:$0xf]
    %v269 = vld [vmem:[%s6 + $0x98] sm:$0xf]
    %v270 = vld [vmem:[%s6 + $0x9c] sm:$0xf]
    %v271 = vld [vmem:[%s6 + $0xa0] sm:$0xf]
    %v272 = vld [vmem:[%s6 + $0xa4] sm:$0xf]
    %v273 = vld [vmem:[%s6 + $0xa8] sm:$0xf]
    %v274 = vld [vmem:[%s6 + $0xac] sm:$0xf]
    %v275 = vld [vmem:[%s6 + $0xb0] sm:$0xf]
    %v276 = vld [vmem:[%s6 + $0xb4] sm:$0xf]
    %v277 = vld [vmem:[%s6 + $0xb8] sm:$0xf]
    %v278 = vld [vmem:[%s6 + $0xbc] sm:$0xf]
    %v279 = vld [vmem:[%s6 + $0xc0] sm:$0xf]
    %v280 = vld [vmem:[%s6 + $0xc4] sm:$0xf]
    %v281 = vld [vmem:[%s6 + $0xc8] sm:$0xf]
    %v282 = vld [vmem:[%s6 + $0xcc] sm:$0xf]
    %v283 = vld [vmem:[%s6 + $0xd0] sm:$0xf]
    %v284 = vld [vmem:[%s6 + $0xd4] sm:$0xf]
    %v285 = vld [vmem:[%s6 + $0xd8] sm:$0xf]
    %v286 = vld [vmem:[%s6 + $0xdc] sm:$0xf]
    %v287 = vld [vmem:[%s6 + $0xe0] sm:$0xf]
    %v288 = vld [vmem:[%s6 + $0xe4] sm:$0xf]
    %v289 = vld [vmem:[%s6 + $0xe8] sm:$0xf]
    %v290 = vld [vmem:[%s6 + $0xec] sm:$0xf]
    %v291 = vld [vmem:[%s6 + $0xf0] sm:$0xf]
    %v292 = vld [vmem:[%s6 + $0xf4] sm:$0xf]
    %v293 = vld [vmem:[%s6 + $0xf8] sm:$0xf]
    %v294 = vld [vmem:[%s6 + $0xfc] sm:$0xf]
    %v327 = vunpack.c.l.b16 %v263
    %v328 = vunpack.c.l.b16 %v264
    %v329 = vunpack.c.l.b16 %v265
    %v330 = vunpack.c.l.b16 %v266
    %v331 = vunpack.c.l.b16 %v267
    %v332 = vunpack.c.l.b16 %v268
    %v333 = vunpack.c.l.b16 %v269
    %v334 = vunpack.c.l.b16 %v270
    %v335 = vunpack.c.l.b16 %v271
    %v336 = vunpack.c.l.b16 %v272
    %v337 = vunpack.c.l.b16 %v273
    %v338 = vunpack.c.l.b16 %v274
    %v339 = vunpack.c.l.b16 %v275
    %v340 = vunpack.c.l.b16 %v276
    %v341 = vunpack.c.l.b16 %v277
    %v342 = vunpack.c.l.b16 %v278
    %v343 = vunpack.c.l.b16 %v279
    %v344 = vunpack.c.l.b16 %v280
    %v345 = vunpack.c.l.b16 %v281
    %v346 = vunpack.c.l.b16 %v282
    %v347 = vunpack.c.l.b16 %v283
    %v348 = vunpack.c.l.b16 %v284
    %v349 = vunpack.c.l.b16 %v285
    %v350 = vunpack.c.l.b16 %v286
    %v351 = vunpack.c.l.b16 %v287
    %v352 = vunpack.c.l.b16 %v288
    %v353 = vunpack.c.l.b16 %v289
    %v354 = vunpack.c.l.b16 %v290
    %v355 = vunpack.c.l.b16 %v291
    %v356 = vunpack.c.l.b16 %v292
    %v357 = vunpack.c.l.b16 %v293
    %v358 = vunpack.c.l.b16 %v294
    %v359 = vpack.c.b16 %v328, %v327
    %v360 = vpack.c.b16 %v330, %v329
    %v361 = vpack.c.b16 %v332, %v331
    %v362 = vpack.c.b16 %v334, %v333
    %v363 = vpack.c.b16 %v336, %v335
    %v364 = vpack.c.b16 %v338, %v337
    %v365 = vpack.c.b16 %v340, %v339
    %v366 = vpack.c.b16 %v342, %v341
    %v367 = vpack.c.b16 %v344, %v343
    %v368 = vpack.c.b16 %v346, %v345
    %v369 = vpack.c.b16 %v348, %v347
    %v370 = vpack.c.b16 %v350, %v349
    %v371 = vpack.c.b16 %v352, %v351
    %v372 = vpack.c.b16 %v354, %v353
    %v373 = vpack.c.b16 %v356, %v355
    %v374 = vpack.c.b16 %v358, %v357
    %391 = vmatprep.subr.bf16.mxu0 0
    %392 = vmatpush1.bf16.msra.mxu0 %v366
    %393 = vmatprep.subr.bf16.mxu0 0
    %394 = vmatpush1.bf16.msra.mxu0 %v365
    %395 = vmatprep.subr.bf16.mxu0 0
    %396 = vmatpush1.bf16.msra.mxu0 %v364
    %397 = vmatprep.subr.bf16.mxu0 0
    %398 = vmatpush1.bf16.msra.mxu0 %v363
    %399 = vmatprep.subr.bf16.mxu0 0
    %400 = vmatpush1.bf16.msra.mxu0 %v362
    %401 = vmatprep.subr.bf16.mxu0 0
    %402 = vmatpush1.bf16.msra.mxu0 %v361
    %403 = vmatprep.subr.bf16.mxu0 0
    %404 = vmatpush1.bf16.msra.mxu0 %v360
    %405 = vmatprep.subr.bf16.mxu0 0
    %406 = vmatpush1.bf16.msra.mxu0 %v359
    %407 = vmatprep.subr.bf16.mxu0 0
    %408 = vmatpush2.bf16.msra.mxu0 %v374
    %409 = vmatprep.subr.bf16.mxu0 0
    %410 = vmatpush2.bf16.msra.mxu0 %v373
    %411 = vmatprep.subr.bf16.mxu0 0
    %412 = vmatpush2.bf16.msra.mxu0 %v372
    %413 = vmatprep.subr.bf16.mxu0 0
    %414 = vmatpush2.bf16.msra.mxu0 %v371
    %415 = vmatprep.subr.bf16.mxu0 0
    %416 = vmatpush2.bf16.msra.mxu0 %v370
    %417 = vmatprep.subr.bf16.mxu0 0
    %418 = vmatpush2.bf16.msra.mxu0 %v369
    %419 = vmatprep.subr.bf16.mxu0 0
    %420 = vmatpush2.bf16.msra.mxu0 %v368
    %421 = vmatprep.subr.bf16.mxu0 0
    %422 = vmatpush2.bf16.msra.mxu0 %v367
    %423 = vmatprep.mubr.bf16.mxu0 %v262
    %424 = vmatmul.mubr.bf16.gmra.mxu0 %v261
    %v425 = vpop.f32.mrf.mxu0
    %v426 = vadd.f32 0.0, %v425
    %v427 = vpop.f32.mrf.mxu0
    %v428 = vpop.f32.mrf.mxu0
    %v429 = vpop.f32.mrf.mxu0
    %430 = vdwg.mxu0
    %v463 = vunpack.c.l.b16 %v193
    %v464 = vunpack.c.l.b16 %v194
    %v465 = vunpack.c.l.b16 %v195
    %v466 = vunpack.c.l.b16 %v196
    %v467 = vunpack.c.l.b16 %v197
    %v468 = vunpack.c.l.b16 %v198
    %v469 = vunpack.c.l.b16 %v199
    %v470 = vunpack.c.l.b16 %v200
    %v471 = vunpack.c.l.b16 %v201
    %v472 = vunpack.c.l.b16 %v202
    %v473 = vunpack.c.l.b16 %v203
    %v474 = vunpack.c.l.b16 %v204
    %v475 = vunpack.c.l.b16 %v205
    %v476 = vunpack.c.l.b16 %v206
    %v477 = vunpack.c.l.b16 %v207
    %v478 = vunpack.c.l.b16 %v208
    %v479 = vunpack.c.l.b16 %v209
    %v480 = vunpack.c.l.b16 %v210
    %v481 = vunpack.c.l.b16 %v211
    %v482 = vunpack.c.l.b16 %v212
    %v483 = vunpack.c.l.b16 %v213
    %v484 = vunpack.c.l.b16 %v214
    %v485 = vunpack.c.l.b16 %v215
    %v486 = vunpack.c.l.b16 %v216
    %v487 = vunpack.c.l.b16 %v217
    %v488 = vunpack.c.l.b16 %v218
    %v489 = vunpack.c.l.b16 %v219
    %v490 = vunpack.c.l.b16 %v220
    %v491 = vunpack.c.l.b16 %v221
    %v492 = vunpack.c.l.b16 %v222
    %v493 = vunpack.c.l.b16 %v223
    %v494 = vunpack.c.l.b16 %v224
    %v495 = vpack.c.b16 %v464, %v463
    %v496 = vpack.c.b16 %v466, %v465
    %v497 = vpack.c.b16 %v468, %v467
    %v498 = vpack.c.b16 %v470, %v469
    %v499 = vpack.c.b16 %v472, %v471
    %v500 = vpack.c.b16 %v474, %v473
    %v501 = vpack.c.b16 %v476, %v475
    %v502 = vpack.c.b16 %v478, %v477
    %v503 = vpack.c.b16 %v480, %v479
    %v504 = vpack.c.b16 %v482, %v481
    %v505 = vpack.c.b16 %v484, %v483
    %v506 = vpack.c.b16 %v486, %v485
    %v507 = vpack.c.b16 %v488, %v487
    %v508 = vpack.c.b16 %v490, %v489
    %v509 = vpack.c.b16 %v492, %v491
    %v510 = vpack.c.b16 %v494, %v493
    %527 = vmatprep.subr.bf16.mxu0 0
    %528 = vmatpush1.bf16.msra.mxu0 %v502
    %529 = vmatprep.subr.bf16.mxu0 0
    %530 = vmatpush1.bf16.msra.mxu0 %v501
    %531 = vmatprep.subr.bf16.mxu0 0
    %532 = vmatpush1.bf16.msra.mxu0 %v500
    %533 = vmatprep.subr.bf16.mxu0 0
    %534 = vmatpush1.bf16.msra.mxu0 %v499
    %535 = vmatprep.subr.bf16.mxu0 0
    %536 = vmatpush1.bf16.msra.mxu0 %v498
    %537 = vmatprep.subr.bf16.mxu0 0
    %538 = vmatpush1.bf16.msra.mxu0 %v497
    %539 = vmatprep.subr.bf16.mxu0 0
    %540 = vmatpush1.bf16.msra.mxu0 %v496
    %541 = vmatprep.subr.bf16.mxu0 0
    %542 = vmatpush1.bf16.msra.mxu0 %v495
    %543 = vmatprep.subr.bf16.mxu0 0
    %544 = vmatpush2.bf16.msra.mxu0 %v510
    %545 = vmatprep.subr.bf16.mxu0 0
    %546 = vmatpush2.bf16.msra.mxu0 %v509
    %547 = vmatprep.subr.bf16.mxu0 0
    %548 = vmatpush2.bf16.msra.mxu0 %v508
    %549 = vmatprep.subr.bf16.mxu0 0
    %550 = vmatpush2.bf16.msra.mxu0 %v507
    %551 = vmatprep.subr.bf16.mxu0 0
    %552 = vmatpush2.bf16.msra.mxu0 %v506
    %553 = vmatprep.subr.bf16.mxu0 0
    %554 = vmatpush2.bf16.msra.mxu0 %v505
    %555 = vmatprep.subr.bf16.mxu0 0
    %556 = vmatpush2.bf16.msra.mxu0 %v504
    %557 = vmatprep.subr.bf16.mxu0 0
    %558 = vmatpush2.bf16.msra.mxu0 %v503
    %559 = vmatprep.mubr.bf16.mxu0 %v192
    %560 = vmatmul.mubr.bf16.gmra.mxu0 %v191
    %v561 = vpop.f32.mrf.mxu0
    %v562 = vadd.f32 %v426, %v561
    %v563 = vpop.f32.mrf.mxu0
    %v564 = vpop.f32.mrf.mxu0
    %v565 = vpop.f32.mrf.mxu0
    %566 = vdwg.mxu0
    %v567 = vstv %s93
    %v568 = vmul.f32 %v567, %v151
    %v569 = vstv %s94
    %v570 = vmul.f32 %v569, %v152
    %v571 = vadd.f32 %v568, %v570
    %v572 = vstv %s95
    %v573 = vmul.f32 %v572, %v153
    %v574 = vadd.f32 %v571, %v573
    %v575 = vstv %s137
    %v576 = vadd.f32 %v574, %v575
    %v577 = vmax.f32 %v576, 0.0
    %v578 = vstv %s117
    %v579 = vmul.f32 %v578, %v151
    %v580 = vstv %s118
    %v581 = vmul.f32 %v580, %v152
    %v582 = vadd.f32 %v579, %v581
    %v583 = vstv %s119
    %v584 = vmul.f32 %v583, %v153
    %v585 = vadd.f32 %v582, %v584
    %v586 = vstv %s145
    %v587 = vadd.f32 %v585, %v586
    %v588 = vmax.f32 %v587, 0.0
    %v589 = vsub.f32 %v577, %v588
    %v590 = vmul.f32 %v177, %v589
    %v591 = vadd.f32 %v588, %v590
    %v594 = vunpack.c.l.s4 1983009808
    %v595 = vunpack.c.0.s8 %v594
    %v596 = vlaneseq
    %v597 = vshrl.u32 %v596, 7
    %v598 = vsub.s32 %v595, %v597
    %v599 = vrot.slane %v591, %v598
    %v600 = vcombine.high %v599, %v599
    %v603 = vpack.c.bf16 %v599, %v599
    %v604 = vpack.c.bf16 %v600, %v600
    %v605 = vld [vmem:[%s6 + $0x100] sm:$0xf]
    %v606 = vld [vmem:[%s6 + $0x104] sm:$0xf]
    %v607 = vld [vmem:[%s6 + $0x108] sm:$0xf]
    %v608 = vld [vmem:[%s6 + $0x10c] sm:$0xf]
    %v609 = vld [vmem:[%s6 + $0x110] sm:$0xf]
    %v610 = vld [vmem:[%s6 + $0x114] sm:$0xf]
    %v611 = vld [vmem:[%s6 + $0x118] sm:$0xf]
    %v612 = vld [vmem:[%s6 + $0x11c] sm:$0xf]
    %v613 = vld [vmem:[%s6 + $0x120] sm:$0xf]
    %v614 = vld [vmem:[%s6 + $0x124] sm:$0xf]
    %v615 = vld [vmem:[%s6 + $0x128] sm:$0xf]
    %v616 = vld [vmem:[%s6 + $0x12c] sm:$0xf]
    %v617 = vld [vmem:[%s6 + $0x130] sm:$0xf]
    %v618 = vld [vmem:[%s6 + $0x134] sm:$0xf]
    %v619 = vld [vmem:[%s6 + $0x138] sm:$0xf]
    %v620 = vld [vmem:[%s6 + $0x13c] sm:$0xf]
    %v621 = vld [vmem:[%s6 + $0x140] sm:$0xf]
    %v622 = vld [vmem:[%s6 + $0x144] sm:$0xf]
    %v623 = vld [vmem:[%s6 + $0x148] sm:$0xf]
    %v624 = vld [vmem:[%s6 + $0x14c] sm:$0xf]
    %v625 = vld [vmem:[%s6 + $0x150] sm:$0xf]
    %v626 = vld [vmem:[%s6 + $0x154] sm:$0xf]
    %v627 = vld [vmem:[%s6 + $0x158] sm:$0xf]
    %v628 = vld [vmem:[%s6 + $0x15c] sm:$0xf]
    %v629 = vld [vmem:[%s6 + $0x160] sm:$0xf]
    %v630 = vld [vmem:[%s6 + $0x164] sm:$0xf]
    %v631 = vld [vmem:[%s6 + $0x168] sm:$0xf]
    %v632 = vld [vmem:[%s6 + $0x16c] sm:$0xf]
    %v633 = vld [vmem:[%s6 + $0x170] sm:$0xf]
    %v634 = vld [vmem:[%s6 + $0x174] sm:$0xf]
    %v635 = vld [vmem:[%s6 + $0x178] sm:$0xf]
    %v636 = vld [vmem:[%s6 + $0x17c] sm:$0xf]
    %v669 = vunpack.c.l.b16 %v605
    %v670 = vunpack.c.l.b16 %v606
    %v671 = vunpack.c.l.b16 %v607
    %v672 = vunpack.c.l.b16 %v608
    %v673 = vunpack.c.l.b16 %v609
    %v674 = vunpack.c.l.b16 %v610
    %v675 = vunpack.c.l.b16 %v611
    %v676 = vunpack.c.l.b16 %v612
    %v677 = vunpack.c.l.b16 %v613
    %v678 = vunpack.c.l.b16 %v614
    %v679 = vunpack.c.l.b16 %v615
    %v680 = vunpack.c.l.b16 %v616
    %v681 = vunpack.c.l.b16 %v617
    %v682 = vunpack.c.l.b16 %v618
    %v683 = vunpack.c.l.b16 %v619
    %v684 = vunpack.c.l.b16 %v620
    %v685 = vunpack.c.l.b16 %v621
    %v686 = vunpack.c.l.b16 %v622
    %v687 = vunpack.c.l.b16 %v623
    %v688 = vunpack.c.l.b16 %v624
    %v689 = vunpack.c.l.b16 %v625
    %v690 = vunpack.c.l.b16 %v626
    %v691 = vunpack.c.l.b16 %v627
    %v692 = vunpack.c.l.b16 %v628
    %v693 = vunpack.c.l.b16 %v629
    %v694 = vunpack.c.l.b16 %v630
    %v695 = vunpack.c.l.b16 %v631
    %v696 = vunpack.c.l.b16 %v632
    %v697 = vunpack.c.l.b16 %v633
    %v698 = vunpack.c.l.b16 %v634
    %v699 = vunpack.c.l.b16 %v635
    %v700 = vunpack.c.l.b16 %v636
    %v701 = vpack.c.b16 %v670, %v669
    %v702 = vpack.c.b16 %v672, %v671
    %v703 = vpack.c.b16 %v674, %v673
    %v704 = vpack.c.b16 %v676, %v675
    %v705 = vpack.c.b16 %v678, %v677
    %v706 = vpack.c.b16 %v680, %v679
    %v707 = vpack.c.b16 %v682, %v681
    %v708 = vpack.c.b16 %v684, %v683
    %v709 = vpack.c.b16 %v686, %v685
    %v710 = vpack.c.b16 %v688, %v687
    %v711 = vpack.c.b16 %v690, %v689
    %v712 = vpack.c.b16 %v692, %v691
    %v713 = vpack.c.b16 %v694, %v693
    %v714 = vpack.c.b16 %v696, %v695
    %v715 = vpack.c.b16 %v698, %v697
    %v716 = vpack.c.b16 %v700, %v699
    %733 = vmatprep.subr.bf16.mxu0 0
    %734 = vmatpush1.bf16.msra.mxu0 %v708
    %735 = vmatprep.subr.bf16.mxu0 0
    %736 = vmatpush1.bf16.msra.mxu0 %v707
    %737 = vmatprep.subr.bf16.mxu0 0
    %738 = vmatpush1.bf16.msra.mxu0 %v706
    %739 = vmatprep.subr.bf16.mxu0 0
    %740 = vmatpush1.bf16.msra.mxu0 %v705
    %741 = vmatprep.subr.bf16.mxu0 0
    %742 = vmatpush1.bf16.msra.mxu0 %v704
    %743 = vmatprep.subr.bf16.mxu0 0
    %744 = vmatpush1.bf16.msra.mxu0 %v703
    %745 = vmatprep.subr.bf16.mxu0 0
    %746 = vmatpush1.bf16.msra.mxu0 %v702
    %747 = vmatprep.subr.bf16.mxu0 0
    %748 = vmatpush1.bf16.msra.mxu0 %v701
    %749 = vmatprep.subr.bf16.mxu0 0
    %750 = vmatpush2.bf16.msra.mxu0 %v716
    %751 = vmatprep.subr.bf16.mxu0 0
    %752 = vmatpush2.bf16.msra.mxu0 %v715
    %753 = vmatprep.subr.bf16.mxu0 0
    %754 = vmatpush2.bf16.msra.mxu0 %v714
    %755 = vmatprep.subr.bf16.mxu0 0
    %756 = vmatpush2.bf16.msra.mxu0 %v713
    %757 = vmatprep.subr.bf16.mxu0 0
    %758 = vmatpush2.bf16.msra.mxu0 %v712
    %759 = vmatprep.subr.bf16.mxu0 0
    %760 = vmatpush2.bf16.msra.mxu0 %v711
    %761 = vmatprep.subr.bf16.mxu0 0
    %762 = vmatpush2.bf16.msra.mxu0 %v710
    %763 = vmatprep.subr.bf16.mxu0 0
    %764 = vmatpush2.bf16.msra.mxu0 %v709
    %765 = vmatprep.mubr.bf16.mxu0 %v604
    %766 = vmatmul.mubr.bf16.gmra.mxu0 %v603
    %v767 = vpop.f32.mrf.mxu0
    %v768 = vadd.f32 0.0, %v767
    %v769 = vpop.f32.mrf.mxu0
    %v770 = vpop.f32.mrf.mxu0
    %v771 = vpop.f32.mrf.mxu0
    %772 = vdwg.mxu0
    %v773 = vadd.f32 %v562, %v768
    %v774 = vstv %s96
    %v775 = vmul.f32 %v774, %v151
    %v776 = vstv %s97
    %v777 = vmul.f32 %v776, %v152
    %v778 = vadd.f32 %v775, %v777
    %v779 = vstv %s98
    %v780 = vmul.f32 %v779, %v153
    %v781 = vadd.f32 %v778, %v780
    %v782 = vstv %s138
    %v783 = vadd.f32 %v781, %v782
    %v784 = vmax.f32 %v783, 0.0
    %v785 = vstv %s120
    %v786 = vmul.f32 %v785, %v151
    %v787 = vstv %s121
    %v788 = vmul.f32 %v787, %v152
    %v789 = vadd.f32 %v786, %v788
    %v790 = vstv %s122
    %v791 = vmul.f32 %v790, %v153
    %v792 = vadd.f32 %v789, %v791
    %v793 = vstv %s146
    %v794 = vadd.f32 %v792, %v793
    %v795 = vmax.f32 %v794, 0.0
    %v796 = vsub.f32 %v784, %v795
    %v797 = vmul.f32 %v177, %v796
    %v798 = vadd.f32 %v795, %v797
    %v801 = vunpack.c.l.s4 1983009808
    %v802 = vunpack.c.0.s8 %v801
    %v803 = vlaneseq
    %v804 = vshrl.u32 %v803, 7
    %v805 = vsub.s32 %v802, %v804
    %v806 = vrot.slane %v798, %v805
    %v807 = vcombine.high %v806, %v806
    %v810 = vpack.c.bf16 %v806, %v806
    %v811 = vpack.c.bf16 %v807, %v807
    %v812 = vld [vmem:[%s6 + $0x180] sm:$0xf]
    %v813 = vld [vmem:[%s6 + $0x184] sm:$0xf]
    %v814 = vld [vmem:[%s6 + $0x188] sm:$0xf]
    %v815 = vld [vmem:[%s6 + $0x18c] sm:$0xf]
    %v816 = vld [vmem:[%s6 + $0x190] sm:$0xf]
    %v817 = vld [vmem:[%s6 + $0x194] sm:$0xf]
    %v818 = vld [vmem:[%s6 + $0x198] sm:$0xf]
    %v819 = vld [vmem:[%s6 + $0x19c] sm:$0xf]
    %v820 = vld [vmem:[%s6 + $0x1a0] sm:$0xf]
    %v821 = vld [vmem:[%s6 + $0x1a4] sm:$0xf]
    %v822 = vld [vmem:[%s6 + $0x1a8] sm:$0xf]
    %v823 = vld [vmem:[%s6 + $0x1ac] sm:$0xf]
    %v824 = vld [vmem:[%s6 + $0x1b0] sm:$0xf]
    %v825 = vld [vmem:[%s6 + $0x1b4] sm:$0xf]
    %v826 = vld [vmem:[%s6 + $0x1b8] sm:$0xf]
    %v827 = vld [vmem:[%s6 + $0x1bc] sm:$0xf]
    %v828 = vld [vmem:[%s6 + $0x1c0] sm:$0xf]
    %v829 = vld [vmem:[%s6 + $0x1c4] sm:$0xf]
    %v830 = vld [vmem:[%s6 + $0x1c8] sm:$0xf]
    %v831 = vld [vmem:[%s6 + $0x1cc] sm:$0xf]
    %v832 = vld [vmem:[%s6 + $0x1d0] sm:$0xf]
    %v833 = vld [vmem:[%s6 + $0x1d4] sm:$0xf]
    %v834 = vld [vmem:[%s6 + $0x1d8] sm:$0xf]
    %v835 = vld [vmem:[%s6 + $0x1dc] sm:$0xf]
    %v836 = vld [vmem:[%s6 + $0x1e0] sm:$0xf]
    %v837 = vld [vmem:[%s6 + $0x1e4] sm:$0xf]
    %v838 = vld [vmem:[%s6 + $0x1e8] sm:$0xf]
    %v839 = vld [vmem:[%s6 + $0x1ec] sm:$0xf]
    %v840 = vld [vmem:[%s6 + $0x1f0] sm:$0xf]
    %v841 = vld [vmem:[%s6 + $0x1f4] sm:$0xf]
    %v842 = vld [vmem:[%s6 + $0x1f8] sm:$0xf]
    %v843 = vld [vmem:[%s6 + $0x1fc] sm:$0xf]
    %v876 = vunpack.c.l.b16 %v812
    %v877 = vunpack.c.l.b16 %v813
    %v878 = vunpack.c.l.b16 %v814
    %v879 = vunpack.c.l.b16 %v815
    %v880 = vunpack.c.l.b16 %v816
    %v881 = vunpack.c.l.b16 %v817
    %v882 = vunpack.c.l.b16 %v818
    %v883 = vunpack.c.l.b16 %v819
    %v884 = vunpack.c.l.b16 %v820
    %v885 = vunpack.c.l.b16 %v821
    %v886 = vunpack.c.l.b16 %v822
    %v887 = vunpack.c.l.b16 %v823
    %v888 = vunpack.c.l.b16 %v824
    %v889 = vunpack.c.l.b16 %v825
    %v890 = vunpack.c.l.b16 %v826
    %v891 = vunpack.c.l.b16 %v827
    %v892 = vunpack.c.l.b16 %v828
    %v893 = vunpack.c.l.b16 %v829
    %v894 = vunpack.c.l.b16 %v830
    %v895 = vunpack.c.l.b16 %v831
    %v896 = vunpack.c.l.b16 %v832
    %v897 = vunpack.c.l.b16 %v833
    %v898 = vunpack.c.l.b16 %v834
    %v899 = vunpack.c.l.b16 %v835
    %v900 = vunpack.c.l.b16 %v836
    %v901 = vunpack.c.l.b16 %v837
    %v902 = vunpack.c.l.b16 %v838
    %v903 = vunpack.c.l.b16 %v839
    %v904 = vunpack.c.l.b16 %v840
    %v905 = vunpack.c.l.b16 %v841
    %v906 = vunpack.c.l.b16 %v842
    %v907 = vunpack.c.l.b16 %v843
    %v908 = vpack.c.b16 %v877, %v876
    %v909 = vpack.c.b16 %v879, %v878
    %v910 = vpack.c.b16 %v881, %v880
    %v911 = vpack.c.b16 %v883, %v882
    %v912 = vpack.c.b16 %v885, %v884
    %v913 = vpack.c.b16 %v887, %v886
    %v914 = vpack.c.b16 %v889, %v888
    %v915 = vpack.c.b16 %v891, %v890
    %v916 = vpack.c.b16 %v893, %v892
    %v917 = vpack.c.b16 %v895, %v894
    %v918 = vpack.c.b16 %v897, %v896
    %v919 = vpack.c.b16 %v899, %v898
    %v920 = vpack.c.b16 %v901, %v900
    %v921 = vpack.c.b16 %v903, %v902
    %v922 = vpack.c.b16 %v905, %v904
    %v923 = vpack.c.b16 %v907, %v906
    %940 = vmatprep.subr.bf16.mxu0 0
    %941 = vmatpush1.bf16.msra.mxu0 %v915
    %942 = vmatprep.subr.bf16.mxu0 0
    %943 = vmatpush1.bf16.msra.mxu0 %v914
    %944 = vmatprep.subr.bf16.mxu0 0
    %945 = vmatpush1.bf16.msra.mxu0 %v913
    %946 = vmatprep.subr.bf16.mxu0 0
    %947 = vmatpush1.bf16.msra.mxu0 %v912
    %948 = vmatprep.subr.bf16.mxu0 0
    %949 = vmatpush1.bf16.msra.mxu0 %v911
    %950 = vmatprep.subr.bf16.mxu0 0
    %951 = vmatpush1.bf16.msra.mxu0 %v910
    %952 = vmatprep.subr.bf16.mxu0 0
    %953 = vmatpush1.bf16.msra.mxu0 %v909
    %954 = vmatprep.subr.bf16.mxu0 0
    %955 = vmatpush1.bf16.msra.mxu0 %v908
    %956 = vmatprep.subr.bf16.mxu0 0
    %957 = vmatpush2.bf16.msra.mxu0 %v923
    %958 = vmatprep.subr.bf16.mxu0 0
    %959 = vmatpush2.bf16.msra.mxu0 %v922
    %960 = vmatprep.subr.bf16.mxu0 0
    %961 = vmatpush2.bf16.msra.mxu0 %v921
    %962 = vmatprep.subr.bf16.mxu0 0
    %963 = vmatpush2.bf16.msra.mxu0 %v920
    %964 = vmatprep.subr.bf16.mxu0 0
    %965 = vmatpush2.bf16.msra.mxu0 %v919
    %966 = vmatprep.subr.bf16.mxu0 0
    %967 = vmatpush2.bf16.msra.mxu0 %v918
    %968 = vmatprep.subr.bf16.mxu0 0
    %969 = vmatpush2.bf16.msra.mxu0 %v917
    %970 = vmatprep.subr.bf16.mxu0 0
    %971 = vmatpush2.bf16.msra.mxu0 %v916
    %972 = vmatprep.mubr.bf16.mxu0 %v811
    %973 = vmatmul.mubr.bf16.gmra.mxu0 %v810
    %v974 = vpop.f32.mrf.mxu0
    %v975 = vadd.f32 0.0, %v974
    %v976 = vpop.f32.mrf.mxu0
    %v977 = vpop.f32.mrf.mxu0
    %v978 = vpop.f32.mrf.mxu0
    %979 = vdwg.mxu0
    %v980 = vadd.f32 %v773, %v975
    %v981 = vstv %s99
    %v982 = vmul.f32 %v981, %v151
    %v983 = vstv %s100
    %v984 = vmul.f32 %v983, %v152
    %v985 = vadd.f32 %v982, %v984
    %v986 = vstv %s101
    %v987 = vmul.f32 %v986, %v153
    %v988 = vadd.f32 %v985, %v987
    %v989 = vstv %s139
    %v990 = vadd.f32 %v988, %v989
    %v991 = vmax.f32 %v990, 0.0
    %v992 = vstv %s123
    %v993 = vmul.f32 %v992, %v151
    %v994 = vstv %s124
    %v995 = vmul.f32 %v994, %v152
    %v996 = vadd.f32 %v993, %v995
    %v997 = vstv %s125
    %v998 = vmul.f32 %v997, %v153
    %v999 = vadd.f32 %v996, %v998
    %v1000 = vstv %s147
    %v1001 = vadd.f32 %v999, %v1000
    %v1002 = vmax.f32 %v1001, 0.0
    %v1003 = vsub.f32 %v991, %v1002
    %v1004 = vmul.f32 %v177, %v1003
    %v1005 = vadd.f32 %v1002, %v1004
    %v1008 = vunpack.c.l.s4 1983009808
    %v1009 = vunpack.c.0.s8 %v1008
    %v1010 = vlaneseq
    %v1011 = vshrl.u32 %v1010, 7
    %v1012 = vsub.s32 %v1009, %v1011
    %v1013 = vrot.slane %v1005, %v1012
    %v1014 = vcombine.high %v1013, %v1013
    %v1017 = vpack.c.bf16 %v1013, %v1013
    %v1018 = vpack.c.bf16 %v1014, %v1014
    %v1019 = vld [vmem:[%s6 + $0x200] sm:$0xf]
    %v1020 = vld [vmem:[%s6 + $0x204] sm:$0xf]
    %v1021 = vld [vmem:[%s6 + $0x208] sm:$0xf]
    %v1022 = vld [vmem:[%s6 + $0x20c] sm:$0xf]
    %v1023 = vld [vmem:[%s6 + $0x210] sm:$0xf]
    %v1024 = vld [vmem:[%s6 + $0x214] sm:$0xf]
    %v1025 = vld [vmem:[%s6 + $0x218] sm:$0xf]
    %v1026 = vld [vmem:[%s6 + $0x21c] sm:$0xf]
    %v1027 = vld [vmem:[%s6 + $0x220] sm:$0xf]
    %v1028 = vld [vmem:[%s6 + $0x224] sm:$0xf]
    %v1029 = vld [vmem:[%s6 + $0x228] sm:$0xf]
    %v1030 = vld [vmem:[%s6 + $0x22c] sm:$0xf]
    %v1031 = vld [vmem:[%s6 + $0x230] sm:$0xf]
    %v1032 = vld [vmem:[%s6 + $0x234] sm:$0xf]
    %v1033 = vld [vmem:[%s6 + $0x238] sm:$0xf]
    %v1034 = vld [vmem:[%s6 + $0x23c] sm:$0xf]
    %v1035 = vld [vmem:[%s6 + $0x240] sm:$0xf]
    %v1036 = vld [vmem:[%s6 + $0x244] sm:$0xf]
    %v1037 = vld [vmem:[%s6 + $0x248] sm:$0xf]
    %v1038 = vld [vmem:[%s6 + $0x24c] sm:$0xf]
    %v1039 = vld [vmem:[%s6 + $0x250] sm:$0xf]
    %v1040 = vld [vmem:[%s6 + $0x254] sm:$0xf]
    %v1041 = vld [vmem:[%s6 + $0x258] sm:$0xf]
    %v1042 = vld [vmem:[%s6 + $0x25c] sm:$0xf]
    %v1043 = vld [vmem:[%s6 + $0x260] sm:$0xf]
    %v1044 = vld [vmem:[%s6 + $0x264] sm:$0xf]
    %v1045 = vld [vmem:[%s6 + $0x268] sm:$0xf]
    %v1046 = vld [vmem:[%s6 + $0x26c] sm:$0xf]
    %v1047 = vld [vmem:[%s6 + $0x270] sm:$0xf]
    %v1048 = vld [vmem:[%s6 + $0x274] sm:$0xf]
    %v1049 = vld [vmem:[%s6 + $0x278] sm:$0xf]
    %v1050 = vld [vmem:[%s6 + $0x27c] sm:$0xf]
    %v1083 = vunpack.c.l.b16 %v1019
    %v1084 = vunpack.c.l.b16 %v1020
    %v1085 = vunpack.c.l.b16 %v1021
    %v1086 = vunpack.c.l.b16 %v1022
    %v1087 = vunpack.c.l.b16 %v1023
    %v1088 = vunpack.c.l.b16 %v1024
    %v1089 = vunpack.c.l.b16 %v1025
    %v1090 = vunpack.c.l.b16 %v1026
    %v1091 = vunpack.c.l.b16 %v1027
    %v1092 = vunpack.c.l.b16 %v1028
    %v1093 = vunpack.c.l.b16 %v1029
    %v1094 = vunpack.c.l.b16 %v1030
    %v1095 = vunpack.c.l.b16 %v1031
    %v1096 = vunpack.c.l.b16 %v1032
    %v1097 = vunpack.c.l.b16 %v1033
    %v1098 = vunpack.c.l.b16 %v1034
    %v1099 = vunpack.c.l.b16 %v1035
    %v1100 = vunpack.c.l.b16 %v1036
    %v1101 = vunpack.c.l.b16 %v1037
    %v1102 = vunpack.c.l.b16 %v1038
    %v1103 = vunpack.c.l.b16 %v1039
    %v1104 = vunpack.c.l.b16 %v1040
    %v1105 = vunpack.c.l.b16 %v1041
    %v1106 = vunpack.c.l.b16 %v1042
    %v1107 = vunpack.c.l.b16 %v1043
    %v1108 = vunpack.c.l.b16 %v1044
    %v1109 = vunpack.c.l.b16 %v1045
    %v1110 = vunpack.c.l.b16 %v1046
    %v1111 = vunpack.c.l.b16 %v1047
    %v1112 = vunpack.c.l.b16 %v1048
    %v1113 = vunpack.c.l.b16 %v1049
    %v1114 = vunpack.c.l.b16 %v1050
    %v1115 = vpack.c.b16 %v1084, %v1083
    %v1116 = vpack.c.b16 %v1086, %v1085
    %v1117 = vpack.c.b16 %v1088, %v1087
    %v1118 = vpack.c.b16 %v1090, %v1089
    %v1119 = vpack.c.b16 %v1092, %v1091
    %v1120 = vpack.c.b16 %v1094, %v1093
    %v1121 = vpack.c.b16 %v1096, %v1095
    %v1122 = vpack.c.b16 %v1098, %v1097
    %v1123 = vpack.c.b16 %v1100, %v1099
    %v1124 = vpack.c.b16 %v1102, %v1101
    %v1125 = vpack.c.b16 %v1104, %v1103
    %v1126 = vpack.c.b16 %v1106, %v1105
    %v1127 = vpack.c.b16 %v1108, %v1107
    %v1128 = vpack.c.b16 %v1110, %v1109
    %v1129 = vpack.c.b16 %v1112, %v1111
    %v1130 = vpack.c.b16 %v1114, %v1113
    %1147 = vmatprep.subr.bf16.mxu0 0
    %1148 = vmatpush1.bf16.msra.mxu0 %v1122
    %1149 = vmatprep.subr.bf16.mxu0 0
    %1150 = vmatpush1.bf16.msra.mxu0 %v1121
    %1151 = vmatprep.subr.bf16.mxu0 0
    %1152 = vmatpush1.bf16.msra.mxu0 %v1120
    %1153 = vmatprep.subr.bf16.mxu0 0
    %1154 = vmatpush1.bf16.msra.mxu0 %v1119
    %1155 = vmatprep.subr.bf16.mxu0 0
    %1156 = vmatpush1.bf16.msra.mxu0 %v1118
    %1157 = vmatprep.subr.bf16.mxu0 0
    %1158 = vmatpush1.bf16.msra.mxu0 %v1117
    %1159 = vmatprep.subr.bf16.mxu0 0
    %1160 = vmatpush1.bf16.msra.mxu0 %v1116
    %1161 = vmatprep.subr.bf16.mxu0 0
    %1162 = vmatpush1.bf16.msra.mxu0 %v1115
    %1163 = vmatprep.subr.bf16.mxu0 0
    %1164 = vmatpush2.bf16.msra.mxu0 %v1130
    %1165 = vmatprep.subr.bf16.mxu0 0
    %1166 = vmatpush2.bf16.msra.mxu0 %v1129
    %1167 = vmatprep.subr.bf16.mxu0 0
    %1168 = vmatpush2.bf16.msra.mxu0 %v1128
    %1169 = vmatprep.subr.bf16.mxu0 0
    %1170 = vmatpush2.bf16.msra.mxu0 %v1127
    %1171 = vmatprep.subr.bf16.mxu0 0
    %1172 = vmatpush2.bf16.msra.mxu0 %v1126
    %1173 = vmatprep.subr.bf16.mxu0 0
    %1174 = vmatpush2.bf16.msra.mxu0 %v1125
    %1175 = vmatprep.subr.bf16.mxu0 0
    %1176 = vmatpush2.bf16.msra.mxu0 %v1124
    %1177 = vmatprep.subr.bf16.mxu0 0
    %1178 = vmatpush2.bf16.msra.mxu0 %v1123
    %1179 = vmatprep.mubr.bf16.mxu0 %v1018
    %1180 = vmatmul.mubr.bf16.gmra.mxu0 %v1017
    %v1181 = vpop.f32.mrf.mxu0
    %v1182 = vadd.f32 0.0, %v1181
    %v1183 = vpop.f32.mrf.mxu0
    %v1184 = vpop.f32.mrf.mxu0
    %v1185 = vpop.f32.mrf.mxu0
    %1186 = vdwg.mxu0
    %v1187 = vadd.f32 %v980, %v1182
    %v1188 = vstv %s102
    %v1189 = vmul.f32 %v1188, %v151
    %v1190 = vstv %s103
    %v1191 = vmul.f32 %v1190, %v152
    %v1192 = vadd.f32 %v1189, %v1191
    %v1193 = vstv %s104
    %v1194 = vmul.f32 %v1193, %v153
    %v1195 = vadd.f32 %v1192, %v1194
    %v1196 = vstv %s140
    %v1197 = vadd.f32 %v1195, %v1196
    %v1198 = vmax.f32 %v1197, 0.0
    %v1199 = vstv %s126
    %v1200 = vmul.f32 %v1199, %v151
    %v1201 = vstv %s127
    %v1202 = vmul.f32 %v1201, %v152
    %v1203 = vadd.f32 %v1200, %v1202
    %v1204 = vstv %s128
    %v1205 = vmul.f32 %v1204, %v153
    %v1206 = vadd.f32 %v1203, %v1205
    %v1207 = vstv %s148
    %v1208 = vadd.f32 %v1206, %v1207
    %v1209 = vmax.f32 %v1208, 0.0
    %v1210 = vsub.f32 %v1198, %v1209
    %v1211 = vmul.f32 %v177, %v1210
    %v1212 = vadd.f32 %v1209, %v1211
    %v1215 = vunpack.c.l.s4 1983009808
    %v1216 = vunpack.c.0.s8 %v1215
    %v1217 = vlaneseq
    %v1218 = vshrl.u32 %v1217, 7
    %v1219 = vsub.s32 %v1216, %v1218
    %v1220 = vrot.slane %v1212, %v1219
    %v1221 = vcombine.high %v1220, %v1220
    %v1224 = vpack.c.bf16 %v1220, %v1220
    %v1225 = vpack.c.bf16 %v1221, %v1221
    %v1226 = vld [vmem:[%s6 + $0x280] sm:$0xf]
    %v1227 = vld [vmem:[%s6 + $0x284] sm:$0xf]
    %v1228 = vld [vmem:[%s6 + $0x288] sm:$0xf]
    %v1229 = vld [vmem:[%s6 + $0x28c] sm:$0xf]
    %v1230 = vld [vmem:[%s6 + $0x290] sm:$0xf]
    %v1231 = vld [vmem:[%s6 + $0x294] sm:$0xf]
    %v1232 = vld [vmem:[%s6 + $0x298] sm:$0xf]
    %v1233 = vld [vmem:[%s6 + $0x29c] sm:$0xf]
    %v1234 = vld [vmem:[%s6 + $0x2a0] sm:$0xf]
    %v1235 = vld [vmem:[%s6 + $0x2a4] sm:$0xf]
    %v1236 = vld [vmem:[%s6 + $0x2a8] sm:$0xf]
    %v1237 = vld [vmem:[%s6 + $0x2ac] sm:$0xf]
    %v1238 = vld [vmem:[%s6 + $0x2b0] sm:$0xf]
    %v1239 = vld [vmem:[%s6 + $0x2b4] sm:$0xf]
    %v1240 = vld [vmem:[%s6 + $0x2b8] sm:$0xf]
    %v1241 = vld [vmem:[%s6 + $0x2bc] sm:$0xf]
    %v1242 = vld [vmem:[%s6 + $0x2c0] sm:$0xf]
    %v1243 = vld [vmem:[%s6 + $0x2c4] sm:$0xf]
    %v1244 = vld [vmem:[%s6 + $0x2c8] sm:$0xf]
    %v1245 = vld [vmem:[%s6 + $0x2cc] sm:$0xf]
    %v1246 = vld [vmem:[%s6 + $0x2d0] sm:$0xf]
    %v1247 = vld [vmem:[%s6 + $0x2d4] sm:$0xf]
    %v1248 = vld [vmem:[%s6 + $0x2d8] sm:$0xf]
    %v1249 = vld [vmem:[%s6 + $0x2dc] sm:$0xf]
    %v1250 = vld [vmem:[%s6 + $0x2e0] sm:$0xf]
    %v1251 = vld [vmem:[%s6 + $0x2e4] sm:$0xf]
    %v1252 = vld [vmem:[%s6 + $0x2e8] sm:$0xf]
    %v1253 = vld [vmem:[%s6 + $0x2ec] sm:$0xf]
    %v1254 = vld [vmem:[%s6 + $0x2f0] sm:$0xf]
    %v1255 = vld [vmem:[%s6 + $0x2f4] sm:$0xf]
    %v1256 = vld [vmem:[%s6 + $0x2f8] sm:$0xf]
    %v1257 = vld [vmem:[%s6 + $0x2fc] sm:$0xf]
    %v1290 = vunpack.c.l.b16 %v1226
    %v1291 = vunpack.c.l.b16 %v1227
    %v1292 = vunpack.c.l.b16 %v1228
    %v1293 = vunpack.c.l.b16 %v1229
    %v1294 = vunpack.c.l.b16 %v1230
    %v1295 = vunpack.c.l.b16 %v1231
    %v1296 = vunpack.c.l.b16 %v1232
    %v1297 = vunpack.c.l.b16 %v1233
    %v1298 = vunpack.c.l.b16 %v1234
    %v1299 = vunpack.c.l.b16 %v1235
    %v1300 = vunpack.c.l.b16 %v1236
    %v1301 = vunpack.c.l.b16 %v1237
    %v1302 = vunpack.c.l.b16 %v1238
    %v1303 = vunpack.c.l.b16 %v1239
    %v1304 = vunpack.c.l.b16 %v1240
    %v1305 = vunpack.c.l.b16 %v1241
    %v1306 = vunpack.c.l.b16 %v1242
    %v1307 = vunpack.c.l.b16 %v1243
    %v1308 = vunpack.c.l.b16 %v1244
    %v1309 = vunpack.c.l.b16 %v1245
    %v1310 = vunpack.c.l.b16 %v1246
    %v1311 = vunpack.c.l.b16 %v1247
    %v1312 = vunpack.c.l.b16 %v1248
    %v1313 = vunpack.c.l.b16 %v1249
    %v1314 = vunpack.c.l.b16 %v1250
    %v1315 = vunpack.c.l.b16 %v1251
    %v1316 = vunpack.c.l.b16 %v1252
    %v1317 = vunpack.c.l.b16 %v1253
    %v1318 = vunpack.c.l.b16 %v1254
    %v1319 = vunpack.c.l.b16 %v1255
    %v1320 = vunpack.c.l.b16 %v1256
    %v1321 = vunpack.c.l.b16 %v1257
    %v1322 = vpack.c.b16 %v1291, %v1290
    %v1323 = vpack.c.b16 %v1293, %v1292
    %v1324 = vpack.c.b16 %v1295, %v1294
    %v1325 = vpack.c.b16 %v1297, %v1296
    %v1326 = vpack.c.b16 %v1299, %v1298
    %v1327 = vpack.c.b16 %v1301, %v1300
    %v1328 = vpack.c.b16 %v1303, %v1302
    %v1329 = vpack.c.b16 %v1305, %v1304
    %v1330 = vpack.c.b16 %v1307, %v1306
    %v1331 = vpack.c.b16 %v1309, %v1308
    %v1332 = vpack.c.b16 %v1311, %v1310
    %v1333 = vpack.c.b16 %v1313, %v1312
    %v1334 = vpack.c.b16 %v1315, %v1314
    %v1335 = vpack.c.b16 %v1317, %v1316
    %v1336 = vpack.c.b16 %v1319, %v1318
    %v1337 = vpack.c.b16 %v1321, %v1320
    %1354 = vmatprep.subr.bf16.mxu0 0
    %1355 = vmatpush1.bf16.msra.mxu0 %v1329
    %1356 = vmatprep.subr.bf16.mxu0 0
    %1357 = vmatpush1.bf16.msra.mxu0 %v1328
    %1358 = vmatprep.subr.bf16.mxu0 0
    %1359 = vmatpush1.bf16.msra.mxu0 %v1327
    %1360 = vmatprep.subr.bf16.mxu0 0
    %1361 = vmatpush1.bf16.msra.mxu0 %v1326
    %1362 = vmatprep.subr.bf16.mxu0 0
    %1363 = vmatpush1.bf16.msra.mxu0 %v1325
    %1364 = vmatprep.subr.bf16.mxu0 0
    %1365 = vmatpush1.bf16.msra.mxu0 %v1324
    %1366 = vmatprep.subr.bf16.mxu0 0
    %1367 = vmatpush1.bf16.msra.mxu0 %v1323
    %1368 = vmatprep.subr.bf16.mxu0 0
    %1369 = vmatpush1.bf16.msra.mxu0 %v1322
    %1370 = vmatprep.subr.bf16.mxu0 0
    %1371 = vmatpush2.bf16.msra.mxu0 %v1337
    %1372 = vmatprep.subr.bf16.mxu0 0
    %1373 = vmatpush2.bf16.msra.mxu0 %v1336
    %1374 = vmatprep.subr.bf16.mxu0 0
    %1375 = vmatpush2.bf16.msra.mxu0 %v1335
    %1376 = vmatprep.subr.bf16.mxu0 0
    %1377 = vmatpush2.bf16.msra.mxu0 %v1334
    %1378 = vmatprep.subr.bf16.mxu0 0
    %1379 = vmatpush2.bf16.msra.mxu0 %v1333
    %1380 = vmatprep.subr.bf16.mxu0 0
    %1381 = vmatpush2.bf16.msra.mxu0 %v1332
    %1382 = vmatprep.subr.bf16.mxu0 0
    %1383 = vmatpush2.bf16.msra.mxu0 %v1331
    %1384 = vmatprep.subr.bf16.mxu0 0
    %1385 = vmatpush2.bf16.msra.mxu0 %v1330
    %1386 = vmatprep.mubr.bf16.mxu0 %v1225
    %1387 = vmatmul.mubr.bf16.gmra.mxu0 %v1224
    %v1388 = vpop.f32.mrf.mxu0
    %v1389 = vadd.f32 0.0, %v1388
    %v1390 = vpop.f32.mrf.mxu0
    %v1391 = vpop.f32.mrf.mxu0
    %v1392 = vpop.f32.mrf.mxu0
    %1393 = vdwg.mxu0
    %v1394 = vadd.f32 %v1187, %v1389
    %v1395 = vstv %s105
    %v1396 = vmul.f32 %v1395, %v151
    %v1397 = vstv %s106
    %v1398 = vmul.f32 %v1397, %v152
    %v1399 = vadd.f32 %v1396, %v1398
    %v1400 = vstv %s107
    %v1401 = vmul.f32 %v1400, %v153
    %v1402 = vadd.f32 %v1399, %v1401
    %v1403 = vstv %s141
    %v1404 = vadd.f32 %v1402, %v1403
    %v1405 = vmax.f32 %v1404, 0.0
    %v1406 = vstv %s129
    %v1407 = vmul.f32 %v1406, %v151
    %v1408 = vstv %s130
    %v1409 = vmul.f32 %v1408, %v152
    %v1410 = vadd.f32 %v1407, %v1409
    %v1411 = vstv %s131
    %v1412 = vmul.f32 %v1411, %v153
    %v1413 = vadd.f32 %v1410, %v1412
    %v1414 = vstv %s149
    %v1415 = vadd.f32 %v1413, %v1414
    %v1416 = vmax.f32 %v1415, 0.0
    %v1417 = vsub.f32 %v1405, %v1416
    %v1418 = vmul.f32 %v177, %v1417
    %v1419 = vadd.f32 %v1416, %v1418
    %v1422 = vunpack.c.l.s4 1983009808
    %v1423 = vunpack.c.0.s8 %v1422
    %v1424 = vlaneseq
    %v1425 = vshrl.u32 %v1424, 7
    %v1426 = vsub.s32 %v1423, %v1425
    %v1427 = vrot.slane %v1419, %v1426
    %v1428 = vcombine.high %v1427, %v1427
    %v1431 = vpack.c.bf16 %v1427, %v1427
    %v1432 = vpack.c.bf16 %v1428, %v1428
    %v1433 = vld [vmem:[%s6 + $0x300] sm:$0xf]
    %v1434 = vld [vmem:[%s6 + $0x304] sm:$0xf]
    %v1435 = vld [vmem:[%s6 + $0x308] sm:$0xf]
    %v1436 = vld [vmem:[%s6 + $0x30c] sm:$0xf]
    %v1437 = vld [vmem:[%s6 + $0x310] sm:$0xf]
    %v1438 = vld [vmem:[%s6 + $0x314] sm:$0xf]
    %v1439 = vld [vmem:[%s6 + $0x318] sm:$0xf]
    %v1440 = vld [vmem:[%s6 + $0x31c] sm:$0xf]
    %v1441 = vld [vmem:[%s6 + $0x320] sm:$0xf]
    %v1442 = vld [vmem:[%s6 + $0x324] sm:$0xf]
    %v1443 = vld [vmem:[%s6 + $0x328] sm:$0xf]
    %v1444 = vld [vmem:[%s6 + $0x32c] sm:$0xf]
    %v1445 = vld [vmem:[%s6 + $0x330] sm:$0xf]
    %v1446 = vld [vmem:[%s6 + $0x334] sm:$0xf]
    %v1447 = vld [vmem:[%s6 + $0x338] sm:$0xf]
    %v1448 = vld [vmem:[%s6 + $0x33c] sm:$0xf]
    %v1449 = vld [vmem:[%s6 + $0x340] sm:$0xf]
    %v1450 = vld [vmem:[%s6 + $0x344] sm:$0xf]
    %v1451 = vld [vmem:[%s6 + $0x348] sm:$0xf]
    %v1452 = vld [vmem:[%s6 + $0x34c] sm:$0xf]
    %v1453 = vld [vmem:[%s6 + $0x350] sm:$0xf]
    %v1454 = vld [vmem:[%s6 + $0x354] sm:$0xf]
    %v1455 = vld [vmem:[%s6 + $0x358] sm:$0xf]
    %v1456 = vld [vmem:[%s6 + $0x35c] sm:$0xf]
    %v1457 = vld [vmem:[%s6 + $0x360] sm:$0xf]
    %v1458 = vld [vmem:[%s6 + $0x364] sm:$0xf]
    %v1459 = vld [vmem:[%s6 + $0x368] sm:$0xf]
    %v1460 = vld [vmem:[%s6 + $0x36c] sm:$0xf]
    %v1461 = vld [vmem:[%s6 + $0x370] sm:$0xf]
    %v1462 = vld [vmem:[%s6 + $0x374] sm:$0xf]
    %v1463 = vld [vmem:[%s6 + $0x378] sm:$0xf]
    %v1464 = vld [vmem:[%s6 + $0x37c] sm:$0xf]
    %v1497 = vunpack.c.l.b16 %v1433
    %v1498 = vunpack.c.l.b16 %v1434
    %v1499 = vunpack.c.l.b16 %v1435
    %v1500 = vunpack.c.l.b16 %v1436
    %v1501 = vunpack.c.l.b16 %v1437
    %v1502 = vunpack.c.l.b16 %v1438
    %v1503 = vunpack.c.l.b16 %v1439
    %v1504 = vunpack.c.l.b16 %v1440
    %v1505 = vunpack.c.l.b16 %v1441
    %v1506 = vunpack.c.l.b16 %v1442
    %v1507 = vunpack.c.l.b16 %v1443
    %v1508 = vunpack.c.l.b16 %v1444
    %v1509 = vunpack.c.l.b16 %v1445
    %v1510 = vunpack.c.l.b16 %v1446
    %v1511 = vunpack.c.l.b16 %v1447
    %v1512 = vunpack.c.l.b16 %v1448
    %v1513 = vunpack.c.l.b16 %v1449
    %v1514 = vunpack.c.l.b16 %v1450
    %v1515 = vunpack.c.l.b16 %v1451
    %v1516 = vunpack.c.l.b16 %v1452
    %v1517 = vunpack.c.l.b16 %v1453
    %v1518 = vunpack.c.l.b16 %v1454
    %v1519 = vunpack.c.l.b16 %v1455
    %v1520 = vunpack.c.l.b16 %v1456
    %v1521 = vunpack.c.l.b16 %v1457
    %v1522 = vunpack.c.l.b16 %v1458
    %v1523 = vunpack.c.l.b16 %v1459
    %v1524 = vunpack.c.l.b16 %v1460
    %v1525 = vunpack.c.l.b16 %v1461
    %v1526 = vunpack.c.l.b16 %v1462
    %v1527 = vunpack.c.l.b16 %v1463
    %v1528 = vunpack.c.l.b16 %v1464
    %v1529 = vpack.c.b16 %v1498, %v1497
    %v1530 = vpack.c.b16 %v1500, %v1499
    %v1531 = vpack.c.b16 %v1502, %v1501
    %v1532 = vpack.c.b16 %v1504, %v1503
    %v1533 = vpack.c.b16 %v1506, %v1505
    %v1534 = vpack.c.b16 %v1508, %v1507
    %v1535 = vpack.c.b16 %v1510, %v1509
    %v1536 = vpack.c.b16 %v1512, %v1511
    %v1537 = vpack.c.b16 %v1514, %v1513
    %v1538 = vpack.c.b16 %v1516, %v1515
    %v1539 = vpack.c.b16 %v1518, %v1517
    %v1540 = vpack.c.b16 %v1520, %v1519
    %v1541 = vpack.c.b16 %v1522, %v1521
    %v1542 = vpack.c.b16 %v1524, %v1523
    %v1543 = vpack.c.b16 %v1526, %v1525
    %v1544 = vpack.c.b16 %v1528, %v1527
    %1561 = vmatprep.subr.bf16.mxu0 0
    %1562 = vmatpush1.bf16.msra.mxu0 %v1536
    %1563 = vmatprep.subr.bf16.mxu0 0
    %1564 = vmatpush1.bf16.msra.mxu0 %v1535
    %1565 = vmatprep.subr.bf16.mxu0 0
    %1566 = vmatpush1.bf16.msra.mxu0 %v1534
    %1567 = vmatprep.subr.bf16.mxu0 0
    %1568 = vmatpush1.bf16.msra.mxu0 %v1533
    %1569 = vmatprep.subr.bf16.mxu0 0
    %1570 = vmatpush1.bf16.msra.mxu0 %v1532
    %1571 = vmatprep.subr.bf16.mxu0 0
    %1572 = vmatpush1.bf16.msra.mxu0 %v1531
    %1573 = vmatprep.subr.bf16.mxu0 0
    %1574 = vmatpush1.bf16.msra.mxu0 %v1530
    %1575 = vmatprep.subr.bf16.mxu0 0
    %1576 = vmatpush1.bf16.msra.mxu0 %v1529
    %1577 = vmatprep.subr.bf16.mxu0 0
    %1578 = vmatpush2.bf16.msra.mxu0 %v1544
    %1579 = vmatprep.subr.bf16.mxu0 0
    %1580 = vmatpush2.bf16.msra.mxu0 %v1543
    %1581 = vmatprep.subr.bf16.mxu0 0
    %1582 = vmatpush2.bf16.msra.mxu0 %v1542
    %1583 = vmatprep.subr.bf16.mxu0 0
    %1584 = vmatpush2.bf16.msra.mxu0 %v1541
    %1585 = vmatprep.subr.bf16.mxu0 0
    %1586 = vmatpush2.bf16.msra.mxu0 %v1540
    %1587 = vmatprep.subr.bf16.mxu0 0
    %1588 = vmatpush2.bf16.msra.mxu0 %v1539
    %1589 = vmatprep.subr.bf16.mxu0 0
    %1590 = vmatpush2.bf16.msra.mxu0 %v1538
    %1591 = vmatprep.subr.bf16.mxu0 0
    %1592 = vmatpush2.bf16.msra.mxu0 %v1537
    %1593 = vmatprep.mubr.bf16.mxu0 %v1432
    %1594 = vmatmul.mubr.bf16.gmra.mxu0 %v1431
    %v1595 = vpop.f32.mrf.mxu0
    %v1596 = vadd.f32 0.0, %v1595
    %v1597 = vpop.f32.mrf.mxu0
    %v1598 = vpop.f32.mrf.mxu0
    %v1599 = vpop.f32.mrf.mxu0
    %1600 = vdwg.mxu0
    %v1601 = vadd.f32 %v1394, %v1596
    %v1602 = vstv %s108
    %v1603 = vmul.f32 %v1602, %v151
    %v1604 = vstv %s109
    %v1605 = vmul.f32 %v1604, %v152
    %v1606 = vadd.f32 %v1603, %v1605
    %v1607 = vstv %s110
    %v1608 = vmul.f32 %v1607, %v153
    %v1609 = vadd.f32 %v1606, %v1608
    %v1610 = vstv %s142
    %v1611 = vadd.f32 %v1609, %v1610
    %v1612 = vmax.f32 %v1611, 0.0
    %v1613 = vstv %s132
    %v1614 = vmul.f32 %v1613, %v151
    %v1615 = vstv %s133
    %v1616 = vmul.f32 %v1615, %v152
    %v1617 = vadd.f32 %v1614, %v1616
    %v1618 = vstv %s134
    %v1619 = vmul.f32 %v1618, %v153
    %v1620 = vadd.f32 %v1617, %v1619
    %v1621 = vstv %s150
    %v1622 = vadd.f32 %v1620, %v1621
    %v1623 = vmax.f32 %v1622, 0.0
    %v1624 = vsub.f32 %v1612, %v1623
    %v1625 = vmul.f32 %v177, %v1624
    %v1626 = vadd.f32 %v1623, %v1625
    %v1629 = vunpack.c.l.s4 1983009808
    %v1630 = vunpack.c.0.s8 %v1629
    %v1631 = vlaneseq
    %v1632 = vshrl.u32 %v1631, 7
    %v1633 = vsub.s32 %v1630, %v1632
    %v1634 = vrot.slane %v1626, %v1633
    %v1635 = vcombine.high %v1634, %v1634
    %v1638 = vpack.c.bf16 %v1634, %v1634
    %v1639 = vpack.c.bf16 %v1635, %v1635
    %v1640 = vld [vmem:[%s6 + $0x380] sm:$0xf]
    %v1641 = vld [vmem:[%s6 + $0x384] sm:$0xf]
    %v1642 = vld [vmem:[%s6 + $0x388] sm:$0xf]
    %v1643 = vld [vmem:[%s6 + $0x38c] sm:$0xf]
    %v1644 = vld [vmem:[%s6 + $0x390] sm:$0xf]
    %v1645 = vld [vmem:[%s6 + $0x394] sm:$0xf]
    %v1646 = vld [vmem:[%s6 + $0x398] sm:$0xf]
    %v1647 = vld [vmem:[%s6 + $0x39c] sm:$0xf]
    %v1648 = vld [vmem:[%s6 + $0x3a0] sm:$0xf]
    %v1649 = vld [vmem:[%s6 + $0x3a4] sm:$0xf]
    %v1650 = vld [vmem:[%s6 + $0x3a8] sm:$0xf]
    %v1651 = vld [vmem:[%s6 + $0x3ac] sm:$0xf]
    %v1652 = vld [vmem:[%s6 + $0x3b0] sm:$0xf]
    %v1653 = vld [vmem:[%s6 + $0x3b4] sm:$0xf]
    %v1654 = vld [vmem:[%s6 + $0x3b8] sm:$0xf]
    %v1655 = vld [vmem:[%s6 + $0x3bc] sm:$0xf]
    %v1656 = vld [vmem:[%s6 + $0x3c0] sm:$0xf]
    %v1657 = vld [vmem:[%s6 + $0x3c4] sm:$0xf]
    %v1658 = vld [vmem:[%s6 + $0x3c8] sm:$0xf]
    %v1659 = vld [vmem:[%s6 + $0x3cc] sm:$0xf]
    %v1660 = vld [vmem:[%s6 + $0x3d0] sm:$0xf]
    %v1661 = vld [vmem:[%s6 + $0x3d4] sm:$0xf]
    %v1662 = vld [vmem:[%s6 + $0x3d8] sm:$0xf]
    %v1663 = vld [vmem:[%s6 + $0x3dc] sm:$0xf]
    %v1664 = vld [vmem:[%s6 + $0x3e0] sm:$0xf]
    %v1665 = vld [vmem:[%s6 + $0x3e4] sm:$0xf]
    %v1666 = vld [vmem:[%s6 + $0x3e8] sm:$0xf]
    %v1667 = vld [vmem:[%s6 + $0x3ec] sm:$0xf]
    %v1668 = vld [vmem:[%s6 + $0x3f0] sm:$0xf]
    %v1669 = vld [vmem:[%s6 + $0x3f4] sm:$0xf]
    %v1670 = vld [vmem:[%s6 + $0x3f8] sm:$0xf]
    %v1671 = vld [vmem:[%s6 + $0x3fc] sm:$0xf]
    %v1704 = vunpack.c.l.b16 %v1640
    %v1705 = vunpack.c.l.b16 %v1641
    %v1706 = vunpack.c.l.b16 %v1642
    %v1707 = vunpack.c.l.b16 %v1643
    %v1708 = vunpack.c.l.b16 %v1644
    %v1709 = vunpack.c.l.b16 %v1645
    %v1710 = vunpack.c.l.b16 %v1646
    %v1711 = vunpack.c.l.b16 %v1647
    %v1712 = vunpack.c.l.b16 %v1648
    %v1713 = vunpack.c.l.b16 %v1649
    %v1714 = vunpack.c.l.b16 %v1650
    %v1715 = vunpack.c.l.b16 %v1651
    %v1716 = vunpack.c.l.b16 %v1652
    %v1717 = vunpack.c.l.b16 %v1653
    %v1718 = vunpack.c.l.b16 %v1654
    %v1719 = vunpack.c.l.b16 %v1655
    %v1720 = vunpack.c.l.b16 %v1656
    %v1721 = vunpack.c.l.b16 %v1657
    %v1722 = vunpack.c.l.b16 %v1658
    %v1723 = vunpack.c.l.b16 %v1659
    %v1724 = vunpack.c.l.b16 %v1660
    %v1725 = vunpack.c.l.b16 %v1661
    %v1726 = vunpack.c.l.b16 %v1662
    %v1727 = vunpack.c.l.b16 %v1663
    %v1728 = vunpack.c.l.b16 %v1664
    %v1729 = vunpack.c.l.b16 %v1665
    %v1730 = vunpack.c.l.b16 %v1666
    %v1731 = vunpack.c.l.b16 %v1667
    %v1732 = vunpack.c.l.b16 %v1668
    %v1733 = vunpack.c.l.b16 %v1669
    %v1734 = vunpack.c.l.b16 %v1670
    %v1735 = vunpack.c.l.b16 %v1671
    %v1736 = vpack.c.b16 %v1705, %v1704
    %v1737 = vpack.c.b16 %v1707, %v1706
    %v1738 = vpack.c.b16 %v1709, %v1708
    %v1739 = vpack.c.b16 %v1711, %v1710
    %v1740 = vpack.c.b16 %v1713, %v1712
    %v1741 = vpack.c.b16 %v1715, %v1714
    %v1742 = vpack.c.b16 %v1717, %v1716
    %v1743 = vpack.c.b16 %v1719, %v1718
    %v1744 = vpack.c.b16 %v1721, %v1720
    %v1745 = vpack.c.b16 %v1723, %v1722
    %v1746 = vpack.c.b16 %v1725, %v1724
    %v1747 = vpack.c.b16 %v1727, %v1726
    %v1748 = vpack.c.b16 %v1729, %v1728
    %v1749 = vpack.c.b16 %v1731, %v1730
    %v1750 = vpack.c.b16 %v1733, %v1732
    %v1751 = vpack.c.b16 %v1735, %v1734
    %1768 = vmatprep.subr.bf16.mxu0 0
    %1769 = vmatpush1.bf16.msra.mxu0 %v1743
    %1770 = vmatprep.subr.bf16.mxu0 0
    %1771 = vmatpush1.bf16.msra.mxu0 %v1742
    %1772 = vmatprep.subr.bf16.mxu0 0
    %1773 = vmatpush1.bf16.msra.mxu0 %v1741
    %1774 = vmatprep.subr.bf16.mxu0 0
    %1775 = vmatpush1.bf16.msra.mxu0 %v1740
    %1776 = vmatprep.subr.bf16.mxu0 0
    %1777 = vmatpush1.bf16.msra.mxu0 %v1739
    %1778 = vmatprep.subr.bf16.mxu0 0
    %1779 = vmatpush1.bf16.msra.mxu0 %v1738
    %1780 = vmatprep.subr.bf16.mxu0 0
    %1781 = vmatpush1.bf16.msra.mxu0 %v1737
    %1782 = vmatprep.subr.bf16.mxu0 0
    %1783 = vmatpush1.bf16.msra.mxu0 %v1736
    %1784 = vmatprep.subr.bf16.mxu0 0
    %1785 = vmatpush2.bf16.msra.mxu0 %v1751
    %1786 = vmatprep.subr.bf16.mxu0 0
    %1787 = vmatpush2.bf16.msra.mxu0 %v1750
    %1788 = vmatprep.subr.bf16.mxu0 0
    %1789 = vmatpush2.bf16.msra.mxu0 %v1749
    %1790 = vmatprep.subr.bf16.mxu0 0
    %1791 = vmatpush2.bf16.msra.mxu0 %v1748
    %1792 = vmatprep.subr.bf16.mxu0 0
    %1793 = vmatpush2.bf16.msra.mxu0 %v1747
    %1794 = vmatprep.subr.bf16.mxu0 0
    %1795 = vmatpush2.bf16.msra.mxu0 %v1746
    %1796 = vmatprep.subr.bf16.mxu0 0
    %1797 = vmatpush2.bf16.msra.mxu0 %v1745
    %1798 = vmatprep.subr.bf16.mxu0 0
    %1799 = vmatpush2.bf16.msra.mxu0 %v1744
    %1800 = vmatprep.mubr.bf16.mxu0 %v1639
    %1801 = vmatmul.mubr.bf16.gmra.mxu0 %v1638
    %v1802 = vpop.f32.mrf.mxu0
    %v1803 = vadd.f32 0.0, %v1802
    %v1804 = vpop.f32.mrf.mxu0
    %v1805 = vpop.f32.mrf.mxu0
    %v1806 = vpop.f32.mrf.mxu0
    %1807 = vdwg.mxu0
    %v1808 = vadd.f32 %v1601, %v1803
    %v1809 = vld [vmem:[%s5 + $0xc] sm:$0xf]
    %v1810 = vld [vmem:[%s5 + $0x10] sm:$0xf]
    %v1811 = vld [vmem:[%s5 + $0x14] sm:$0xf]
    %v1812 = vmul.f32 %v154, %v1809
    %v1813 = vmul.f32 %v156, %v1810
    %v1814 = vadd.f32 %v1812, %v1813
    %v1815 = vmul.f32 %v159, %v1811
    %v1816 = vadd.f32 %v1814, %v1815
    %v1817 = vadd.f32 %v1816, %v162
    %v1818 = vmax.f32 %v1817, 0.0
    %v1819 = vmul.f32 %v165, %v1809
    %v1820 = vmul.f32 %v167, %v1810
    %v1821 = vadd.f32 %v1819, %v1820
    %v1822 = vmul.f32 %v170, %v1811
    %v1823 = vadd.f32 %v1821, %v1822
    %v1824 = vadd.f32 %v1823, %v173
    %v1825 = vmax.f32 %v1824, 0.0
    %v1826 = vsub.f32 %v1818, %v1825
    %v1827 = vmul.f32 %v177, %v1826
    %v1828 = vadd.f32 %v1825, %v1827
    %v1831 = vunpack.c.l.s4 1983009808
    %v1832 = vunpack.c.0.s8 %v1831
    %v1833 = vlaneseq
    %v1834 = vshrl.u32 %v1833, 7
    %v1835 = vsub.s32 %v1832, %v1834
    %v1836 = vrot.slane %v1828, %v1835
    %v1837 = vcombine.high %v1836, %v1836
    %v1840 = vpack.c.bf16 %v1836, %v1836
    %v1841 = vpack.c.bf16 %v1837, %v1837
    %v1842 = vld [vmem:[%s6 + $0x400] sm:$0xf]
    %v1843 = vld [vmem:[%s6 + $0x404] sm:$0xf]
    %v1844 = vld [vmem:[%s6 + $0x408] sm:$0xf]
    %v1845 = vld [vmem:[%s6 + $0x40c] sm:$0xf]
    %v1846 = vld [vmem:[%s6 + $0x410] sm:$0xf]
    %v1847 = vld [vmem:[%s6 + $0x414] sm:$0xf]
    %v1848 = vld [vmem:[%s6 + $0x418] sm:$0xf]
    %v1849 = vld [vmem:[%s6 + $0x41c] sm:$0xf]
    %v1850 = vld [vmem:[%s6 + $0x420] sm:$0xf]
    %v1851 = vld [vmem:[%s6 + $0x424] sm:$0xf]
    %v1852 = vld [vmem:[%s6 + $0x428] sm:$0xf]
    %v1853 = vld [vmem:[%s6 + $0x42c] sm:$0xf]
    %v1854 = vld [vmem:[%s6 + $0x430] sm:$0xf]
    %v1855 = vld [vmem:[%s6 + $0x434] sm:$0xf]
    %v1856 = vld [vmem:[%s6 + $0x438] sm:$0xf]
    %v1857 = vld [vmem:[%s6 + $0x43c] sm:$0xf]
    %v1858 = vld [vmem:[%s6 + $0x440] sm:$0xf]
    %v1859 = vld [vmem:[%s6 + $0x444] sm:$0xf]
    %v1860 = vld [vmem:[%s6 + $0x448] sm:$0xf]
    %v1861 = vld [vmem:[%s6 + $0x44c] sm:$0xf]
    %v1862 = vld [vmem:[%s6 + $0x450] sm:$0xf]
    %v1863 = vld [vmem:[%s6 + $0x454] sm:$0xf]
    %v1864 = vld [vmem:[%s6 + $0x458] sm:$0xf]
    %v1865 = vld [vmem:[%s6 + $0x45c] sm:$0xf]
    %v1866 = vld [vmem:[%s6 + $0x460] sm:$0xf]
    %v1867 = vld [vmem:[%s6 + $0x464] sm:$0xf]
    %v1868 = vld [vmem:[%s6 + $0x468] sm:$0xf]
    %v1869 = vld [vmem:[%s6 + $0x46c] sm:$0xf]
    %v1870 = vld [vmem:[%s6 + $0x470] sm:$0xf]
    %v1871 = vld [vmem:[%s6 + $0x474] sm:$0xf]
    %v1872 = vld [vmem:[%s6 + $0x478] sm:$0xf]
    %v1873 = vld [vmem:[%s6 + $0x47c] sm:$0xf]
    %v1906 = vunpack.c.l.b16 %v1842
    %v1907 = vunpack.c.l.b16 %v1843
    %v1908 = vunpack.c.l.b16 %v1844
    %v1909 = vunpack.c.l.b16 %v1845
    %v1910 = vunpack.c.l.b16 %v1846
    %v1911 = vunpack.c.l.b16 %v1847
    %v1912 = vunpack.c.l.b16 %v1848
    %v1913 = vunpack.c.l.b16 %v1849
    %v1914 = vunpack.c.l.b16 %v1850
    %v1915 = vunpack.c.l.b16 %v1851
    %v1916 = vunpack.c.l.b16 %v1852
    %v1917 = vunpack.c.l.b16 %v1853
    %v1918 = vunpack.c.l.b16 %v1854
    %v1919 = vunpack.c.l.b16 %v1855
    %v1920 = vunpack.c.l.b16 %v1856
    %v1921 = vunpack.c.l.b16 %v1857
    %v1922 = vunpack.c.l.b16 %v1858
    %v1923 = vunpack.c.l.b16 %v1859
    %v1924 = vunpack.c.l.b16 %v1860
    %v1925 = vunpack.c.l.b16 %v1861
    %v1926 = vunpack.c.l.b16 %v1862
    %v1927 = vunpack.c.l.b16 %v1863
    %v1928 = vunpack.c.l.b16 %v1864
    %v1929 = vunpack.c.l.b16 %v1865
    %v1930 = vunpack.c.l.b16 %v1866
    %v1931 = vunpack.c.l.b16 %v1867
    %v1932 = vunpack.c.l.b16 %v1868
    %v1933 = vunpack.c.l.b16 %v1869
    %v1934 = vunpack.c.l.b16 %v1870
    %v1935 = vunpack.c.l.b16 %v1871
    %v1936 = vunpack.c.l.b16 %v1872
    %v1937 = vunpack.c.l.b16 %v1873
    %v1938 = vpack.c.b16 %v1907, %v1906
    %v1939 = vpack.c.b16 %v1909, %v1908
    %v1940 = vpack.c.b16 %v1911, %v1910
    %v1941 = vpack.c.b16 %v1913, %v1912
    %v1942 = vpack.c.b16 %v1915, %v1914
    %v1943 = vpack.c.b16 %v1917, %v1916
    %v1944 = vpack.c.b16 %v1919, %v1918
    %v1945 = vpack.c.b16 %v1921, %v1920
    %v1946 = vpack.c.b16 %v1923, %v1922
    %v1947 = vpack.c.b16 %v1925, %v1924
    %v1948 = vpack.c.b16 %v1927, %v1926
    %v1949 = vpack.c.b16 %v1929, %v1928
    %v1950 = vpack.c.b16 %v1931, %v1930
    %v1951 = vpack.c.b16 %v1933, %v1932
    %v1952 = vpack.c.b16 %v1935, %v1934
    %v1953 = vpack.c.b16 %v1937, %v1936
    %1970 = vmatprep.subr.bf16.mxu0 0
    %1971 = vmatpush1.bf16.msra.mxu0 %v1945
    %1972 = vmatprep.subr.bf16.mxu0 0
    %1973 = vmatpush1.bf16.msra.mxu0 %v1944
    %1974 = vmatprep.subr.bf16.mxu0 0
    %1975 = vmatpush1.bf16.msra.mxu0 %v1943
    %1976 = vmatprep.subr.bf16.mxu0 0
    %1977 = vmatpush1.bf16.msra.mxu0 %v1942
    %1978 = vmatprep.subr.bf16.mxu0 0
    %1979 = vmatpush1.bf16.msra.mxu0 %v1941
    %1980 = vmatprep.subr.bf16.mxu0 0
    %1981 = vmatpush1.bf16.msra.mxu0 %v1940
    %1982 = vmatprep.subr.bf16.mxu0 0
    %1983 = vmatpush1.bf16.msra.mxu0 %v1939
    %1984 = vmatprep.subr.bf16.mxu0 0
    %1985 = vmatpush1.bf16.msra.mxu0 %v1938
    %1986 = vmatprep.subr.bf16.mxu0 0
    %1987 = vmatpush2.bf16.msra.mxu0 %v1953
    %1988 = vmatprep.subr.bf16.mxu0 0
    %1989 = vmatpush2.bf16.msra.mxu0 %v1952
    %1990 = vmatprep.subr.bf16.mxu0 0
    %1991 = vmatpush2.bf16.msra.mxu0 %v1951
    %1992 = vmatprep.subr.bf16.mxu0 0
    %1993 = vmatpush2.bf16.msra.mxu0 %v1950
    %1994 = vmatprep.subr.bf16.mxu0 0
    %1995 = vmatpush2.bf16.msra.mxu0 %v1949
    %1996 = vmatprep.subr.bf16.mxu0 0
    %1997 = vmatpush2.bf16.msra.mxu0 %v1948
    %1998 = vmatprep.subr.bf16.mxu0 0
    %1999 = vmatpush2.bf16.msra.mxu0 %v1947
    %2000 = vmatprep.subr.bf16.mxu0 0
    %2001 = vmatpush2.bf16.msra.mxu0 %v1946
    %2002 = vmatprep.mubr.bf16.mxu0 %v1841
    %2003 = vmatmul.mubr.bf16.gmra.mxu0 %v1840
    %v2004 = vpop.f32.mrf.mxu0
    %v2005 = vadd.f32 0.0, %v2004
    %v2006 = vpop.f32.mrf.mxu0
    %v2007 = vpop.f32.mrf.mxu0
    %v2008 = vpop.f32.mrf.mxu0
    %2009 = vdwg.mxu0
    %v2010 = vadd.f32 %v1808, %v2005
    %v2011 = vmul.f32 %v225, %v1809
    %v2012 = vmul.f32 %v227, %v1810
    %v2013 = vadd.f32 %v2011, %v2012
    %v2014 = vmul.f32 %v230, %v1811
    %v2015 = vadd.f32 %v2013, %v2014
    %v2016 = vadd.f32 %v2015, %v233
    %v2017 = vmax.f32 %v2016, 0.0
    %v2018 = vmul.f32 %v236, %v1809
    %v2019 = vmul.f32 %v238, %v1810
    %v2020 = vadd.f32 %v2018, %v2019
    %v2021 = vmul.f32 %v241, %v1811
    %v2022 = vadd.f32 %v2020, %v2021
    %v2023 = vadd.f32 %v2022, %v244
    %v2024 = vmax.f32 %v2023, 0.0
    %v2025 = vsub.f32 %v2017, %v2024
    %v2026 = vmul.f32 %v177, %v2025
    %v2027 = vadd.f32 %v2024, %v2026
    %v2030 = vunpack.c.l.s4 1983009808
    %v2031 = vunpack.c.0.s8 %v2030
    %v2032 = vlaneseq
    %v2033 = vshrl.u32 %v2032, 7
    %v2034 = vsub.s32 %v2031, %v2033
    %v2035 = vrot.slane %v2027, %v2034
    %v2036 = vcombine.high %v2035, %v2035
    %v2039 = vpack.c.bf16 %v2035, %v2035
    %v2040 = vpack.c.bf16 %v2036, %v2036
    %v2041 = vld [vmem:[%s6 + $0x480] sm:$0xf]
    %v2042 = vld [vmem:[%s6 + $0x484] sm:$0xf]
    %v2043 = vld [vmem:[%s6 + $0x488] sm:$0xf]
    %v2044 = vld [vmem:[%s6 + $0x48c] sm:$0xf]
    %v2045 = vld [vmem:[%s6 + $0x490] sm:$0xf]
    %v2046 = vld [vmem:[%s6 + $0x494] sm:$0xf]
    %v2047 = vld [vmem:[%s6 + $0x498] sm:$0xf]
    %v2048 = vld [vmem:[%s6 + $0x49c] sm:$0xf]
    %v2049 = vld [vmem:[%s6 + $0x4a0] sm:$0xf]
    %v2050 = vld [vmem:[%s6 + $0x4a4] sm:$0xf]
    %v2051 = vld [vmem:[%s6 + $0x4a8] sm:$0xf]
    %v2052 = vld [vmem:[%s6 + $0x4ac] sm:$0xf]
    %v2053 = vld [vmem:[%s6 + $0x4b0] sm:$0xf]
    %v2054 = vld [vmem:[%s6 + $0x4b4] sm:$0xf]
    %v2055 = vld [vmem:[%s6 + $0x4b8] sm:$0xf]
    %v2056 = vld [vmem:[%s6 + $0x4bc] sm:$0xf]
    %v2057 = vld [vmem:[%s6 + $0x4c0] sm:$0xf]
    %v2058 = vld [vmem:[%s6 + $0x4c4] sm:$0xf]
    %v2059 = vld [vmem:[%s6 + $0x4c8] sm:$0xf]
    %v2060 = vld [vmem:[%s6 + $0x4cc] sm:$0xf]
    %v2061 = vld [vmem:[%s6 + $0x4d0] sm:$0xf]
    %v2062 = vld [vmem:[%s6 + $0x4d4] sm:$0xf]
    %v2063 = vld [vmem:[%s6 + $0x4d8] sm:$0xf]
    %v2064 = vld [vmem:[%s6 + $0x4dc] sm:$0xf]
    %v2065 = vld [vmem:[%s6 + $0x4e0] sm:$0xf]
    %v2066 = vld [vmem:[%s6 + $0x4e4] sm:$0xf]
    %v2067 = vld [vmem:[%s6 + $0x4e8] sm:$0xf]
    %v2068 = vld [vmem:[%s6 + $0x4ec] sm:$0xf]
    %v2069 = vld [vmem:[%s6 + $0x4f0] sm:$0xf]
    %v2070 = vld [vmem:[%s6 + $0x4f4] sm:$0xf]
    %v2071 = vld [vmem:[%s6 + $0x4f8] sm:$0xf]
    %v2072 = vld [vmem:[%s6 + $0x4fc] sm:$0xf]
    %v2105 = vunpack.c.l.b16 %v2041
    %v2106 = vunpack.c.l.b16 %v2042
    %v2107 = vunpack.c.l.b16 %v2043
    %v2108 = vunpack.c.l.b16 %v2044
    %v2109 = vunpack.c.l.b16 %v2045
    %v2110 = vunpack.c.l.b16 %v2046
    %v2111 = vunpack.c.l.b16 %v2047
    %v2112 = vunpack.c.l.b16 %v2048
    %v2113 = vunpack.c.l.b16 %v2049
    %v2114 = vunpack.c.l.b16 %v2050
    %v2115 = vunpack.c.l.b16 %v2051
    %v2116 = vunpack.c.l.b16 %v2052
    %v2117 = vunpack.c.l.b16 %v2053
    %v2118 = vunpack.c.l.b16 %v2054
    %v2119 = vunpack.c.l.b16 %v2055
    %v2120 = vunpack.c.l.b16 %v2056
    %v2121 = vunpack.c.l.b16 %v2057
    %v2122 = vunpack.c.l.b16 %v2058
    %v2123 = vunpack.c.l.b16 %v2059
    %v2124 = vunpack.c.l.b16 %v2060
    %v2125 = vunpack.c.l.b16 %v2061
    %v2126 = vunpack.c.l.b16 %v2062
    %v2127 = vunpack.c.l.b16 %v2063
    %v2128 = vunpack.c.l.b16 %v2064
    %v2129 = vunpack.c.l.b16 %v2065
    %v2130 = vunpack.c.l.b16 %v2066
    %v2131 = vunpack.c.l.b16 %v2067
    %v2132 = vunpack.c.l.b16 %v2068
    %v2133 = vunpack.c.l.b16 %v2069
    %v2134 = vunpack.c.l.b16 %v2070
    %v2135 = vunpack.c.l.b16 %v2071
    %v2136 = vunpack.c.l.b16 %v2072
    %v2137 = vpack.c.b16 %v2106, %v2105
    %v2138 = vpack.c.b16 %v2108, %v2107
    %v2139 = vpack.c.b16 %v2110, %v2109
    %v2140 = vpack.c.b16 %v2112, %v2111
    %v2141 = vpack.c.b16 %v2114, %v2113
    %v2142 = vpack.c.b16 %v2116, %v2115
    %v2143 = vpack.c.b16 %v2118, %v2117
    %v2144 = vpack.c.b16 %v2120, %v2119
    %v2145 = vpack.c.b16 %v2122, %v2121
    %v2146 = vpack.c.b16 %v2124, %v2123
    %v2147 = vpack.c.b16 %v2126, %v2125
    %v2148 = vpack.c.b16 %v2128, %v2127
    %v2149 = vpack.c.b16 %v2130, %v2129
    %v2150 = vpack.c.b16 %v2132, %v2131
    %v2151 = vpack.c.b16 %v2134, %v2133
    %v2152 = vpack.c.b16 %v2136, %v2135
    %2169 = vmatprep.subr.bf16.mxu0 0
    %2170 = vmatpush1.bf16.msra.mxu0 %v2144
    %2171 = vmatprep.subr.bf16.mxu0 0
    %2172 = vmatpush1.bf16.msra.mxu0 %v2143
    %2173 = vmatprep.subr.bf16.mxu0 0
    %2174 = vmatpush1.bf16.msra.mxu0 %v2142
    %2175 = vmatprep.subr.bf16.mxu0 0
    %2176 = vmatpush1.bf16.msra.mxu0 %v2141
    %2177 = vmatprep.subr.bf16.mxu0 0
    %2178 = vmatpush1.bf16.msra.mxu0 %v2140
    %2179 = vmatprep.subr.bf16.mxu0 0
    %2180 = vmatpush1.bf16.msra.mxu0 %v2139
    %2181 = vmatprep.subr.bf16.mxu0 0
    %2182 = vmatpush1.bf16.msra.mxu0 %v2138
    %2183 = vmatprep.subr.bf16.mxu0 0
    %2184 = vmatpush1.bf16.msra.mxu0 %v2137
    %2185 = vmatprep.subr.bf16.mxu0 0
    %2186 = vmatpush2.bf16.msra.mxu0 %v2152
    %2187 = vmatprep.subr.bf16.mxu0 0
    %2188 = vmatpush2.bf16.msra.mxu0 %v2151
    %2189 = vmatprep.subr.bf16.mxu0 0
    %2190 = vmatpush2.bf16.msra.mxu0 %v2150
    %2191 = vmatprep.subr.bf16.mxu0 0
    %2192 = vmatpush2.bf16.msra.mxu0 %v2149
    %2193 = vmatprep.subr.bf16.mxu0 0
    %2194 = vmatpush2.bf16.msra.mxu0 %v2148
    %2195 = vmatprep.subr.bf16.mxu0 0
    %2196 = vmatpush2.bf16.msra.mxu0 %v2147
    %2197 = vmatprep.subr.bf16.mxu0 0
    %2198 = vmatpush2.bf16.msra.mxu0 %v2146
    %2199 = vmatprep.subr.bf16.mxu0 0
    %2200 = vmatpush2.bf16.msra.mxu0 %v2145
    %2201 = vmatprep.mubr.bf16.mxu0 %v2040
    %2202 = vmatmul.mubr.bf16.gmra.mxu0 %v2039
    %v2203 = vpop.f32.mrf.mxu0
    %v2204 = vadd.f32 0.0, %v2203
    %v2205 = vpop.f32.mrf.mxu0
    %v2206 = vpop.f32.mrf.mxu0
    %v2207 = vpop.f32.mrf.mxu0
    %2208 = vdwg.mxu0
    %v2209 = vadd.f32 %v2010, %v2204
    %v2210 = vmul.f32 %v567, %v1809
    %v2211 = vmul.f32 %v569, %v1810
    %v2212 = vadd.f32 %v2210, %v2211
    %v2213 = vmul.f32 %v572, %v1811
    %v2214 = vadd.f32 %v2212, %v2213
    %v2215 = vadd.f32 %v2214, %v575
    %v2216 = vmax.f32 %v2215, 0.0
    %v2217 = vmul.f32 %v578, %v1809
    %v2218 = vmul.f32 %v580, %v1810
    %v2219 = vadd.f32 %v2217, %v2218
    %v2220 = vmul.f32 %v583, %v1811
    %v2221 = vadd.f32 %v2219, %v2220
    %v2222 = vadd.f32 %v2221, %v586
    %v2223 = vmax.f32 %v2222, 0.0
    %v2224 = vsub.f32 %v2216, %v2223
    %v2225 = vmul.f32 %v177, %v2224
    %v2226 = vadd.f32 %v2223, %v2225
    %v2229 = vunpack.c.l.s4 1983009808
    %v2230 = vunpack.c.0.s8 %v2229
    %v2231 = vlaneseq
    %v2232 = vshrl.u32 %v2231, 7
    %v2233 = vsub.s32 %v2230, %v2232
    %v2234 = vrot.slane %v2226, %v2233
    %v2235 = vcombine.high %v2234, %v2234
    %v2238 = vpack.c.bf16 %v2234, %v2234
    %v2239 = vpack.c.bf16 %v2235, %v2235
    %v2240 = vld [vmem:[%s6 + $0x500] sm:$0xf]
    %v2241 = vld [vmem:[%s6 + $0x504] sm:$0xf]
    %v2242 = vld [vmem:[%s6 + $0x508] sm:$0xf]
    %v2243 = vld [vmem:[%s6 + $0x50c] sm:$0xf]
    %v2244 = vld [vmem:[%s6 + $0x510] sm:$0xf]
    %v2245 = vld [vmem:[%s6 + $0x514] sm:$0xf]
    %v2246 = vld [vmem:[%s6 + $0x518] sm:$0xf]
    %v2247 = vld [vmem:[%s6 + $0x51c] sm:$0xf]
    %v2248 = vld [vmem:[%s6 + $0x520] sm:$0xf]
    %v2249 = vld [vmem:[%s6 + $0x524] sm:$0xf]
    %v2250 = vld [vmem:[%s6 + $0x528] sm:$0xf]
    %v2251 = vld [vmem:[%s6 + $0x52c] sm:$0xf]
    %v2252 = vld [vmem:[%s6 + $0x530] sm:$0xf]
    %v2253 = vld [vmem:[%s6 + $0x534] sm:$0xf]
    %v2254 = vld [vmem:[%s6 + $0x538] sm:$0xf]
    %v2255 = vld [vmem:[%s6 + $0x53c] sm:$0xf]
    %v2256 = vld [vmem:[%s6 + $0x540] sm:$0xf]
    %v2257 = vld [vmem:[%s6 + $0x544] sm:$0xf]
    %v2258 = vld [vmem:[%s6 + $0x548] sm:$0xf]
    %v2259 = vld [vmem:[%s6 + $0x54c] sm:$0xf]
    %v2260 = vld [vmem:[%s6 + $0x550] sm:$0xf]
    %v2261 = vld [vmem:[%s6 + $0x554] sm:$0xf]
    %v2262 = vld [vmem:[%s6 + $0x558] sm:$0xf]
    %v2263 = vld [vmem:[%s6 + $0x55c] sm:$0xf]
    %v2264 = vld [vmem:[%s6 + $0x560] sm:$0xf]
    %v2265 = vld [vmem:[%s6 + $0x564] sm:$0xf]
    %v2266 = vld [vmem:[%s6 + $0x568] sm:$0xf]
    %v2267 = vld [vmem:[%s6 + $0x56c] sm:$0xf]
    %v2268 = vld [vmem:[%s6 + $0x570] sm:$0xf]
    %v2269 = vld [vmem:[%s6 + $0x574] sm:$0xf]
    %v2270 = vld [vmem:[%s6 + $0x578] sm:$0xf]
    %v2271 = vld [vmem:[%s6 + $0x57c] sm:$0xf]
    %v2304 = vunpack.c.l.b16 %v2240
    %v2305 = vunpack.c.l.b16 %v2241
    %v2306 = vunpack.c.l.b16 %v2242
    %v2307 = vunpack.c.l.b16 %v2243
    %v2308 = vunpack.c.l.b16 %v2244
    %v2309 = vunpack.c.l.b16 %v2245
    %v2310 = vunpack.c.l.b16 %v2246
    %v2311 = vunpack.c.l.b16 %v2247
    %v2312 = vunpack.c.l.b16 %v2248
    %v2313 = vunpack.c.l.b16 %v2249
    %v2314 = vunpack.c.l.b16 %v2250
    %v2315 = vunpack.c.l.b16 %v2251
    %v2316 = vunpack.c.l.b16 %v2252
    %v2317 = vunpack.c.l.b16 %v2253
    %v2318 = vunpack.c.l.b16 %v2254
    %v2319 = vunpack.c.l.b16 %v2255
    %v2320 = vunpack.c.l.b16 %v2256
    %v2321 = vunpack.c.l.b16 %v2257
    %v2322 = vunpack.c.l.b16 %v2258
    %v2323 = vunpack.c.l.b16 %v2259
    %v2324 = vunpack.c.l.b16 %v2260
    %v2325 = vunpack.c.l.b16 %v2261
    %v2326 = vunpack.c.l.b16 %v2262
    %v2327 = vunpack.c.l.b16 %v2263
    %v2328 = vunpack.c.l.b16 %v2264
    %v2329 = vunpack.c.l.b16 %v2265
    %v2330 = vunpack.c.l.b16 %v2266
    %v2331 = vunpack.c.l.b16 %v2267
    %v2332 = vunpack.c.l.b16 %v2268
    %v2333 = vunpack.c.l.b16 %v2269
    %v2334 = vunpack.c.l.b16 %v2270
    %v2335 = vunpack.c.l.b16 %v2271
    %v2336 = vpack.c.b16 %v2305, %v2304
    %v2337 = vpack.c.b16 %v2307, %v2306
    %v2338 = vpack.c.b16 %v2309, %v2308
    %v2339 = vpack.c.b16 %v2311, %v2310
    %v2340 = vpack.c.b16 %v2313, %v2312
    %v2341 = vpack.c.b16 %v2315, %v2314
    %v2342 = vpack.c.b16 %v2317, %v2316
    %v2343 = vpack.c.b16 %v2319, %v2318
    %v2344 = vpack.c.b16 %v2321, %v2320
    %v2345 = vpack.c.b16 %v2323, %v2322
    %v2346 = vpack.c.b16 %v2325, %v2324
    %v2347 = vpack.c.b16 %v2327, %v2326
    %v2348 = vpack.c.b16 %v2329, %v2328
    %v2349 = vpack.c.b16 %v2331, %v2330
    %v2350 = vpack.c.b16 %v2333, %v2332
    %v2351 = vpack.c.b16 %v2335, %v2334
    %2368 = vmatprep.subr.bf16.mxu0 0
    %2369 = vmatpush1.bf16.msra.mxu0 %v2343
    %2370 = vmatprep.subr.bf16.mxu0 0
    %2371 = vmatpush1.bf16.msra.mxu0 %v2342
    %2372 = vmatprep.subr.bf16.mxu0 0
    %2373 = vmatpush1.bf16.msra.mxu0 %v2341
    %2374 = vmatprep.subr.bf16.mxu0 0
    %2375 = vmatpush1.bf16.msra.mxu0 %v2340
    %2376 = vmatprep.subr.bf16.mxu0 0
    %2377 = vmatpush1.bf16.msra.mxu0 %v2339
    %2378 = vmatprep.subr.bf16.mxu0 0
    %2379 = vmatpush1.bf16.msra.mxu0 %v2338
    %2380 = vmatprep.subr.bf16.mxu0 0
    %2381 = vmatpush1.bf16.msra.mxu0 %v2337
    %2382 = vmatprep.subr.bf16.mxu0 0
    %2383 = vmatpush1.bf16.msra.mxu0 %v2336
    %2384 = vmatprep.subr.bf16.mxu0 0
    %2385 = vmatpush2.bf16.msra.mxu0 %v2351
    %2386 = vmatprep.subr.bf16.mxu0 0
    %2387 = vmatpush2.bf16.msra.mxu0 %v2350
    %2388 = vmatprep.subr.bf16.mxu0 0
    %2389 = vmatpush2.bf16.msra.mxu0 %v2349
    %2390 = vmatprep.subr.bf16.mxu0 0
    %2391 = vmatpush2.bf16.msra.mxu0 %v2348
    %2392 = vmatprep.subr.bf16.mxu0 0
    %2393 = vmatpush2.bf16.msra.mxu0 %v2347
    %2394 = vmatprep.subr.bf16.mxu0 0
    %2395 = vmatpush2.bf16.msra.mxu0 %v2346
    %2396 = vmatprep.subr.bf16.mxu0 0
    %2397 = vmatpush2.bf16.msra.mxu0 %v2345
    %2398 = vmatprep.subr.bf16.mxu0 0
    %2399 = vmatpush2.bf16.msra.mxu0 %v2344
    %2400 = vmatprep.mubr.bf16.mxu0 %v2239
    %2401 = vmatmul.mubr.bf16.gmra.mxu0 %v2238
    %v2402 = vpop.f32.mrf.mxu0
    %v2403 = vadd.f32 0.0, %v2402
    %v2404 = vpop.f32.mrf.mxu0
    %v2405 = vpop.f32.mrf.mxu0
    %v2406 = vpop.f32.mrf.mxu0
    %2407 = vdwg.mxu0
    %v2408 = vadd.f32 %v2209, %v2403
    %v2409 = vmul.f32 %v774, %v1809
    %v2410 = vmul.f32 %v776, %v1810
    %v2411 = vadd.f32 %v2409, %v2410
    %v2412 = vmul.f32 %v779, %v1811
    %v2413 = vadd.f32 %v2411, %v2412
    %v2414 = vadd.f32 %v2413, %v782
    %v2415 = vmax.f32 %v2414, 0.0
    %v2416 = vmul.f32 %v785, %v1809
    %v2417 = vmul.f32 %v787, %v1810
    %v2418 = vadd.f32 %v2416, %v2417
    %v2419 = vmul.f32 %v790, %v1811
    %v2420 = vadd.f32 %v2418, %v2419
    %v2421 = vadd.f32 %v2420, %v793
    %v2422 = vmax.f32 %v2421, 0.0
    %v2423 = vsub.f32 %v2415, %v2422
    %v2424 = vmul.f32 %v177, %v2423
    %v2425 = vadd.f32 %v2422, %v2424
    %v2428 = vunpack.c.l.s4 1983009808
    %v2429 = vunpack.c.0.s8 %v2428
    %v2430 = vlaneseq
    %v2431 = vshrl.u32 %v2430, 7
    %v2432 = vsub.s32 %v2429, %v2431
    %v2433 = vrot.slane %v2425, %v2432
    %v2434 = vcombine.high %v2433, %v2433
    %v2437 = vpack.c.bf16 %v2433, %v2433
    %v2438 = vpack.c.bf16 %v2434, %v2434
    %v2439 = vld [vmem:[%s6 + $0x580] sm:$0xf]
    %v2440 = vld [vmem:[%s6 + $0x584] sm:$0xf]
    %v2441 = vld [vmem:[%s6 + $0x588] sm:$0xf]
    %v2442 = vld [vmem:[%s6 + $0x58c] sm:$0xf]
    %v2443 = vld [vmem:[%s6 + $0x590] sm:$0xf]
    %v2444 = vld [vmem:[%s6 + $0x594] sm:$0xf]
    %v2445 = vld [vmem:[%s6 + $0x598] sm:$0xf]
    %v2446 = vld [vmem:[%s6 + $0x59c] sm:$0xf]
    %v2447 = vld [vmem:[%s6 + $0x5a0] sm:$0xf]
    %v2448 = vld [vmem:[%s6 + $0x5a4] sm:$0xf]
    %v2449 = vld [vmem:[%s6 + $0x5a8] sm:$0xf]
    %v2450 = vld [vmem:[%s6 + $0x5ac] sm:$0xf]
    %v2451 = vld [vmem:[%s6 + $0x5b0] sm:$0xf]
    %v2452 = vld [vmem:[%s6 + $0x5b4] sm:$0xf]
    %v2453 = vld [vmem:[%s6 + $0x5b8] sm:$0xf]
    %v2454 = vld [vmem:[%s6 + $0x5bc] sm:$0xf]
    %v2455 = vld [vmem:[%s6 + $0x5c0] sm:$0xf]
    %v2456 = vld [vmem:[%s6 + $0x5c4] sm:$0xf]
    %v2457 = vld [vmem:[%s6 + $0x5c8] sm:$0xf]
    %v2458 = vld [vmem:[%s6 + $0x5cc] sm:$0xf]
    %v2459 = vld [vmem:[%s6 + $0x5d0] sm:$0xf]
    %v2460 = vld [vmem:[%s6 + $0x5d4] sm:$0xf]
    %v2461 = vld [vmem:[%s6 + $0x5d8] sm:$0xf]
    %v2462 = vld [vmem:[%s6 + $0x5dc] sm:$0xf]
    %v2463 = vld [vmem:[%s6 + $0x5e0] sm:$0xf]
    %v2464 = vld [vmem:[%s6 + $0x5e4] sm:$0xf]
    %v2465 = vld [vmem:[%s6 + $0x5e8] sm:$0xf]
    %v2466 = vld [vmem:[%s6 + $0x5ec] sm:$0xf]
    %v2467 = vld [vmem:[%s6 + $0x5f0] sm:$0xf]
    %v2468 = vld [vmem:[%s6 + $0x5f4] sm:$0xf]
    %v2469 = vld [vmem:[%s6 + $0x5f8] sm:$0xf]
    %v2470 = vld [vmem:[%s6 + $0x5fc] sm:$0xf]
    %v2503 = vunpack.c.l.b16 %v2439
    %v2504 = vunpack.c.l.b16 %v2440
    %v2505 = vunpack.c.l.b16 %v2441
    %v2506 = vunpack.c.l.b16 %v2442
    %v2507 = vunpack.c.l.b16 %v2443
    %v2508 = vunpack.c.l.b16 %v2444
    %v2509 = vunpack.c.l.b16 %v2445
    %v2510 = vunpack.c.l.b16 %v2446
    %v2511 = vunpack.c.l.b16 %v2447
    %v2512 = vunpack.c.l.b16 %v2448
    %v2513 = vunpack.c.l.b16 %v2449
    %v2514 = vunpack.c.l.b16 %v2450
    %v2515 = vunpack.c.l.b16 %v2451
    %v2516 = vunpack.c.l.b16 %v2452
    %v2517 = vunpack.c.l.b16 %v2453
    %v2518 = vunpack.c.l.b16 %v2454
    %v2519 = vunpack.c.l.b16 %v2455
    %v2520 = vunpack.c.l.b16 %v2456
    %v2521 = vunpack.c.l.b16 %v2457
    %v2522 = vunpack.c.l.b16 %v2458
    %v2523 = vunpack.c.l.b16 %v2459
    %v2524 = vunpack.c.l.b16 %v2460
    %v2525 = vunpack.c.l.b16 %v2461
    %v2526 = vunpack.c.l.b16 %v2462
    %v2527 = vunpack.c.l.b16 %v2463
    %v2528 = vunpack.c.l.b16 %v2464
    %v2529 = vunpack.c.l.b16 %v2465
    %v2530 = vunpack.c.l.b16 %v2466
    %v2531 = vunpack.c.l.b16 %v2467
    %v2532 = vunpack.c.l.b16 %v2468
    %v2533 = vunpack.c.l.b16 %v2469
    %v2534 = vunpack.c.l.b16 %v2470
    %v2535 = vpack.c.b16 %v2504, %v2503
    %v2536 = vpack.c.b16 %v2506, %v2505
    %v2537 = vpack.c.b16 %v2508, %v2507
    %v2538 = vpack.c.b16 %v2510, %v2509
    %v2539 = vpack.c.b16 %v2512, %v2511
    %v2540 = vpack.c.b16 %v2514, %v2513
    %v2541 = vpack.c.b16 %v2516, %v2515
    %v2542 = vpack.c.b16 %v2518, %v2517
    %v2543 = vpack.c.b16 %v2520, %v2519
    %v2544 = vpack.c.b16 %v2522, %v2521
    %v2545 = vpack.c.b16 %v2524, %v2523
    %v2546 = vpack.c.b16 %v2526, %v2525
    %v2547 = vpack.c.b16 %v2528, %v2527
    %v2548 = vpack.c.b16 %v2530, %v2529
    %v2549 = vpack.c.b16 %v2532, %v2531
    %v2550 = vpack.c.b16 %v2534, %v2533
    %2567 = vmatprep.subr.bf16.mxu0 0
    %2568 = vmatpush1.bf16.msra.mxu0 %v2542
    %2569 = vmatprep.subr.bf16.mxu0 0
    %2570 = vmatpush1.bf16.msra.mxu0 %v2541
    %2571 = vmatprep.subr.bf16.mxu0 0
    %2572 = vmatpush1.bf16.msra.mxu0 %v2540
    %2573 = vmatprep.subr.bf16.mxu0 0
    %2574 = vmatpush1.bf16.msra.mxu0 %v2539
    %2575 = vmatprep.subr.bf16.mxu0 0
    %2576 = vmatpush1.bf16.msra.mxu0 %v2538
    %2577 = vmatprep.subr.bf16.mxu0 0
    %2578 = vmatpush1.bf16.msra.mxu0 %v2537
    %2579 = vmatprep.subr.bf16.mxu0 0
    %2580 = vmatpush1.bf16.msra.mxu0 %v2536
    %2581 = vmatprep.subr.bf16.mxu0 0
    %2582 = vmatpush1.bf16.msra.mxu0 %v2535
    %2583 = vmatprep.subr.bf16.mxu0 0
    %2584 = vmatpush2.bf16.msra.mxu0 %v2550
    %2585 = vmatprep.subr.bf16.mxu0 0
    %2586 = vmatpush2.bf16.msra.mxu0 %v2549
    %2587 = vmatprep.subr.bf16.mxu0 0
    %2588 = vmatpush2.bf16.msra.mxu0 %v2548
    %2589 = vmatprep.subr.bf16.mxu0 0
    %2590 = vmatpush2.bf16.msra.mxu0 %v2547
    %2591 = vmatprep.subr.bf16.mxu0 0
    %2592 = vmatpush2.bf16.msra.mxu0 %v2546
    %2593 = vmatprep.subr.bf16.mxu0 0
    %2594 = vmatpush2.bf16.msra.mxu0 %v2545
    %2595 = vmatprep.subr.bf16.mxu0 0
    %2596 = vmatpush2.bf16.msra.mxu0 %v2544
    %2597 = vmatprep.subr.bf16.mxu0 0
    %2598 = vmatpush2.bf16.msra.mxu0 %v2543
    %2599 = vmatprep.mubr.bf16.mxu0 %v2438
    %2600 = vmatmul.mubr.bf16.gmra.mxu0 %v2437
    %v2601 = vpop.f32.mrf.mxu0
    %v2602 = vadd.f32 0.0, %v2601
    %v2603 = vpop.f32.mrf.mxu0
    %v2604 = vpop.f32.mrf.mxu0
    %v2605 = vpop.f32.mrf.mxu0
    %2606 = vdwg.mxu0
    %v2607 = vadd.f32 %v2408, %v2602
    %v2608 = vmul.f32 %v981, %v1809
    %v2609 = vmul.f32 %v983, %v1810
    %v2610 = vadd.f32 %v2608, %v2609
    %v2611 = vmul.f32 %v986, %v1811
    %v2612 = vadd.f32 %v2610, %v2611
    %v2613 = vadd.f32 %v2612, %v989
    %v2614 = vmax.f32 %v2613, 0.0
    %v2615 = vmul.f32 %v992, %v1809
    %v2616 = vmul.f32 %v994, %v1810
    %v2617 = vadd.f32 %v2615, %v2616
    %v2618 = vmul.f32 %v997, %v1811
    %v2619 = vadd.f32 %v2617, %v2618
    %v2620 = vadd.f32 %v2619, %v1000
    %v2621 = vmax.f32 %v2620, 0.0
    %v2622 = vsub.f32 %v2614, %v2621
    %v2623 = vmul.f32 %v177, %v2622
    %v2624 = vadd.f32 %v2621, %v2623
    %v2627 = vunpack.c.l.s4 1983009808
    %v2628 = vunpack.c.0.s8 %v2627
    %v2629 = vlaneseq
    %v2630 = vshrl.u32 %v2629, 7
    %v2631 = vsub.s32 %v2628, %v2630
    %v2632 = vrot.slane %v2624, %v2631
    %v2633 = vcombine.high %v2632, %v2632
    %v2636 = vpack.c.bf16 %v2632, %v2632
    %v2637 = vpack.c.bf16 %v2633, %v2633
    %v2638 = vld [vmem:[%s6 + $0x600] sm:$0xf]
    %v2639 = vld [vmem:[%s6 + $0x604] sm:$0xf]
    %v2640 = vld [vmem:[%s6 + $0x608] sm:$0xf]
    %v2641 = vld [vmem:[%s6 + $0x60c] sm:$0xf]
    %v2642 = vld [vmem:[%s6 + $0x610] sm:$0xf]
    %v2643 = vld [vmem:[%s6 + $0x614] sm:$0xf]
    %v2644 = vld [vmem:[%s6 + $0x618] sm:$0xf]
    %v2645 = vld [vmem:[%s6 + $0x61c] sm:$0xf]
    %v2646 = vld [vmem:[%s6 + $0x620] sm:$0xf]
    %v2647 = vld [vmem:[%s6 + $0x624] sm:$0xf]
    %v2648 = vld [vmem:[%s6 + $0x628] sm:$0xf]
    %v2649 = vld [vmem:[%s6 + $0x62c] sm:$0xf]
    %v2650 = vld [vmem:[%s6 + $0x630] sm:$0xf]
    %v2651 = vld [vmem:[%s6 + $0x634] sm:$0xf]
    %v2652 = vld [vmem:[%s6 + $0x638] sm:$0xf]
    %v2653 = vld [vmem:[%s6 + $0x63c] sm:$0xf]
    %v2654 = vld [vmem:[%s6 + $0x640] sm:$0xf]
    %v2655 = vld [vmem:[%s6 + $0x644] sm:$0xf]
    %v2656 = vld [vmem:[%s6 + $0x648] sm:$0xf]
    %v2657 = vld [vmem:[%s6 + $0x64c] sm:$0xf]
    %v2658 = vld [vmem:[%s6 + $0x650] sm:$0xf]
    %v2659 = vld [vmem:[%s6 + $0x654] sm:$0xf]
    %v2660 = vld [vmem:[%s6 + $0x658] sm:$0xf]
    %v2661 = vld [vmem:[%s6 + $0x65c] sm:$0xf]
    %v2662 = vld [vmem:[%s6 + $0x660] sm:$0xf]
    %v2663 = vld [vmem:[%s6 + $0x664] sm:$0xf]
    %v2664 = vld [vmem:[%s6 + $0x668] sm:$0xf]
    %v2665 = vld [vmem:[%s6 + $0x66c] sm:$0xf]
    %v2666 = vld [vmem:[%s6 + $0x670] sm:$0xf]
    %v2667 = vld [vmem:[%s6 + $0x674] sm:$0xf]
    %v2668 = vld [vmem:[%s6 + $0x678] sm:$0xf]
    %v2669 = vld [vmem:[%s6 + $0x67c] sm:$0xf]
    %v2702 = vunpack.c.l.b16 %v2638
    %v2703 = vunpack.c.l.b16 %v2639
    %v2704 = vunpack.c.l.b16 %v2640
    %v2705 = vunpack.c.l.b16 %v2641
    %v2706 = vunpack.c.l.b16 %v2642
    %v2707 = vunpack.c.l.b16 %v2643
    %v2708 = vunpack.c.l.b16 %v2644
    %v2709 = vunpack.c.l.b16 %v2645
    %v2710 = vunpack.c.l.b16 %v2646
    %v2711 = vunpack.c.l.b16 %v2647
    %v2712 = vunpack.c.l.b16 %v2648
    %v2713 = vunpack.c.l.b16 %v2649
    %v2714 = vunpack.c.l.b16 %v2650
    %v2715 = vunpack.c.l.b16 %v2651
    %v2716 = vunpack.c.l.b16 %v2652
    %v2717 = vunpack.c.l.b16 %v2653
    %v2718 = vunpack.c.l.b16 %v2654
    %v2719 = vunpack.c.l.b16 %v2655
    %v2720 = vunpack.c.l.b16 %v2656
    %v2721 = vunpack.c.l.b16 %v2657
    %v2722 = vunpack.c.l.b16 %v2658
    %v2723 = vunpack.c.l.b16 %v2659
    %v2724 = vunpack.c.l.b16 %v2660
    %v2725 = vunpack.c.l.b16 %v2661
    %v2726 = vunpack.c.l.b16 %v2662
    %v2727 = vunpack.c.l.b16 %v2663
    %v2728 = vunpack.c.l.b16 %v2664
    %v2729 = vunpack.c.l.b16 %v2665
    %v2730 = vunpack.c.l.b16 %v2666
    %v2731 = vunpack.c.l.b16 %v2667
    %v2732 = vunpack.c.l.b16 %v2668
    %v2733 = vunpack.c.l.b16 %v2669
    %v2734 = vpack.c.b16 %v2703, %v2702
    %v2735 = vpack.c.b16 %v2705, %v2704
    %v2736 = vpack.c.b16 %v2707, %v2706
    %v2737 = vpack.c.b16 %v2709, %v2708
    %v2738 = vpack.c.b16 %v2711, %v2710
    %v2739 = vpack.c.b16 %v2713, %v2712
    %v2740 = vpack.c.b16 %v2715, %v2714
    %v2741 = vpack.c.b16 %v2717, %v2716
    %v2742 = vpack.c.b16 %v2719, %v2718
    %v2743 = vpack.c.b16 %v2721, %v2720
    %v2744 = vpack.c.b16 %v2723, %v2722
    %v2745 = vpack.c.b16 %v2725, %v2724
    %v2746 = vpack.c.b16 %v2727, %v2726
    %v2747 = vpack.c.b16 %v2729, %v2728
    %v2748 = vpack.c.b16 %v2731, %v2730
    %v2749 = vpack.c.b16 %v2733, %v2732
    %2766 = vmatprep.subr.bf16.mxu0 0
    %2767 = vmatpush1.bf16.msra.mxu0 %v2741
    %2768 = vmatprep.subr.bf16.mxu0 0
    %2769 = vmatpush1.bf16.msra.mxu0 %v2740
    %2770 = vmatprep.subr.bf16.mxu0 0
    %2771 = vmatpush1.bf16.msra.mxu0 %v2739
    %2772 = vmatprep.subr.bf16.mxu0 0
    %2773 = vmatpush1.bf16.msra.mxu0 %v2738
    %2774 = vmatprep.subr.bf16.mxu0 0
    %2775 = vmatpush1.bf16.msra.mxu0 %v2737
    %2776 = vmatprep.subr.bf16.mxu0 0
    %2777 = vmatpush1.bf16.msra.mxu0 %v2736
    %2778 = vmatprep.subr.bf16.mxu0 0
    %2779 = vmatpush1.bf16.msra.mxu0 %v2735
    %2780 = vmatprep.subr.bf16.mxu0 0
    %2781 = vmatpush1.bf16.msra.mxu0 %v2734
    %2782 = vmatprep.subr.bf16.mxu0 0
    %2783 = vmatpush2.bf16.msra.mxu0 %v2749
    %2784 = vmatprep.subr.bf16.mxu0 0
    %2785 = vmatpush2.bf16.msra.mxu0 %v2748
    %2786 = vmatprep.subr.bf16.mxu0 0
    %2787 = vmatpush2.bf16.msra.mxu0 %v2747
    %2788 = vmatprep.subr.bf16.mxu0 0
    %2789 = vmatpush2.bf16.msra.mxu0 %v2746
    %2790 = vmatprep.subr.bf16.mxu0 0
    %2791 = vmatpush2.bf16.msra.mxu0 %v2745
    %2792 = vmatprep.subr.bf16.mxu0 0
    %2793 = vmatpush2.bf16.msra.mxu0 %v2744
    %2794 = vmatprep.subr.bf16.mxu0 0
    %2795 = vmatpush2.bf16.msra.mxu0 %v2743
    %2796 = vmatprep.subr.bf16.mxu0 0
    %2797 = vmatpush2.bf16.msra.mxu0 %v2742
    %2798 = vmatprep.mubr.bf16.mxu0 %v2637
    %2799 = vmatmul.mubr.bf16.gmra.mxu0 %v2636
    %v2800 = vpop.f32.mrf.mxu0
    %v2801 = vadd.f32 0.0, %v2800
    %v2802 = vpop.f32.mrf.mxu0
    %v2803 = vpop.f32.mrf.mxu0
    %v2804 = vpop.f32.mrf.mxu0
    %2805 = vdwg.mxu0
    %v2806 = vadd.f32 %v2607, %v2801
    %v2807 = vmul.f32 %v1188, %v1809
    %v2808 = vmul.f32 %v1190, %v1810
    %v2809 = vadd.f32 %v2807, %v2808
    %v2810 = vmul.f32 %v1193, %v1811
    %v2811 = vadd.f32 %v2809, %v2810
    %v2812 = vadd.f32 %v2811, %v1196
    %v2813 = vmax.f32 %v2812, 0.0
    %v2814 = vmul.f32 %v1199, %v1809
    %v2815 = vmul.f32 %v1201, %v1810
    %v2816 = vadd.f32 %v2814, %v2815
    %v2817 = vmul.f32 %v1204, %v1811
    %v2818 = vadd.f32 %v2816, %v2817
    %v2819 = vadd.f32 %v2818, %v1207
    %v2820 = vmax.f32 %v2819, 0.0
    %v2821 = vsub.f32 %v2813, %v2820
    %v2822 = vmul.f32 %v177, %v2821
    %v2823 = vadd.f32 %v2820, %v2822
    %v2826 = vunpack.c.l.s4 1983009808
    %v2827 = vunpack.c.0.s8 %v2826
    %v2828 = vlaneseq
    %v2829 = vshrl.u32 %v2828, 7
    %v2830 = vsub.s32 %v2827, %v2829
    %v2831 = vrot.slane %v2823, %v2830
    %v2832 = vcombine.high %v2831, %v2831
    %v2835 = vpack.c.bf16 %v2831, %v2831
    %v2836 = vpack.c.bf16 %v2832, %v2832
    %v2837 = vld [vmem:[%s6 + $0x680] sm:$0xf]
    %v2838 = vld [vmem:[%s6 + $0x684] sm:$0xf]
    %v2839 = vld [vmem:[%s6 + $0x688] sm:$0xf]
    %v2840 = vld [vmem:[%s6 + $0x68c] sm:$0xf]
    %v2841 = vld [vmem:[%s6 + $0x690] sm:$0xf]
    %v2842 = vld [vmem:[%s6 + $0x694] sm:$0xf]
    %v2843 = vld [vmem:[%s6 + $0x698] sm:$0xf]
    %v2844 = vld [vmem:[%s6 + $0x69c] sm:$0xf]
    %v2845 = vld [vmem:[%s6 + $0x6a0] sm:$0xf]
    %v2846 = vld [vmem:[%s6 + $0x6a4] sm:$0xf]
    %v2847 = vld [vmem:[%s6 + $0x6a8] sm:$0xf]
    %v2848 = vld [vmem:[%s6 + $0x6ac] sm:$0xf]
    %v2849 = vld [vmem:[%s6 + $0x6b0] sm:$0xf]
    %v2850 = vld [vmem:[%s6 + $0x6b4] sm:$0xf]
    %v2851 = vld [vmem:[%s6 + $0x6b8] sm:$0xf]
    %v2852 = vld [vmem:[%s6 + $0x6bc] sm:$0xf]
    %v2853 = vld [vmem:[%s6 + $0x6c0] sm:$0xf]
    %v2854 = vld [vmem:[%s6 + $0x6c4] sm:$0xf]
    %v2855 = vld [vmem:[%s6 + $0x6c8] sm:$0xf]
    %v2856 = vld [vmem:[%s6 + $0x6cc] sm:$0xf]
    %v2857 = vld [vmem:[%s6 + $0x6d0] sm:$0xf]
    %v2858 = vld [vmem:[%s6 + $0x6d4] sm:$0xf]
    %v2859 = vld [vmem:[%s6 + $0x6d8] sm:$0xf]
    %v2860 = vld [vmem:[%s6 + $0x6dc] sm:$0xf]
    %v2861 = vld [vmem:[%s6 + $0x6e0] sm:$0xf]
    %v2862 = vld [vmem:[%s6 + $0x6e4] sm:$0xf]
    %v2863 = vld [vmem:[%s6 + $0x6e8] sm:$0xf]
    %v2864 = vld [vmem:[%s6 + $0x6ec] sm:$0xf]
    %v2865 = vld [vmem:[%s6 + $0x6f0] sm:$0xf]
    %v2866 = vld [vmem:[%s6 + $0x6f4] sm:$0xf]
    %v2867 = vld [vmem:[%s6 + $0x6f8] sm:$0xf]
    %v2868 = vld [vmem:[%s6 + $0x6fc] sm:$0xf]
    %v2901 = vunpack.c.l.b16 %v2837
    %v2902 = vunpack.c.l.b16 %v2838
    %v2903 = vunpack.c.l.b16 %v2839
    %v2904 = vunpack.c.l.b16 %v2840
    %v2905 = vunpack.c.l.b16 %v2841
    %v2906 = vunpack.c.l.b16 %v2842
    %v2907 = vunpack.c.l.b16 %v2843
    %v2908 = vunpack.c.l.b16 %v2844
    %v2909 = vunpack.c.l.b16 %v2845
    %v2910 = vunpack.c.l.b16 %v2846
    %v2911 = vunpack.c.l.b16 %v2847
    %v2912 = vunpack.c.l.b16 %v2848
    %v2913 = vunpack.c.l.b16 %v2849
    %v2914 = vunpack.c.l.b16 %v2850
    %v2915 = vunpack.c.l.b16 %v2851
    %v2916 = vunpack.c.l.b16 %v2852
    %v2917 = vunpack.c.l.b16 %v2853
    %v2918 = vunpack.c.l.b16 %v2854
    %v2919 = vunpack.c.l.b16 %v2855
    %v2920 = vunpack.c.l.b16 %v2856
    %v2921 = vunpack.c.l.b16 %v2857
    %v2922 = vunpack.c.l.b16 %v2858
    %v2923 = vunpack.c.l.b16 %v2859
    %v2924 = vunpack.c.l.b16 %v2860
    %v2925 = vunpack.c.l.b16 %v2861
    %v2926 = vunpack.c.l.b16 %v2862
    %v2927 = vunpack.c.l.b16 %v2863
    %v2928 = vunpack.c.l.b16 %v2864
    %v2929 = vunpack.c.l.b16 %v2865
    %v2930 = vunpack.c.l.b16 %v2866
    %v2931 = vunpack.c.l.b16 %v2867
    %v2932 = vunpack.c.l.b16 %v2868
    %v2933 = vpack.c.b16 %v2902, %v2901
    %v2934 = vpack.c.b16 %v2904, %v2903
    %v2935 = vpack.c.b16 %v2906, %v2905
    %v2936 = vpack.c.b16 %v2908, %v2907
    %v2937 = vpack.c.b16 %v2910, %v2909
    %v2938 = vpack.c.b16 %v2912, %v2911
    %v2939 = vpack.c.b16 %v2914, %v2913
    %v2940 = vpack.c.b16 %v2916, %v2915
    %v2941 = vpack.c.b16 %v2918, %v2917
    %v2942 = vpack.c.b16 %v2920, %v2919
    %v2943 = vpack.c.b16 %v2922, %v2921
    %v2944 = vpack.c.b16 %v2924, %v2923
    %v2945 = vpack.c.b16 %v2926, %v2925
    %v2946 = vpack.c.b16 %v2928, %v2927
    %v2947 = vpack.c.b16 %v2930, %v2929
    %v2948 = vpack.c.b16 %v2932, %v2931
    %2965 = vmatprep.subr.bf16.mxu0 0
    %2966 = vmatpush1.bf16.msra.mxu0 %v2940
    %2967 = vmatprep.subr.bf16.mxu0 0
    %2968 = vmatpush1.bf16.msra.mxu0 %v2939
    %2969 = vmatprep.subr.bf16.mxu0 0
    %2970 = vmatpush1.bf16.msra.mxu0 %v2938
    %2971 = vmatprep.subr.bf16.mxu0 0
    %2972 = vmatpush1.bf16.msra.mxu0 %v2937
    %2973 = vmatprep.subr.bf16.mxu0 0
    %2974 = vmatpush1.bf16.msra.mxu0 %v2936
    %2975 = vmatprep.subr.bf16.mxu0 0
    %2976 = vmatpush1.bf16.msra.mxu0 %v2935
    %2977 = vmatprep.subr.bf16.mxu0 0
    %2978 = vmatpush1.bf16.msra.mxu0 %v2934
    %2979 = vmatprep.subr.bf16.mxu0 0
    %2980 = vmatpush1.bf16.msra.mxu0 %v2933
    %2981 = vmatprep.subr.bf16.mxu0 0
    %2982 = vmatpush2.bf16.msra.mxu0 %v2948
    %2983 = vmatprep.subr.bf16.mxu0 0
    %2984 = vmatpush2.bf16.msra.mxu0 %v2947
    %2985 = vmatprep.subr.bf16.mxu0 0
    %2986 = vmatpush2.bf16.msra.mxu0 %v2946
    %2987 = vmatprep.subr.bf16.mxu0 0
    %2988 = vmatpush2.bf16.msra.mxu0 %v2945
    %2989 = vmatprep.subr.bf16.mxu0 0
    %2990 = vmatpush2.bf16.msra.mxu0 %v2944
    %2991 = vmatprep.subr.bf16.mxu0 0
    %2992 = vmatpush2.bf16.msra.mxu0 %v2943
    %2993 = vmatprep.subr.bf16.mxu0 0
    %2994 = vmatpush2.bf16.msra.mxu0 %v2942
    %2995 = vmatprep.subr.bf16.mxu0 0
    %2996 = vmatpush2.bf16.msra.mxu0 %v2941
    %2997 = vmatprep.mubr.bf16.mxu0 %v2836
    %2998 = vmatmul.mubr.bf16.gmra.mxu0 %v2835
    %v2999 = vpop.f32.mrf.mxu0
    %v3000 = vadd.f32 0.0, %v2999
    %v3001 = vpop.f32.mrf.mxu0
    %v3002 = vpop.f32.mrf.mxu0
    %v3003 = vpop.f32.mrf.mxu0
    %3004 = vdwg.mxu0
    %v3005 = vadd.f32 %v2806, %v3000
    %v3006 = vmul.f32 %v1395, %v1809
    %v3007 = vmul.f32 %v1397, %v1810
    %v3008 = vadd.f32 %v3006, %v3007
    %v3009 = vmul.f32 %v1400, %v1811
    %v3010 = vadd.f32 %v3008, %v3009
    %v3011 = vadd.f32 %v3010, %v1403
    %v3012 = vmax.f32 %v3011, 0.0
    %v3013 = vmul.f32 %v1406, %v1809
    %v3014 = vmul.f32 %v1408, %v1810
    %v3015 = vadd.f32 %v3013, %v3014
    %v3016 = vmul.f32 %v1411, %v1811
    %v3017 = vadd.f32 %v3015, %v3016
    %v3018 = vadd.f32 %v3017, %v1414
    %v3019 = vmax.f32 %v3018, 0.0
    %v3020 = vsub.f32 %v3012, %v3019
    %v3021 = vmul.f32 %v177, %v3020
    %v3022 = vadd.f32 %v3019, %v3021
    %v3025 = vunpack.c.l.s4 1983009808
    %v3026 = vunpack.c.0.s8 %v3025
    %v3027 = vlaneseq
    %v3028 = vshrl.u32 %v3027, 7
    %v3029 = vsub.s32 %v3026, %v3028
    %v3030 = vrot.slane %v3022, %v3029
    %v3031 = vcombine.high %v3030, %v3030
    %v3034 = vpack.c.bf16 %v3030, %v3030
    %v3035 = vpack.c.bf16 %v3031, %v3031
    %v3036 = vld [vmem:[%s6 + $0x700] sm:$0xf]
    %v3037 = vld [vmem:[%s6 + $0x704] sm:$0xf]
    %v3038 = vld [vmem:[%s6 + $0x708] sm:$0xf]
    %v3039 = vld [vmem:[%s6 + $0x70c] sm:$0xf]
    %v3040 = vld [vmem:[%s6 + $0x710] sm:$0xf]
    %v3041 = vld [vmem:[%s6 + $0x714] sm:$0xf]
    %v3042 = vld [vmem:[%s6 + $0x718] sm:$0xf]
    %v3043 = vld [vmem:[%s6 + $0x71c] sm:$0xf]
    %v3044 = vld [vmem:[%s6 + $0x720] sm:$0xf]
    %v3045 = vld [vmem:[%s6 + $0x724] sm:$0xf]
    %v3046 = vld [vmem:[%s6 + $0x728] sm:$0xf]
    %v3047 = vld [vmem:[%s6 + $0x72c] sm:$0xf]
    %v3048 = vld [vmem:[%s6 + $0x730] sm:$0xf]
    %v3049 = vld [vmem:[%s6 + $0x734] sm:$0xf]
    %v3050 = vld [vmem:[%s6 + $0x738] sm:$0xf]
    %v3051 = vld [vmem:[%s6 + $0x73c] sm:$0xf]
    %v3052 = vld [vmem:[%s6 + $0x740] sm:$0xf]
    %v3053 = vld [vmem:[%s6 + $0x744] sm:$0xf]
    %v3054 = vld [vmem:[%s6 + $0x748] sm:$0xf]
    %v3055 = vld [vmem:[%s6 + $0x74c] sm:$0xf]
    %v3056 = vld [vmem:[%s6 + $0x750] sm:$0xf]
    %v3057 = vld [vmem:[%s6 + $0x754] sm:$0xf]
    %v3058 = vld [vmem:[%s6 + $0x758] sm:$0xf]
    %v3059 = vld [vmem:[%s6 + $0x75c] sm:$0xf]
    %v3060 = vld [vmem:[%s6 + $0x760] sm:$0xf]
    %v3061 = vld [vmem:[%s6 + $0x764] sm:$0xf]
    %v3062 = vld [vmem:[%s6 + $0x768] sm:$0xf]
    %v3063 = vld [vmem:[%s6 + $0x76c] sm:$0xf]
    %v3064 = vld [vmem:[%s6 + $0x770] sm:$0xf]
    %v3065 = vld [vmem:[%s6 + $0x774] sm:$0xf]
    %v3066 = vld [vmem:[%s6 + $0x778] sm:$0xf]
    %v3067 = vld [vmem:[%s6 + $0x77c] sm:$0xf]
    %v3100 = vunpack.c.l.b16 %v3036
    %v3101 = vunpack.c.l.b16 %v3037
    %v3102 = vunpack.c.l.b16 %v3038
    %v3103 = vunpack.c.l.b16 %v3039
    %v3104 = vunpack.c.l.b16 %v3040
    %v3105 = vunpack.c.l.b16 %v3041
    %v3106 = vunpack.c.l.b16 %v3042
    %v3107 = vunpack.c.l.b16 %v3043
    %v3108 = vunpack.c.l.b16 %v3044
    %v3109 = vunpack.c.l.b16 %v3045
    %v3110 = vunpack.c.l.b16 %v3046
    %v3111 = vunpack.c.l.b16 %v3047
    %v3112 = vunpack.c.l.b16 %v3048
    %v3113 = vunpack.c.l.b16 %v3049
    %v3114 = vunpack.c.l.b16 %v3050
    %v3115 = vunpack.c.l.b16 %v3051
    %v3116 = vunpack.c.l.b16 %v3052
    %v3117 = vunpack.c.l.b16 %v3053
    %v3118 = vunpack.c.l.b16 %v3054
    %v3119 = vunpack.c.l.b16 %v3055
    %v3120 = vunpack.c.l.b16 %v3056
    %v3121 = vunpack.c.l.b16 %v3057
    %v3122 = vunpack.c.l.b16 %v3058
    %v3123 = vunpack.c.l.b16 %v3059
    %v3124 = vunpack.c.l.b16 %v3060
    %v3125 = vunpack.c.l.b16 %v3061
    %v3126 = vunpack.c.l.b16 %v3062
    %v3127 = vunpack.c.l.b16 %v3063
    %v3128 = vunpack.c.l.b16 %v3064
    %v3129 = vunpack.c.l.b16 %v3065
    %v3130 = vunpack.c.l.b16 %v3066
    %v3131 = vunpack.c.l.b16 %v3067
    %v3132 = vpack.c.b16 %v3101, %v3100
    %v3133 = vpack.c.b16 %v3103, %v3102
    %v3134 = vpack.c.b16 %v3105, %v3104
    %v3135 = vpack.c.b16 %v3107, %v3106
    %v3136 = vpack.c.b16 %v3109, %v3108
    %v3137 = vpack.c.b16 %v3111, %v3110
    %v3138 = vpack.c.b16 %v3113, %v3112
    %v3139 = vpack.c.b16 %v3115, %v3114
    %v3140 = vpack.c.b16 %v3117, %v3116
    %v3141 = vpack.c.b16 %v3119, %v3118
    %v3142 = vpack.c.b16 %v3121, %v3120
    %v3143 = vpack.c.b16 %v3123, %v3122
    %v3144 = vpack.c.b16 %v3125, %v3124
    %v3145 = vpack.c.b16 %v3127, %v3126
    %v3146 = vpack.c.b16 %v3129, %v3128
    %v3147 = vpack.c.b16 %v3131, %v3130
    %3164 = vmatprep.subr.bf16.mxu0 0
    %3165 = vmatpush1.bf16.msra.mxu0 %v3139
    %3166 = vmatprep.subr.bf16.mxu0 0
    %3167 = vmatpush1.bf16.msra.mxu0 %v3138
    %3168 = vmatprep.subr.bf16.mxu0 0
    %3169 = vmatpush1.bf16.msra.mxu0 %v3137
    %3170 = vmatprep.subr.bf16.mxu0 0
    %3171 = vmatpush1.bf16.msra.mxu0 %v3136
    %3172 = vmatprep.subr.bf16.mxu0 0
    %3173 = vmatpush1.bf16.msra.mxu0 %v3135
    %3174 = vmatprep.subr.bf16.mxu0 0
    %3175 = vmatpush1.bf16.msra.mxu0 %v3134
    %3176 = vmatprep.subr.bf16.mxu0 0
    %3177 = vmatpush1.bf16.msra.mxu0 %v3133
    %3178 = vmatprep.subr.bf16.mxu0 0
    %3179 = vmatpush1.bf16.msra.mxu0 %v3132
    %3180 = vmatprep.subr.bf16.mxu0 0
    %3181 = vmatpush2.bf16.msra.mxu0 %v3147
    %3182 = vmatprep.subr.bf16.mxu0 0
    %3183 = vmatpush2.bf16.msra.mxu0 %v3146
    %3184 = vmatprep.subr.bf16.mxu0 0
    %3185 = vmatpush2.bf16.msra.mxu0 %v3145
    %3186 = vmatprep.subr.bf16.mxu0 0
    %3187 = vmatpush2.bf16.msra.mxu0 %v3144
    %3188 = vmatprep.subr.bf16.mxu0 0
    %3189 = vmatpush2.bf16.msra.mxu0 %v3143
    %3190 = vmatprep.subr.bf16.mxu0 0
    %3191 = vmatpush2.bf16.msra.mxu0 %v3142
    %3192 = vmatprep.subr.bf16.mxu0 0
    %3193 = vmatpush2.bf16.msra.mxu0 %v3141
    %3194 = vmatprep.subr.bf16.mxu0 0
    %3195 = vmatpush2.bf16.msra.mxu0 %v3140
    %3196 = vmatprep.mubr.bf16.mxu0 %v3035
    %3197 = vmatmul.mubr.bf16.gmra.mxu0 %v3034
    %v3198 = vpop.f32.mrf.mxu0
    %v3199 = vadd.f32 0.0, %v3198
    %v3200 = vpop.f32.mrf.mxu0
    %v3201 = vpop.f32.mrf.mxu0
    %v3202 = vpop.f32.mrf.mxu0
    %3203 = vdwg.mxu0
    %v3204 = vadd.f32 %v3005, %v3199
    %v3205 = vmul.f32 %v1602, %v1809
    %v3206 = vmul.f32 %v1604, %v1810
    %v3207 = vadd.f32 %v3205, %v3206
    %v3208 = vmul.f32 %v1607, %v1811
    %v3209 = vadd.f32 %v3207, %v3208
    %v3210 = vadd.f32 %v3209, %v1610
    %v3211 = vmax.f32 %v3210, 0.0
    %v3212 = vmul.f32 %v1613, %v1809
    %v3213 = vmul.f32 %v1615, %v1810
    %v3214 = vadd.f32 %v3212, %v3213
    %v3215 = vmul.f32 %v1618, %v1811
    %v3216 = vadd.f32 %v3214, %v3215
    %v3217 = vadd.f32 %v3216, %v1621
    %v3218 = vmax.f32 %v3217, 0.0
    %v3219 = vsub.f32 %v3211, %v3218
    %v3220 = vmul.f32 %v177, %v3219
    %v3221 = vadd.f32 %v3218, %v3220
    %v3224 = vunpack.c.l.s4 1983009808
    %v3225 = vunpack.c.0.s8 %v3224
    %v3226 = vlaneseq
    %v3227 = vshrl.u32 %v3226, 7
    %v3228 = vsub.s32 %v3225, %v3227
    %v3229 = vrot.slane %v3221, %v3228
    %v3230 = vcombine.high %v3229, %v3229
    %v3233 = vpack.c.bf16 %v3229, %v3229
    %v3234 = vpack.c.bf16 %v3230, %v3230
    %v3235 = vld [vmem:[%s6 + $0x780] sm:$0xf]
    %v3236 = vld [vmem:[%s6 + $0x784] sm:$0xf]
    %v3237 = vld [vmem:[%s6 + $0x788] sm:$0xf]
    %v3238 = vld [vmem:[%s6 + $0x78c] sm:$0xf]
    %v3239 = vld [vmem:[%s6 + $0x790] sm:$0xf]
    %v3240 = vld [vmem:[%s6 + $0x794] sm:$0xf]
    %v3241 = vld [vmem:[%s6 + $0x798] sm:$0xf]
    %v3242 = vld [vmem:[%s6 + $0x79c] sm:$0xf]
    %v3243 = vld [vmem:[%s6 + $0x7a0] sm:$0xf]
    %v3244 = vld [vmem:[%s6 + $0x7a4] sm:$0xf]
    %v3245 = vld [vmem:[%s6 + $0x7a8] sm:$0xf]
    %v3246 = vld [vmem:[%s6 + $0x7ac] sm:$0xf]
    %v3247 = vld [vmem:[%s6 + $0x7b0] sm:$0xf]
    %v3248 = vld [vmem:[%s6 + $0x7b4] sm:$0xf]
    %v3249 = vld [vmem:[%s6 + $0x7b8] sm:$0xf]
    %v3250 = vld [vmem:[%s6 + $0x7bc] sm:$0xf]
    %v3251 = vld [vmem:[%s6 + $0x7c0] sm:$0xf]
    %v3252 = vld [vmem:[%s6 + $0x7c4] sm:$0xf]
    %v3253 = vld [vmem:[%s6 + $0x7c8] sm:$0xf]
    %v3254 = vld [vmem:[%s6 + $0x7cc] sm:$0xf]
    %v3255 = vld [vmem:[%s6 + $0x7d0] sm:$0xf]
    %v3256 = vld [vmem:[%s6 + $0x7d4] sm:$0xf]
    %v3257 = vld [vmem:[%s6 + $0x7d8] sm:$0xf]
    %v3258 = vld [vmem:[%s6 + $0x7dc] sm:$0xf]
    %v3259 = vld [vmem:[%s6 + $0x7e0] sm:$0xf]
    %v3260 = vld [vmem:[%s6 + $0x7e4] sm:$0xf]
    %v3261 = vld [vmem:[%s6 + $0x7e8] sm:$0xf]
    %v3262 = vld [vmem:[%s6 + $0x7ec] sm:$0xf]
    %v3263 = vld [vmem:[%s6 + $0x7f0] sm:$0xf]
    %v3264 = vld [vmem:[%s6 + $0x7f4] sm:$0xf]
    %v3265 = vld [vmem:[%s6 + $0x7f8] sm:$0xf]
    %v3266 = vld [vmem:[%s6 + $0x7fc] sm:$0xf]
    %v3299 = vunpack.c.l.b16 %v3235
    %v3300 = vunpack.c.l.b16 %v3236
    %v3301 = vunpack.c.l.b16 %v3237
    %v3302 = vunpack.c.l.b16 %v3238
    %v3303 = vunpack.c.l.b16 %v3239
    %v3304 = vunpack.c.l.b16 %v3240
    %v3305 = vunpack.c.l.b16 %v3241
    %v3306 = vunpack.c.l.b16 %v3242
    %v3307 = vunpack.c.l.b16 %v3243
    %v3308 = vunpack.c.l.b16 %v3244
    %v3309 = vunpack.c.l.b16 %v3245
    %v3310 = vunpack.c.l.b16 %v3246
    %v3311 = vunpack.c.l.b16 %v3247
    %v3312 = vunpack.c.l.b16 %v3248
    %v3313 = vunpack.c.l.b16 %v3249
    %v3314 = vunpack.c.l.b16 %v3250
    %v3315 = vunpack.c.l.b16 %v3251
    %v3316 = vunpack.c.l.b16 %v3252
    %v3317 = vunpack.c.l.b16 %v3253
    %v3318 = vunpack.c.l.b16 %v3254
    %v3319 = vunpack.c.l.b16 %v3255
    %v3320 = vunpack.c.l.b16 %v3256
    %v3321 = vunpack.c.l.b16 %v3257
    %v3322 = vunpack.c.l.b16 %v3258
    %v3323 = vunpack.c.l.b16 %v3259
    %v3324 = vunpack.c.l.b16 %v3260
    %v3325 = vunpack.c.l.b16 %v3261
    %v3326 = vunpack.c.l.b16 %v3262
    %v3327 = vunpack.c.l.b16 %v3263
    %v3328 = vunpack.c.l.b16 %v3264
    %v3329 = vunpack.c.l.b16 %v3265
    %v3330 = vunpack.c.l.b16 %v3266
    %v3331 = vpack.c.b16 %v3300, %v3299
    %v3332 = vpack.c.b16 %v3302, %v3301
    %v3333 = vpack.c.b16 %v3304, %v3303
    %v3334 = vpack.c.b16 %v3306, %v3305
    %v3335 = vpack.c.b16 %v3308, %v3307
    %v3336 = vpack.c.b16 %v3310, %v3309
    %v3337 = vpack.c.b16 %v3312, %v3311
    %v3338 = vpack.c.b16 %v3314, %v3313
    %v3339 = vpack.c.b16 %v3316, %v3315
    %v3340 = vpack.c.b16 %v3318, %v3317
    %v3341 = vpack.c.b16 %v3320, %v3319
    %v3342 = vpack.c.b16 %v3322, %v3321
    %v3343 = vpack.c.b16 %v3324, %v3323
    %v3344 = vpack.c.b16 %v3326, %v3325
    %v3345 = vpack.c.b16 %v3328, %v3327
    %v3346 = vpack.c.b16 %v3330, %v3329
    %3363 = vmatprep.subr.bf16.mxu0 0
    %3364 = vmatpush1.bf16.msra.mxu0 %v3338
    %3365 = vmatprep.subr.bf16.mxu0 0
    %3366 = vmatpush1.bf16.msra.mxu0 %v3337
    %3367 = vmatprep.subr.bf16.mxu0 0
    %3368 = vmatpush1.bf16.msra.mxu0 %v3336
    %3369 = vmatprep.subr.bf16.mxu0 0
    %3370 = vmatpush1.bf16.msra.mxu0 %v3335
    %3371 = vmatprep.subr.bf16.mxu0 0
    %3372 = vmatpush1.bf16.msra.mxu0 %v3334
    %3373 = vmatprep.subr.bf16.mxu0 0
    %3374 = vmatpush1.bf16.msra.mxu0 %v3333
    %3375 = vmatprep.subr.bf16.mxu0 0
    %3376 = vmatpush1.bf16.msra.mxu0 %v3332
    %3377 = vmatprep.subr.bf16.mxu0 0
    %3378 = vmatpush1.bf16.msra.mxu0 %v3331
    %3379 = vmatprep.subr.bf16.mxu0 0
    %3380 = vmatpush2.bf16.msra.mxu0 %v3346
    %3381 = vmatprep.subr.bf16.mxu0 0
    %3382 = vmatpush2.bf16.msra.mxu0 %v3345
    %3383 = vmatprep.subr.bf16.mxu0 0
    %3384 = vmatpush2.bf16.msra.mxu0 %v3344
    %3385 = vmatprep.subr.bf16.mxu0 0
    %3386 = vmatpush2.bf16.msra.mxu0 %v3343
    %3387 = vmatprep.subr.bf16.mxu0 0
    %3388 = vmatpush2.bf16.msra.mxu0 %v3342
    %3389 = vmatprep.subr.bf16.mxu0 0
    %3390 = vmatpush2.bf16.msra.mxu0 %v3341
    %3391 = vmatprep.subr.bf16.mxu0 0
    %3392 = vmatpush2.bf16.msra.mxu0 %v3340
    %3393 = vmatprep.subr.bf16.mxu0 0
    %3394 = vmatpush2.bf16.msra.mxu0 %v3339
    %3395 = vmatprep.mubr.bf16.mxu0 %v3234
    %3396 = vmatmul.mubr.bf16.gmra.mxu0 %v3233
    %v3397 = vpop.f32.mrf.mxu0
    %v3398 = vadd.f32 0.0, %v3397
    %v3399 = vpop.f32.mrf.mxu0
    %v3400 = vpop.f32.mrf.mxu0
    %v3401 = vpop.f32.mrf.mxu0
    %3402 = vdwg.mxu0
    %v3403 = vadd.f32 %v3204, %v3398
    %v3404 = vld [vmem:[%s7] sm:$0x1]
    %v3406 = vlaneseq
    %v3407 = vshrl.u32 %v3406, 7
    %v3408 = vsub.s32 0, %v3407
    %v3409 = vrot.slane %v3404, %v3408
    %v3411 = vadd.f32 %v3403, %v3409
    %v3412 = vmax.f32 %v3411, 0.0
    %v3413 = vld [vmem:[%s8] sm:$0xff]
    %v3414 = vld [vmem:[%s8 + $0x8] sm:$0xff]
    %v3415 = vld [vmem:[%s8 + $0x10] sm:$0xff]
    %v3416 = vld [vmem:[%s8 + $0x18] sm:$0xff]
    %v3417 = vld [vmem:[%s9] sm:$0x1]
    %v3419 = vlaneseq
    %v3420 = vshrl.u32 %v3419, 7
    %v3421 = vsub.s32 0, %v3420
    %v3422 = vrot.slane %v3417, %v3421
    %vm3424 = vcmask 261120
    %v3426 = vsel %vm3424, %v3412, 0
    %3428 = vmatprep.subr.mxu0 0.0
    %3429 = vmatpush1.msra.mxu0 0.0
    %3430 = vmatprep.subr.mxu0 0.0
    %3431 = vmatpush1.msra.mxu0 0.0
    %3432 = vmatprep.subr.mxu0 0.0
    %3433 = vmatpush1.msra.mxu0 0.0
    %3434 = vmatprep.subr.mxu0 0.0
    %3435 = vmatpush1.msra.mxu0 0.0
    %3436 = vmatprep.subr.mxu0 0.0
    %3437 = vmatpush1.msra.mxu0 0.0
    %3438 = vmatprep.subr.mxu0 0.0
    %3439 = vmatpush1.msra.mxu0 0.0
    %3440 = vmatprep.subr.mxu0 0.0
    %3441 = vmatpush1.msra.mxu0 0.0
    %3442 = vmatprep.subr.mxu0 0.0
    %3443 = vmatpush1.msra.mxu0 0.0
    %3444 = vmatprep.subr.mxu0 0.0
    %3445 = vmatpush1.msra.mxu0 0.0
    %3446 = vmatprep.subr.mxu0 0.0
    %3447 = vmatpush1.msra.mxu0 0.0
    %3448 = vmatprep.subr.mxu0 0.0
    %3449 = vmatpush1.msra.mxu0 0.0
    %3450 = vmatprep.subr.mxu0 0.0
    %3451 = vmatpush1.msra.mxu0 0.0
    %3452 = vmatprep.subr.mxu0 0.0
    %3453 = vmatpush1.msra.mxu0 %v3416
    %3454 = vmatprep.subr.mxu0 0.0
    %3455 = vmatpush1.msra.mxu0 %v3415
    %3456 = vmatprep.subr.mxu0 0.0
    %3457 = vmatpush1.msra.mxu0 %v3414
    %3458 = vmatprep.subr.mxu0 0.0
    %3459 = vmatpush1.msra.mxu0 %v3413
    %3460 = vmatprep.subr.mxu0 0.0
    %3461 = vmatpush2.msra.mxu0 0.0
    %3462 = vmatprep.subr.mxu0 0.0
    %3463 = vmatpush2.msra.mxu0 0.0
    %3464 = vmatprep.subr.mxu0 0.0
    %3465 = vmatpush2.msra.mxu0 0.0
    %3466 = vmatprep.subr.mxu0 0.0
    %3467 = vmatpush2.msra.mxu0 0.0
    %3468 = vmatprep.subr.mxu0 0.0
    %3469 = vmatpush2.msra.mxu0 0.0
    %3470 = vmatprep.subr.mxu0 0.0
    %3471 = vmatpush2.msra.mxu0 0.0
    %3472 = vmatprep.subr.mxu0 0.0
    %3473 = vmatpush2.msra.mxu0 0.0
    %3474 = vmatprep.subr.mxu0 0.0
    %3475 = vmatpush2.msra.mxu0 0.0
    %3476 = vmatprep.subr.mxu0 0.0
    %3477 = vmatpush2.msra.mxu0 0.0
    %3478 = vmatprep.subr.mxu0 0.0
    %3479 = vmatpush2.msra.mxu0 0.0
    %3480 = vmatprep.subr.mxu0 0.0
    %3481 = vmatpush2.msra.mxu0 0.0
    %3482 = vmatprep.subr.mxu0 0.0
    %3483 = vmatpush2.msra.mxu0 0.0
    %3484 = vmatprep.subr.mxu0 0.0
    %3485 = vmatpush2.msra.mxu0 0.0
    %3486 = vmatprep.subr.mxu0 0.0
    %3487 = vmatpush2.msra.mxu0 0.0
    %3488 = vmatprep.subr.mxu0 0.0
    %3489 = vmatpush2.msra.mxu0 0.0
    %3490 = vmatprep.subr.mxu0 0.0
    %3491 = vmatpush2.msra.mxu0 0.0
    %3492 = vmatprep.mubr.f32.mxu0 0.0
    %3493 = vmatmul.mubr.f32.gmra.mxu0 %v3426
    %v3494 = vpop.f32.mrf.mxu0
    %v3495 = vadd.f32 %v3422, %v3494
    %v3496 = vpop.f32.mrf.mxu0
    %3497 = vdwg.mxu0
    %vm3498 = vcmask 58368
    %3499 = vst.msk [vmem:[#allocation11] sm:$0x3] %vm3498, %v3495
    // Predicated region
    $region58: #{tpu_custom_call.1} parent=1 // pred_check
      _
    $region59: #{tpu_custom_call.1} parent=1 // pred_check_branch
      %3501 = sbr.rel (0) target = $region61
    $region60: #{tpu_custom_call.1} parent=1 // pred_region
      %s3503 = ssub.s32 32, 32
      %3504 = vsyncadd [#allocation4], %s3503
      %s3506 = sshll.u32 [#allocation11], 4
      %s3507 = int_to_ptr.vmem [resolvable:$true] %s3506
      %3509 = dma.vmem_to_hbm [thread:$0]  %s3507, 32, %s10, [#allocation4]
    $region61: #{tpu_custom_call.1} parent=1 // pred_fallthru
      _
    // Predicated region
    $region62: #{tpu_custom_call.1} parent=1 // pred_check
      _
    $region63: #{tpu_custom_call.1} parent=1 // pred_check_branch
      %3511 = sbr.rel (0) target = $region65
    $region64: #{tpu_custom_call.1} parent=1 // pred_region
      %3512 = dma.done [#allocation4], 32
    $region65: #{tpu_custom_call.1} parent=1 // pred_fallthru
      _
    %3513 = vsyncpa [#allocation4], 1
    %3514 = vsyncpa [#allocation5], 1
    %3515 = vsyncpa [#allocation7], 1
    %3516 = vsyncpa [#allocation10], 1

</llo_original>
